<compile_context>
chip_gen: v5e
topology: v5e:2x2
jax: 0.10.0
libtpu: 0.0.40
codegen_flags: <defaults>
</compile_context>

<pallas_src>
import jax
import jax.numpy as jnp
from jax.experimental import pallas as pl
from jax.experimental.pallas import tpu as pltpu

B = 2          # batch
S_SRC = 8      # source sequence length
S_TRG = 6      # target sequence length
V = 32         # vocab size (input_dim == output_dim)
E = 16         # embedding dim
H = 32         # hidden dim (enc hid == dec hid)

_VMEM = pl.BlockSpec(memory_space=pltpu.MemorySpace.VMEM)


def _gru_gates(gi, gh, h, hd):
    """PyTorch GRU cell given input-side gates gi and hidden-side gates gh.

    gi = x @ W_ih + b_ih, gh = h @ W_hh + b_hh, both [B, 3H] with gate order r|z|n.
    """
    r = jax.nn.sigmoid(gi[:, :hd] + gh[:, :hd])
    z = jax.nn.sigmoid(gi[:, hd:2 * hd] + gh[:, hd:2 * hd])
    n = jnp.tanh(gi[:, 2 * hd:] + r * gh[:, 2 * hd:])
    return (1.0 - z) * n + z * h


# ----------------------------------------------------------------------------
# Fused forward kernel
# ----------------------------------------------------------------------------
def seq2seq_fused_kernel(
    src_emb_ref,    # [S*B, E]   encoder inputs (flat, row = s*B + b)
    trg_emb_ref,    # [(T-1)*B, E]  teacher-forced decoder inputs (flat)
    sel_ref,        # [S*B, B]   one-hot batch selector (tiled eye)
    sel_t_ref,      # [B, S*B]   its transpose
    enc_wih_ref,    # [E, 3H]
    enc_whh_ref,    # [H, 3H]
    enc_bih_ref,    # [1, 3H]
    enc_bhh_ref,    # [1, 3H]
    enc_fc_w_ref,   # [H, H]
    enc_fc_b_ref,   # [1, H]
    attn_wh_ref,    # [H, H]
    attn_we_ref,    # [H, H]
    attn_b_ref,     # [1, H]
    attn_vt_ref,    # [H, 1]
    dec_wih_e_ref,  # [E, 3H]
    dec_wih_w_ref,  # [H, 3H]
    dec_whh_ref,    # [H, 3H]
    dec_bih_ref,    # [1, 3H]
    dec_bhh_ref,    # [1, 3H]
    wo_h_ref,       # [H, V]
    wo_w_ref,       # [H, V]
    wo_e_ref,       # [E, V]
    bo_ref,         # [1, V]
    out_ref,        # [T*B, V]
    enc_scr,        # scratch [S*B, H]       encoder outputs
    hid_scr,        # scratch [(T-1)*B, H]   decoder hidden states
    wgt_scr,        # scratch [(T-1)*B, H]   attention contexts
):
    f32 = jnp.float32
    sb = src_emb_ref.shape[0]
    b = sel_ref.shape[1]
    s_len = sb // b
    tb_out = trg_emb_ref.shape[0]
    t_len = tb_out // b + 1
    hd = enc_whh_ref.shape[0]
    v_dim = out_ref.shape[1]

    # -------- encoder: batch all input-side gate contributions up front ------
    src_gx = jnp.dot(src_emb_ref[...], enc_wih_ref[...],
                     preferred_element_type=f32) + enc_bih_ref[...]      # [S*B, 3H]

    enc_whh = enc_whh_ref[...]
    enc_bhh = enc_bhh_ref[...]
    h = jnp.zeros((b, hd), f32)
    for s in range(s_len):
        gi = src_gx[s * b:(s + 1) * b, :]
        gh = jnp.dot(h, enc_whh, preferred_element_type=f32) + enc_bhh   # [B, 3H]
        h = _gru_gates(gi, gh, h, hd)
        enc_scr[pl.ds(s * b, b), :] = h

    enc_flat = enc_scr[...]                                              # [S*B, H]

    # -------- bridge: hidden = tanh(fc(h_S)) ---------------------------------
    hidden = jnp.tanh(
        jnp.dot(h, enc_fc_w_ref[...], preferred_element_type=f32)
        + enc_fc_b_ref[...])                                             # [B, H]

    # -------- decoder precomputation (all off the serial chain) --------------
    # attention projection of all encoder states, once:
    ee = jnp.dot(enc_flat, attn_we_ref[...],
                 preferred_element_type=f32) + attn_b_ref[...]           # [S*B, H]
    # encoder states augmented with a ones column -> one matmul gives both the
    # softmax denominator and the weighted context.
    enc_aug = jnp.concatenate([enc_flat, jnp.ones((sb, 1), f32)], axis=-1)  # [S*B, H+1]
    # teacher-forced embedding contributions to the decoder GRU gates:
    dec_gx = jnp.dot(trg_emb_ref[...], dec_wih_e_ref[...],
                     preferred_element_type=f32) + dec_bih_ref[...]      # [(T-1)*B, 3H]
    # teacher-forced embedding contribution to fc_out:
    emb_logits = jnp.dot(trg_emb_ref[...], wo_e_ref[...],
                         preferred_element_type=f32) + bo_ref[...]       # [(T-1)*B, V]

    attn_vt = attn_vt_ref[...]                                           # [H, 1]
    # tanh bounds |score| <= ||v||_1, so this constant shift is exact for softmax
    # (shift-invariance) and removes the per-step max reduce from the chain.
    v_l1 = jnp.sum(jnp.abs(attn_vt), axis=0, keepdims=True)              # [1, 1]

    sel = sel_ref[...]                                                   # [S*B, B]
    sel_t = sel_t_ref[...]                                               # [B, S*B]

    # -------- decoder loop: only the recurrence-carried work stays inside ----
    for t in range(1, t_len):
        r0 = (t - 1) * b

        # Bahdanau attention, all reductions/broadcasts on the MXU.
        e_h = jnp.dot(hidden, attn_wh_ref[...],
                      preferred_element_type=f32)                        # [B, H]
        e_h_rows = jnp.dot(sel, e_h, preferred_element_type=f32)         # [S*B, H]
        energy = jnp.tanh(ee + e_h_rows)                                 # [S*B, H]
        score = jnp.dot(energy, attn_vt, preferred_element_type=f32)     # [S*B, 1]
        p = jnp.exp(score - v_l1)                                        # [S*B, 1]
        wsum = jnp.dot(sel_t, p * enc_aug,
                       preferred_element_type=f32)                       # [B, H+1]
        weighted = wsum[:, :hd] * pl.reciprocal(wsum[:, hd:], approx=True)  # [B, H]

        # GRU cell; embedding part of the input gates was precomputed (dec_gx).
        gi = dec_gx[r0:r0 + b, :] + jnp.dot(
            weighted, dec_wih_w_ref[...], preferred_element_type=f32)    # [B, 3H]
        gh = jnp.dot(hidden, dec_whh_ref[...],
                     preferred_element_type=f32) + dec_bhh_ref[...]      # [B, 3H]
        hidden = _gru_gates(gi, gh, hidden, hd)

        hid_scr[pl.ds(r0, b), :] = hidden
        wgt_scr[pl.ds(r0, b), :] = weighted

    # -------- deferred fc_out: one batched matmul + one slab writeback -------
    logits = (jnp.dot(hid_scr[...], wo_h_ref[...], preferred_element_type=f32)
              + jnp.dot(wgt_scr[...], wo_w_ref[...], preferred_element_type=f32)
              + emb_logits)                                              # [(T-1)*B, V]

    out_ref[pl.ds(0, b), :] = jnp.zeros((b, v_dim), f32)   # t = 0 row stays zero
    out_ref[pl.ds(b, tb_out), :] = logits


# ----------------------------------------------------------------------------
# Glue: embedding gathers, constant selector, single pallas_call
# ----------------------------------------------------------------------------
def seq2seq_forward(p, src, trg):
    batch, src_len = src.shape
    trg_len = trg.shape[1]
    out_dim = p["dec_bo"].shape[-1]
    hid = p["enc_fc_w"].shape[0]

    # Embedding gathers + time-major flatten (row order = s*B + b), done once.
    src_emb = jnp.transpose(p["enc_emb"][src], (1, 0, 2)).reshape(
        src_len * batch, -1)                                             # [S*B, E]
    trg_emb = jnp.transpose(p["dec_emb"][trg[:, :-1]], (1, 0, 2)).reshape(
        (trg_len - 1) * batch, -1)                                       # [(T-1)*B, E]

    # Constant batch selector: row s*B+b is one-hot(b). Lets the kernel run the
    # per-batch softmax sum / context sum / e_h broadcast as MXU matmuls.
    sel = jnp.tile(jnp.eye(batch, dtype=jnp.float32), (src_len, 1))      # [S*B, B]
    sel_t = sel.T                                                        # [B, S*B]

    out_flat = pl.pallas_call(
        seq2seq_fused_kernel,
        out_shape=jax.ShapeDtypeStruct((trg_len * batch, out_dim), jnp.float32),
        in_specs=[_VMEM] * 23,
        out_specs=_VMEM,
        scratch_shapes=[
            pltpu.VMEM((src_len * batch, hid), jnp.float32),        # enc outputs
            pltpu.VMEM(((trg_len - 1) * batch, hid), jnp.float32),  # dec hiddens
            pltpu.VMEM(((trg_len - 1) * batch, hid), jnp.float32),  # contexts
        ],
        compiler_params=pltpu.CompilerParams(
            vmem_limit_bytes=32 * 1024 * 1024,
        ),
    )(
        src_emb, trg_emb, sel, sel_t,
        p["enc_wih"], p["enc_whh"], p["enc_bih"], p["enc_bhh"],
        p["enc_fc_w"], p["enc_fc_b"],
        p["attn_wh"], p["attn_we"], p["attn_b"], p["attn_v"].T,
        p["dec_wih_e"], p["dec_wih_w"], p["dec_whh"], p["dec_bih"], p["dec_bhh"],
        p["dec_wo_h"], p["dec_wo_w"], p["dec_wo_e"], p["dec_bo"],
    )
    return jnp.transpose(out_flat.reshape(trg_len, batch, out_dim), (1, 0, 2))


# ----------------------------------------------------------------------------
# Deterministic parameter init (same parameterization as the PyTorch module)
# ----------------------------------------------------------------------------
def init_params(key):
    ks = jax.random.split(key, 20)
    nrm = lambda k, shape, s=0.1: (s * jax.random.normal(k, shape)).astype(jnp.float32)
    return {
        # encoder
        "enc_emb":  nrm(ks[0], (V, E)),
        "enc_wih":  nrm(ks[1], (E, 3 * H)),
        "enc_whh":  nrm(ks[2], (H, 3 * H)),
        "enc_bih":  nrm(ks[3], (1, 3 * H)),
        "enc_bhh":  nrm(ks[4], (1, 3 * H)),
        "enc_fc_w": nrm(ks[5], (H, H)),
        "enc_fc_b": nrm(ks[6], (1, H)),
        # attention
        "attn_wh":  nrm(ks[7], (H, H)),
        "attn_we":  nrm(ks[8], (H, H)),
        "attn_b":   nrm(ks[9], (1, H)),
        "attn_v":   nrm(ks[10], (1, H)),
        # decoder GRU (input = [emb ; weighted context])
        "dec_emb":   nrm(ks[11], (V, E)),
        "dec_wih_e": nrm(ks[12], (E, 3 * H)),
        "dec_wih_w": nrm(ks[13], (H, 3 * H)),
        "dec_whh":   nrm(ks[14], (H, 3 * H)),
        "dec_bih":   nrm(ks[15], (1, 3 * H)),
        "dec_bhh":   nrm(ks[16], (1, 3 * H)),
        # fc_out([h_new ; weighted ; emb]) -> V
        "dec_wo_h": nrm(ks[17], (H, V)),
        "dec_wo_w": nrm(ks[18], (H, V)),
        "dec_wo_e": nrm(ks[19], (E, V)),
        "dec_bo":   jnp.zeros((1, V), jnp.float32),
    }


if __name__ == "__main__":
    key = jax.random.PRNGKey(0)
    kp, ksr, ktr = jax.random.split(key, 3)
    params = init_params(kp)

    src = jax.random.randint(ksr, (B, S_SRC), 0, V, dtype=jnp.int32)
    trg = jax.random.randint(ktr, (B, S_TRG), 0, V, dtype=jnp.int32)

    fwd = jax.jit(seq2seq_forward)
    outputs = fwd(params, src, trg)
    outputs = jax.block_until_ready(outputs)

    assert outputs.shape == (B, S_TRG, V), outputs.shape
    assert bool(jnp.all(outputs[:, 0] == 0.0))       # t=0 row stays zero, like torch.zeros
    assert bool(jnp.all(jnp.isfinite(outputs)))
    print("KERNEL_OK")
</pallas_src>

<mosaic_0001>
module attributes {stable_mosaic.version = 11 : i64} {
  func.func @seq2seq_fused_kernel(%arg0: memref<16x16xf32, #tpu.memory_space<vmem>>, %arg1: memref<10x16xf32, #tpu.memory_space<vmem>>, %arg2: memref<16x2xf32, #tpu.memory_space<vmem>>, %arg3: memref<2x16xf32, #tpu.memory_space<vmem>>, %arg4: memref<16x96xf32, #tpu.memory_space<vmem>>, %arg5: memref<32x96xf32, #tpu.memory_space<vmem>>, %arg6: memref<1x96xf32, #tpu.memory_space<vmem>>, %arg7: memref<1x96xf32, #tpu.memory_space<vmem>>, %arg8: memref<32x32xf32, #tpu.memory_space<vmem>>, %arg9: memref<1x32xf32, #tpu.memory_space<vmem>>, %arg10: memref<32x32xf32, #tpu.memory_space<vmem>>, %arg11: memref<32x32xf32, #tpu.memory_space<vmem>>, %arg12: memref<1x32xf32, #tpu.memory_space<vmem>>, %arg13: memref<32x1xf32, #tpu.memory_space<vmem>>, %arg14: memref<16x96xf32, #tpu.memory_space<vmem>>, %arg15: memref<32x96xf32, #tpu.memory_space<vmem>>, %arg16: memref<32x96xf32, #tpu.memory_space<vmem>>, %arg17: memref<1x96xf32, #tpu.memory_space<vmem>>, %arg18: memref<1x96xf32, #tpu.memory_space<vmem>>, %arg19: memref<32x32xf32, #tpu.memory_space<vmem>>, %arg20: memref<32x32xf32, #tpu.memory_space<vmem>>, %arg21: memref<16x32xf32, #tpu.memory_space<vmem>>, %arg22: memref<1x32xf32, #tpu.memory_space<vmem>>, %arg23: memref<12x32xf32, #tpu.memory_space<vmem>>, %arg24: memref<16x32xf32, #tpu.memory_space<vmem>>, %arg25: memref<10x32xf32, #tpu.memory_space<vmem>>, %arg26: memref<10x32xf32, #tpu.memory_space<vmem>>) attributes {dimension_semantics = [], scalar_prefetch = 0 : i64, scratch_operands = 3 : i64, tpu.core_type = #tpu.core_type<tc>} {
    %c0 = arith.constant 0 : index
    %c0_0 = arith.constant 0 : index
    %0 = vector.load %arg0[%c0, %c0_0] : memref<16x16xf32, #tpu.memory_space<vmem>>, vector<16x16xf32>
    %c0_1 = arith.constant 0 : index
    %c0_2 = arith.constant 0 : index
    %1 = vector.load %arg4[%c0_1, %c0_2] : memref<16x96xf32, #tpu.memory_space<vmem>>, vector<16x96xf32>
    %cst = arith.constant dense<0.000000e+00> : vector<16x96xf32>
    %2 = tpu.matmul %0, %1, %cst {dimension_numbers = #tpu.dot_dimension_numbers<[1], [0], [0], [1], [0, 0, 1, 1], [], []>} : vector<16x16xf32>, vector<16x96xf32>, vector<16x96xf32> -> vector<16x96xf32>
    %c0_3 = arith.constant 0 : index
    %c0_4 = arith.constant 0 : index
    %3 = vector.load %arg6[%c0_3, %c0_4] : memref<1x96xf32, #tpu.memory_space<vmem>>, vector<1x96xf32>
    %4 = vector.broadcast %3 : vector<1x96xf32> to vector<16x96xf32>
    %5 = arith.addf %2, %4 : vector<16x96xf32>
    %c0_5 = arith.constant 0 : index
    %c0_6 = arith.constant 0 : index
    %6 = vector.load %arg5[%c0_5, %c0_6] : memref<32x96xf32, #tpu.memory_space<vmem>>, vector<32x96xf32>
    %c0_7 = arith.constant 0 : index
    %c0_8 = arith.constant 0 : index
    %7 = vector.load %arg7[%c0_7, %c0_8] : memref<1x96xf32, #tpu.memory_space<vmem>>, vector<1x96xf32>
    %cst_9 = arith.constant 0.000000e+00 : f32
    %8 = vector.broadcast %cst_9 : f32 to vector<2x32xf32>
    %9 = vector.extract_strided_slice %5 {offsets = [0, 0], sizes = [2, 96], strides = [1, 1]} : vector<16x96xf32> to vector<2x96xf32>
    %cst_10 = arith.constant dense<0.000000e+00> : vector<2x96xf32>
    %10 = tpu.matmul %8, %6, %cst_10 {dimension_numbers = #tpu.dot_dimension_numbers<[1], [0], [0], [1], [0, 0, 1, 1], [], []>} : vector<2x32xf32>, vector<32x96xf32>, vector<2x96xf32> -> vector<2x96xf32>
    %11 = vector.broadcast %7 : vector<1x96xf32> to vector<2x96xf32>
    %12 = arith.addf %10, %11 : vector<2x96xf32>
    %13 = vector.extract_strided_slice %9 {offsets = [0, 0], sizes = [2, 32], strides = [1, 1]} : vector<2x96xf32> to vector<2x32xf32>
    %14 = vector.extract_strided_slice %12 {offsets = [0, 0], sizes = [2, 32], strides = [1, 1]} : vector<2x96xf32> to vector<2x32xf32>
    %15 = arith.addf %13, %14 : vector<2x32xf32>
    %16 = arith.negf %15 : vector<2x32xf32>
    %17 = math.exp %16 : vector<2x32xf32>
    %cst_11 = arith.constant 1.000000e+00 : f32
    %18 = vector.broadcast %cst_11 : f32 to vector<2x32xf32>
    %19 = arith.addf %18, %17 : vector<2x32xf32>
    %20 = arith.divf %18, %19 : vector<2x32xf32>
    %21 = vector.extract_strided_slice %9 {offsets = [0, 32], sizes = [2, 32], strides = [1, 1]} : vector<2x96xf32> to vector<2x32xf32>
    %22 = vector.extract_strided_slice %12 {offsets = [0, 32], sizes = [2, 32], strides = [1, 1]} : vector<2x96xf32> to vector<2x32xf32>
    %23 = arith.addf %21, %22 : vector<2x32xf32>
    %24 = arith.negf %23 : vector<2x32xf32>
    %25 = math.exp %24 : vector<2x32xf32>
    %cst_12 = arith.constant 1.000000e+00 : f32
    %26 = vector.broadcast %cst_12 : f32 to vector<2x32xf32>
    %27 = arith.addf %26, %25 : vector<2x32xf32>
    %28 = arith.divf %26, %27 : vector<2x32xf32>
    %29 = vector.extract_strided_slice %9 {offsets = [0, 64], sizes = [2, 32], strides = [1, 1]} : vector<2x96xf32> to vector<2x32xf32>
    %30 = vector.extract_strided_slice %12 {offsets = [0, 64], sizes = [2, 32], strides = [1, 1]} : vector<2x96xf32> to vector<2x32xf32>
    %31 = arith.mulf %20, %30 : vector<2x32xf32>
    %32 = arith.addf %29, %31 : vector<2x32xf32>
    %33 = math.tanh %32 : vector<2x32xf32>
    %cst_13 = arith.constant 1.000000e+00 : f32
    %34 = vector.broadcast %cst_13 : f32 to vector<2x32xf32>
    %35 = arith.subf %34, %28 : vector<2x32xf32>
    %36 = arith.mulf %35, %33 : vector<2x32xf32>
    %37 = arith.mulf %28, %8 : vector<2x32xf32>
    %38 = arith.addf %36, %37 : vector<2x32xf32>
    %c0_14 = arith.constant 0 : index
    %c0_15 = arith.constant 0 : index
    %39 = vector.load %arg24[%c0_14, %c0_15] : memref<16x32xf32, #tpu.memory_space<vmem>>, vector<2x32xf32>
    tpu.vector_store %arg24[%c0_14, %c0_15], %38 {strides = array<i32>} : memref<16x32xf32, #tpu.memory_space<vmem>>, vector<2x32xf32>,
    %40 = vector.extract_strided_slice %5 {offsets = [2, 0], sizes = [2, 96], strides = [1, 1]} : vector<16x96xf32> to vector<2x96xf32>
    %cst_16 = arith.constant dense<0.000000e+00> : vector<2x96xf32>
    %41 = tpu.matmul %38, %6, %cst_16 {dimension_numbers = #tpu.dot_dimension_numbers<[1], [0], [0], [1], [0, 0, 1, 1], [], []>} : vector<2x32xf32>, vector<32x96xf32>, vector<2x96xf32> -> vector<2x96xf32>
    %42 = vector.broadcast %7 : vector<1x96xf32> to vector<2x96xf32>
    %43 = arith.addf %41, %42 : vector<2x96xf32>
    %44 = vector.extract_strided_slice %40 {offsets = [0, 0], sizes = [2, 32], strides = [1, 1]} : vector<2x96xf32> to vector<2x32xf32>
    %45 = vector.extract_strided_slice %43 {offsets = [0, 0], sizes = [2, 32], strides = [1, 1]} : vector<2x96xf32> to vector<2x32xf32>
    %46 = arith.addf %44, %45 : vector<2x32xf32>
    %47 = arith.negf %46 : vector<2x32xf32>
    %48 = math.exp %47 : vector<2x32xf32>
    %cst_17 = arith.constant 1.000000e+00 : f32
    %49 = vector.broadcast %cst_17 : f32 to vector<2x32xf32>
    %50 = arith.addf %49, %48 : vector<2x32xf32>
    %51 = arith.divf %49, %50 : vector<2x32xf32>
    %52 = vector.extract_strided_slice %40 {offsets = [0, 32], sizes = [2, 32], strides = [1, 1]} : vector<2x96xf32> to vector<2x32xf32>
    %53 = vector.extract_strided_slice %43 {offsets = [0, 32], sizes = [2, 32], strides = [1, 1]} : vector<2x96xf32> to vector<2x32xf32>
    %54 = arith.addf %52, %53 : vector<2x32xf32>
    %55 = arith.negf %54 : vector<2x32xf32>
    %56 = math.exp %55 : vector<2x32xf32>
    %cst_18 = arith.constant 1.000000e+00 : f32
    %57 = vector.broadcast %cst_18 : f32 to vector<2x32xf32>
    %58 = arith.addf %57, %56 : vector<2x32xf32>
    %59 = arith.divf %57, %58 : vector<2x32xf32>
    %60 = vector.extract_strided_slice %40 {offsets = [0, 64], sizes = [2, 32], strides = [1, 1]} : vector<2x96xf32> to vector<2x32xf32>
    %61 = vector.extract_strided_slice %43 {offsets = [0, 64], sizes = [2, 32], strides = [1, 1]} : vector<2x96xf32> to vector<2x32xf32>
    %62 = arith.mulf %51, %61 : vector<2x32xf32>
    %63 = arith.addf %60, %62 : vector<2x32xf32>
    %64 = math.tanh %63 : vector<2x32xf32>
    %cst_19 = arith.constant 1.000000e+00 : f32
    %65 = vector.broadcast %cst_19 : f32 to vector<2x32xf32>
    %66 = arith.subf %65, %59 : vector<2x32xf32>
    %67 = arith.mulf %66, %64 : vector<2x32xf32>
    %68 = arith.mulf %59, %38 : vector<2x32xf32>
    %69 = arith.addf %67, %68 : vector<2x32xf32>
    %c2 = arith.constant 2 : index
    %c0_20 = arith.constant 0 : index
    %70 = vector.load %arg24[%c2, %c0_20] : memref<16x32xf32, #tpu.memory_space<vmem>>, vector<2x32xf32>
    tpu.vector_store %arg24[%c2, %c0_20], %69 {strides = array<i32>} : memref<16x32xf32, #tpu.memory_space<vmem>>, vector<2x32xf32>,
    %71 = vector.extract_strided_slice %5 {offsets = [4, 0], sizes = [2, 96], strides = [1, 1]} : vector<16x96xf32> to vector<2x96xf32>
    %cst_21 = arith.constant dense<0.000000e+00> : vector<2x96xf32>
    %72 = tpu.matmul %69, %6, %cst_21 {dimension_numbers = #tpu.dot_dimension_numbers<[1], [0], [0], [1], [0, 0, 1, 1], [], []>} : vector<2x32xf32>, vector<32x96xf32>, vector<2x96xf32> -> vector<2x96xf32>
    %73 = vector.broadcast %7 : vector<1x96xf32> to vector<2x96xf32>
    %74 = arith.addf %72, %73 : vector<2x96xf32>
    %75 = vector.extract_strided_slice %71 {offsets = [0, 0], sizes = [2, 32], strides = [1, 1]} : vector<2x96xf32> to vector<2x32xf32>
    %76 = vector.extract_strided_slice %74 {offsets = [0, 0], sizes = [2, 32], strides = [1, 1]} : vector<2x96xf32> to vector<2x32xf32>
    %77 = arith.addf %75, %76 : vector<2x32xf32>
    %78 = arith.negf %77 : vector<2x32xf32>
    %79 = math.exp %78 : vector<2x32xf32>
    %cst_22 = arith.constant 1.000000e+00 : f32
    %80 = vector.broadcast %cst_22 : f32 to vector<2x32xf32>
    %81 = arith.addf %80, %79 : vector<2x32xf32>
    %82 = arith.divf %80, %81 : vector<2x32xf32>
    %83 = vector.extract_strided_slice %71 {offsets = [0, 32], sizes = [2, 32], strides = [1, 1]} : vector<2x96xf32> to vector<2x32xf32>
    %84 = vector.extract_strided_slice %74 {offsets = [0, 32], sizes = [2, 32], strides = [1, 1]} : vector<2x96xf32> to vector<2x32xf32>
    %85 = arith.addf %83, %84 : vector<2x32xf32>
    %86 = arith.negf %85 : vector<2x32xf32>
    %87 = math.exp %86 : vector<2x32xf32>
    %cst_23 = arith.constant 1.000000e+00 : f32
    %88 = vector.broadcast %cst_23 : f32 to vector<2x32xf32>
    %89 = arith.addf %88, %87 : vector<2x32xf32>
    %90 = arith.divf %88, %89 : vector<2x32xf32>
    %91 = vector.extract_strided_slice %71 {offsets = [0, 64], sizes = [2, 32], strides = [1, 1]} : vector<2x96xf32> to vector<2x32xf32>
    %92 = vector.extract_strided_slice %74 {offsets = [0, 64], sizes = [2, 32], strides = [1, 1]} : vector<2x96xf32> to vector<2x32xf32>
    %93 = arith.mulf %82, %92 : vector<2x32xf32>
    %94 = arith.addf %91, %93 : vector<2x32xf32>
    %95 = math.tanh %94 : vector<2x32xf32>
    %cst_24 = arith.constant 1.000000e+00 : f32
    %96 = vector.broadcast %cst_24 : f32 to vector<2x32xf32>
    %97 = arith.subf %96, %90 : vector<2x32xf32>
    %98 = arith.mulf %97, %95 : vector<2x32xf32>
    %99 = arith.mulf %90, %69 : vector<2x32xf32>
    %100 = arith.addf %98, %99 : vector<2x32xf32>
    %c4 = arith.constant 4 : index
    %c0_25 = arith.constant 0 : index
    %101 = vector.load %arg24[%c4, %c0_25] : memref<16x32xf32, #tpu.memory_space<vmem>>, vector<2x32xf32>
    tpu.vector_store %arg24[%c4, %c0_25], %100 {strides = array<i32>} : memref<16x32xf32, #tpu.memory_space<vmem>>, vector<2x32xf32>,
    %102 = vector.extract_strided_slice %5 {offsets = [6, 0], sizes = [2, 96], strides = [1, 1]} : vector<16x96xf32> to vector<2x96xf32>
    %cst_26 = arith.constant dense<0.000000e+00> : vector<2x96xf32>
    %103 = tpu.matmul %100, %6, %cst_26 {dimension_numbers = #tpu.dot_dimension_numbers<[1], [0], [0], [1], [0, 0, 1, 1], [], []>} : vector<2x32xf32>, vector<32x96xf32>, vector<2x96xf32> -> vector<2x96xf32>
    %104 = vector.broadcast %7 : vector<1x96xf32> to vector<2x96xf32>
    %105 = arith.addf %103, %104 : vector<2x96xf32>
    %106 = vector.extract_strided_slice %102 {offsets = [0, 0], sizes = [2, 32], strides = [1, 1]} : vector<2x96xf32> to vector<2x32xf32>
    %107 = vector.extract_strided_slice %105 {offsets = [0, 0], sizes = [2, 32], strides = [1, 1]} : vector<2x96xf32> to vector<2x32xf32>
    %108 = arith.addf %106, %107 : vector<2x32xf32>
    %109 = arith.negf %108 : vector<2x32xf32>
    %110 = math.exp %109 : vector<2x32xf32>
    %cst_27 = arith.constant 1.000000e+00 : f32
    %111 = vector.broadcast %cst_27 : f32 to vector<2x32xf32>
    %112 = arith.addf %111, %110 : vector<2x32xf32>
    %113 = arith.divf %111, %112 : vector<2x32xf32>
    %114 = vector.extract_strided_slice %102 {offsets = [0, 32], sizes = [2, 32], strides = [1, 1]} : vector<2x96xf32> to vector<2x32xf32>
    %115 = vector.extract_strided_slice %105 {offsets = [0, 32], sizes = [2, 32], strides = [1, 1]} : vector<2x96xf32> to vector<2x32xf32>
    %116 = arith.addf %114, %115 : vector<2x32xf32>
    %117 = arith.negf %116 : vector<2x32xf32>
    %118 = math.exp %117 : vector<2x32xf32>
    %cst_28 = arith.constant 1.000000e+00 : f32
    %119 = vector.broadcast %cst_28 : f32 to vector<2x32xf32>
    %120 = arith.addf %119, %118 : vector<2x32xf32>
    %121 = arith.divf %119, %120 : vector<2x32xf32>
    %122 = vector.extract_strided_slice %102 {offsets = [0, 64], sizes = [2, 32], strides = [1, 1]} : vector<2x96xf32> to vector<2x32xf32>
    %123 = vector.extract_strided_slice %105 {offsets = [0, 64], sizes = [2, 32], strides = [1, 1]} : vector<2x96xf32> to vector<2x32xf32>
    %124 = arith.mulf %113, %123 : vector<2x32xf32>
    %125 = arith.addf %122, %124 : vector<2x32xf32>
    %126 = math.tanh %125 : vector<2x32xf32>
    %cst_29 = arith.constant 1.000000e+00 : f32
    %127 = vector.broadcast %cst_29 : f32 to vector<2x32xf32>
    %128 = arith.subf %127, %121 : vector<2x32xf32>
    %129 = arith.mulf %128, %126 : vector<2x32xf32>
    %130 = arith.mulf %121, %100 : vector<2x32xf32>
    %131 = arith.addf %129, %130 : vector<2x32xf32>
    %c6 = arith.constant 6 : index
    %c0_30 = arith.constant 0 : index
    %132 = vector.load %arg24[%c6, %c0_30] : memref<16x32xf32, #tpu.memory_space<vmem>>, vector<2x32xf32>
    tpu.vector_store %arg24[%c6, %c0_30], %131 {strides = array<i32>} : memref<16x32xf32, #tpu.memory_space<vmem>>, vector<2x32xf32>,
    %133 = vector.extract_strided_slice %5 {offsets = [8, 0], sizes = [2, 96], strides = [1, 1]} : vector<16x96xf32> to vector<2x96xf32>
    %cst_31 = arith.constant dense<0.000000e+00> : vector<2x96xf32>
    %134 = tpu.matmul %131, %6, %cst_31 {dimension_numbers = #tpu.dot_dimension_numbers<[1], [0], [0], [1], [0, 0, 1, 1], [], []>} : vector<2x32xf32>, vector<32x96xf32>, vector<2x96xf32> -> vector<2x96xf32>
    %135 = vector.broadcast %7 : vector<1x96xf32> to vector<2x96xf32>
    %136 = arith.addf %134, %135 : vector<2x96xf32>
    %137 = vector.extract_strided_slice %133 {offsets = [0, 0], sizes = [2, 32], strides = [1, 1]} : vector<2x96xf32> to vector<2x32xf32>
    %138 = vector.extract_strided_slice %136 {offsets = [0, 0], sizes = [2, 32], strides = [1, 1]} : vector<2x96xf32> to vector<2x32xf32>
    %139 = arith.addf %137, %138 : vector<2x32xf32>
    %140 = arith.negf %139 : vector<2x32xf32>
    %141 = math.exp %140 : vector<2x32xf32>
    %cst_32 = arith.constant 1.000000e+00 : f32
    %142 = vector.broadcast %cst_32 : f32 to vector<2x32xf32>
    %143 = arith.addf %142, %141 : vector<2x32xf32>
    %144 = arith.divf %142, %143 : vector<2x32xf32>
    %145 = vector.extract_strided_slice %133 {offsets = [0, 32], sizes = [2, 32], strides = [1, 1]} : vector<2x96xf32> to vector<2x32xf32>
    %146 = vector.extract_strided_slice %136 {offsets = [0, 32], sizes = [2, 32], strides = [1, 1]} : vector<2x96xf32> to vector<2x32xf32>
    %147 = arith.addf %145, %146 : vector<2x32xf32>
    %148 = arith.negf %147 : vector<2x32xf32>
    %149 = math.exp %148 : vector<2x32xf32>
    %cst_33 = arith.constant 1.000000e+00 : f32
    %150 = vector.broadcast %cst_33 : f32 to vector<2x32xf32>
    %151 = arith.addf %150, %149 : vector<2x32xf32>
    %152 = arith.divf %150, %151 : vector<2x32xf32>
    %153 = vector.extract_strided_slice %133 {offsets = [0, 64], sizes = [2, 32], strides = [1, 1]} : vector<2x96xf32> to vector<2x32xf32>
    %154 = vector.extract_strided_slice %136 {offsets = [0, 64], sizes = [2, 32], strides = [1, 1]} : vector<2x96xf32> to vector<2x32xf32>
    %155 = arith.mulf %144, %154 : vector<2x32xf32>
    %156 = arith.addf %153, %155 : vector<2x32xf32>
    %157 = math.tanh %156 : vector<2x32xf32>
    %cst_34 = arith.constant 1.000000e+00 : f32
    %158 = vector.broadcast %cst_34 : f32 to vector<2x32xf32>
    %159 = arith.subf %158, %152 : vector<2x32xf32>
    %160 = arith.mulf %159, %157 : vector<2x32xf32>
    %161 = arith.mulf %152, %131 : vector<2x32xf32>
    %162 = arith.addf %160, %161 : vector<2x32xf32>
    %c8 = arith.constant 8 : index
    %c0_35 = arith.constant 0 : index
    %163 = vector.load %arg24[%c8, %c0_35] : memref<16x32xf32, #tpu.memory_space<vmem>>, vector<2x32xf32>
    tpu.vector_store %arg24[%c8, %c0_35], %162 {strides = array<i32>} : memref<16x32xf32, #tpu.memory_space<vmem>>, vector<2x32xf32>,
    %164 = vector.extract_strided_slice %5 {offsets = [10, 0], sizes = [2, 96], strides = [1, 1]} : vector<16x96xf32> to vector<2x96xf32>
    %cst_36 = arith.constant dense<0.000000e+00> : vector<2x96xf32>
    %165 = tpu.matmul %162, %6, %cst_36 {dimension_numbers = #tpu.dot_dimension_numbers<[1], [0], [0], [1], [0, 0, 1, 1], [], []>} : vector<2x32xf32>, vector<32x96xf32>, vector<2x96xf32> -> vector<2x96xf32>
    %166 = vector.broadcast %7 : vector<1x96xf32> to vector<2x96xf32>
    %167 = arith.addf %165, %166 : vector<2x96xf32>
    %168 = vector.extract_strided_slice %164 {offsets = [0, 0], sizes = [2, 32], strides = [1, 1]} : vector<2x96xf32> to vector<2x32xf32>
    %169 = vector.extract_strided_slice %167 {offsets = [0, 0], sizes = [2, 32], strides = [1, 1]} : vector<2x96xf32> to vector<2x32xf32>
    %170 = arith.addf %168, %169 : vector<2x32xf32>
    %171 = arith.negf %170 : vector<2x32xf32>
    %172 = math.exp %171 : vector<2x32xf32>
    %cst_37 = arith.constant 1.000000e+00 : f32
    %173 = vector.broadcast %cst_37 : f32 to vector<2x32xf32>
    %174 = arith.addf %173, %172 : vector<2x32xf32>
    %175 = arith.divf %173, %174 : vector<2x32xf32>
    %176 = vector.extract_strided_slice %164 {offsets = [0, 32], sizes = [2, 32], strides = [1, 1]} : vector<2x96xf32> to vector<2x32xf32>
    %177 = vector.extract_strided_slice %167 {offsets = [0, 32], sizes = [2, 32], strides = [1, 1]} : vector<2x96xf32> to vector<2x32xf32>
    %178 = arith.addf %176, %177 : vector<2x32xf32>
    %179 = arith.negf %178 : vector<2x32xf32>
    %180 = math.exp %179 : vector<2x32xf32>
    %cst_38 = arith.constant 1.000000e+00 : f32
    %181 = vector.broadcast %cst_38 : f32 to vector<2x32xf32>
    %182 = arith.addf %181, %180 : vector<2x32xf32>
    %183 = arith.divf %181, %182 : vector<2x32xf32>
    %184 = vector.extract_strided_slice %164 {offsets = [0, 64], sizes = [2, 32], strides = [1, 1]} : vector<2x96xf32> to vector<2x32xf32>
    %185 = vector.extract_strided_slice %167 {offsets = [0, 64], sizes = [2, 32], strides = [1, 1]} : vector<2x96xf32> to vector<2x32xf32>
    %186 = arith.mulf %175, %185 : vector<2x32xf32>
    %187 = arith.addf %184, %186 : vector<2x32xf32>
    %188 = math.tanh %187 : vector<2x32xf32>
    %cst_39 = arith.constant 1.000000e+00 : f32
    %189 = vector.broadcast %cst_39 : f32 to vector<2x32xf32>
    %190 = arith.subf %189, %183 : vector<2x32xf32>
    %191 = arith.mulf %190, %188 : vector<2x32xf32>
    %192 = arith.mulf %183, %162 : vector<2x32xf32>
    %193 = arith.addf %191, %192 : vector<2x32xf32>
    %c10 = arith.constant 10 : index
    %c0_40 = arith.constant 0 : index
    %194 = vector.load %arg24[%c10, %c0_40] : memref<16x32xf32, #tpu.memory_space<vmem>>, vector<2x32xf32>
    tpu.vector_store %arg24[%c10, %c0_40], %193 {strides = array<i32>} : memref<16x32xf32, #tpu.memory_space<vmem>>, vector<2x32xf32>,
    %195 = vector.extract_strided_slice %5 {offsets = [12, 0], sizes = [2, 96], strides = [1, 1]} : vector<16x96xf32> to vector<2x96xf32>
    %cst_41 = arith.constant dense<0.000000e+00> : vector<2x96xf32>
    %196 = tpu.matmul %193, %6, %cst_41 {dimension_numbers = #tpu.dot_dimension_numbers<[1], [0], [0], [1], [0, 0, 1, 1], [], []>} : vector<2x32xf32>, vector<32x96xf32>, vector<2x96xf32> -> vector<2x96xf32>
    %197 = vector.broadcast %7 : vector<1x96xf32> to vector<2x96xf32>
    %198 = arith.addf %196, %197 : vector<2x96xf32>
    %199 = vector.extract_strided_slice %195 {offsets = [0, 0], sizes = [2, 32], strides = [1, 1]} : vector<2x96xf32> to vector<2x32xf32>
    %200 = vector.extract_strided_slice %198 {offsets = [0, 0], sizes = [2, 32], strides = [1, 1]} : vector<2x96xf32> to vector<2x32xf32>
    %201 = arith.addf %199, %200 : vector<2x32xf32>
    %202 = arith.negf %201 : vector<2x32xf32>
    %203 = math.exp %202 : vector<2x32xf32>
    %cst_42 = arith.constant 1.000000e+00 : f32
    %204 = vector.broadcast %cst_42 : f32 to vector<2x32xf32>
    %205 = arith.addf %204, %203 : vector<2x32xf32>
    %206 = arith.divf %204, %205 : vector<2x32xf32>
    %207 = vector.extract_strided_slice %195 {offsets = [0, 32], sizes = [2, 32], strides = [1, 1]} : vector<2x96xf32> to vector<2x32xf32>
    %208 = vector.extract_strided_slice %198 {offsets = [0, 32], sizes = [2, 32], strides = [1, 1]} : vector<2x96xf32> to vector<2x32xf32>
    %209 = arith.addf %207, %208 : vector<2x32xf32>
    %210 = arith.negf %209 : vector<2x32xf32>
    %211 = math.exp %210 : vector<2x32xf32>
    %cst_43 = arith.constant 1.000000e+00 : f32
    %212 = vector.broadcast %cst_43 : f32 to vector<2x32xf32>
    %213 = arith.addf %212, %211 : vector<2x32xf32>
    %214 = arith.divf %212, %213 : vector<2x32xf32>
    %215 = vector.extract_strided_slice %195 {offsets = [0, 64], sizes = [2, 32], strides = [1, 1]} : vector<2x96xf32> to vector<2x32xf32>
    %216 = vector.extract_strided_slice %198 {offsets = [0, 64], sizes = [2, 32], strides = [1, 1]} : vector<2x96xf32> to vector<2x32xf32>
    %217 = arith.mulf %206, %216 : vector<2x32xf32>
    %218 = arith.addf %215, %217 : vector<2x32xf32>
    %219 = math.tanh %218 : vector<2x32xf32>
    %cst_44 = arith.constant 1.000000e+00 : f32
    %220 = vector.broadcast %cst_44 : f32 to vector<2x32xf32>
    %221 = arith.subf %220, %214 : vector<2x32xf32>
    %222 = arith.mulf %221, %219 : vector<2x32xf32>
    %223 = arith.mulf %214, %193 : vector<2x32xf32>
    %224 = arith.addf %222, %223 : vector<2x32xf32>
    %c12 = arith.constant 12 : index
    %c0_45 = arith.constant 0 : index
    %225 = vector.load %arg24[%c12, %c0_45] : memref<16x32xf32, #tpu.memory_space<vmem>>, vector<2x32xf32>
    tpu.vector_store %arg24[%c12, %c0_45], %224 {strides = array<i32>} : memref<16x32xf32, #tpu.memory_space<vmem>>, vector<2x32xf32>,
    %226 = vector.extract_strided_slice %5 {offsets = [14, 0], sizes = [2, 96], strides = [1, 1]} : vector<16x96xf32> to vector<2x96xf32>
    %cst_46 = arith.constant dense<0.000000e+00> : vector<2x96xf32>
    %227 = tpu.matmul %224, %6, %cst_46 {dimension_numbers = #tpu.dot_dimension_numbers<[1], [0], [0], [1], [0, 0, 1, 1], [], []>} : vector<2x32xf32>, vector<32x96xf32>, vector<2x96xf32> -> vector<2x96xf32>
    %228 = vector.broadcast %7 : vector<1x96xf32> to vector<2x96xf32>
    %229 = arith.addf %227, %228 : vector<2x96xf32>
    %230 = vector.extract_strided_slice %226 {offsets = [0, 0], sizes = [2, 32], strides = [1, 1]} : vector<2x96xf32> to vector<2x32xf32>
    %231 = vector.extract_strided_slice %229 {offsets = [0, 0], sizes = [2, 32], strides = [1, 1]} : vector<2x96xf32> to vector<2x32xf32>
    %232 = arith.addf %230, %231 : vector<2x32xf32>
    %233 = arith.negf %232 : vector<2x32xf32>
    %234 = math.exp %233 : vector<2x32xf32>
    %cst_47 = arith.constant 1.000000e+00 : f32
    %235 = vector.broadcast %cst_47 : f32 to vector<2x32xf32>
    %236 = arith.addf %235, %234 : vector<2x32xf32>
    %237 = arith.divf %235, %236 : vector<2x32xf32>
    %238 = vector.extract_strided_slice %226 {offsets = [0, 32], sizes = [2, 32], strides = [1, 1]} : vector<2x96xf32> to vector<2x32xf32>
    %239 = vector.extract_strided_slice %229 {offsets = [0, 32], sizes = [2, 32], strides = [1, 1]} : vector<2x96xf32> to vector<2x32xf32>
    %240 = arith.addf %238, %239 : vector<2x32xf32>
    %241 = arith.negf %240 : vector<2x32xf32>
    %242 = math.exp %241 : vector<2x32xf32>
    %cst_48 = arith.constant 1.000000e+00 : f32
    %243 = vector.broadcast %cst_48 : f32 to vector<2x32xf32>
    %244 = arith.addf %243, %242 : vector<2x32xf32>
    %245 = arith.divf %243, %244 : vector<2x32xf32>
    %246 = vector.extract_strided_slice %226 {offsets = [0, 64], sizes = [2, 32], strides = [1, 1]} : vector<2x96xf32> to vector<2x32xf32>
    %247 = vector.extract_strided_slice %229 {offsets = [0, 64], sizes = [2, 32], strides = [1, 1]} : vector<2x96xf32> to vector<2x32xf32>
    %248 = arith.mulf %237, %247 : vector<2x32xf32>
    %249 = arith.addf %246, %248 : vector<2x32xf32>
    %250 = math.tanh %249 : vector<2x32xf32>
    %cst_49 = arith.constant 1.000000e+00 : f32
    %251 = vector.broadcast %cst_49 : f32 to vector<2x32xf32>
    %252 = arith.subf %251, %245 : vector<2x32xf32>
    %253 = arith.mulf %252, %250 : vector<2x32xf32>
    %254 = arith.mulf %245, %224 : vector<2x32xf32>
    %255 = arith.addf %253, %254 : vector<2x32xf32>
    %c14 = arith.constant 14 : index
    %c0_50 = arith.constant 0 : index
    %256 = vector.load %arg24[%c14, %c0_50] : memref<16x32xf32, #tpu.memory_space<vmem>>, vector<2x32xf32>
    tpu.vector_store %arg24[%c14, %c0_50], %255 {strides = array<i32>} : memref<16x32xf32, #tpu.memory_space<vmem>>, vector<2x32xf32>,
    %c0_51 = arith.constant 0 : index
    %c0_52 = arith.constant 0 : index
    %257 = vector.load %arg24[%c0_51, %c0_52] : memref<16x32xf32, #tpu.memory_space<vmem>>, vector<16x32xf32>
    %c0_53 = arith.constant 0 : index
    %c0_54 = arith.constant 0 : index
    %258 = vector.load %arg8[%c0_53, %c0_54] : memref<32x32xf32, #tpu.memory_space<vmem>>, vector<32x32xf32>
    %cst_55 = arith.constant dense<0.000000e+00> : vector<2x32xf32>
    %259 = tpu.matmul %255, %258, %cst_55 {dimension_numbers = #tpu.dot_dimension_numbers<[1], [0], [0], [1], [0, 0, 1, 1], [], []>} : vector<2x32xf32>, vector<32x32xf32>, vector<2x32xf32> -> vector<2x32xf32>
    %c0_56 = arith.constant 0 : index
    %c0_57 = arith.constant 0 : index
    %260 = vector.load %arg9[%c0_56, %c0_57] : memref<1x32xf32, #tpu.memory_space<vmem>>, vector<1x32xf32>
    %261 = vector.broadcast %260 : vector<1x32xf32> to vector<2x32xf32>
    %262 = arith.addf %259, %261 : vector<2x32xf32>
    %263 = math.tanh %262 : vector<2x32xf32>
    %c0_58 = arith.constant 0 : index
    %c0_59 = arith.constant 0 : index
    %264 = vector.load %arg11[%c0_58, %c0_59] : memref<32x32xf32, #tpu.memory_space<vmem>>, vector<32x32xf32>
    %cst_60 = arith.constant dense<0.000000e+00> : vector<16x32xf32>
    %265 = tpu.matmul %257, %264, %cst_60 {dimension_numbers = #tpu.dot_dimension_numbers<[1], [0], [0], [1], [0, 0, 1, 1], [], []>} : vector<16x32xf32>, vector<32x32xf32>, vector<16x32xf32> -> vector<16x32xf32>
    %c0_61 = arith.constant 0 : index
    %c0_62 = arith.constant 0 : index
    %266 = vector.load %arg12[%c0_61, %c0_62] : memref<1x32xf32, #tpu.memory_space<vmem>>, vector<1x32xf32>
    %267 = vector.broadcast %266 : vector<1x32xf32> to vector<16x32xf32>
    %268 = arith.addf %265, %267 : vector<16x32xf32>
    %cst_63 = arith.constant 1.000000e+00 : f32
    %269 = vector.broadcast %cst_63 : f32 to vector<16x1xf32>
    %270 = tpu.concatenate %257, %269 in 1 : vector<16x32xf32>, vector<16x1xf32> -> vector<16x33xf32>
    %c0_64 = arith.constant 0 : index
    %c0_65 = arith.constant 0 : index
    %271 = vector.load %arg1[%c0_64, %c0_65] : memref<10x16xf32, #tpu.memory_space<vmem>>, vector<10x16xf32>
    %c0_66 = arith.constant 0 : index
    %c0_67 = arith.constant 0 : index
    %272 = vector.load %arg14[%c0_66, %c0_67] : memref<16x96xf32, #tpu.memory_space<vmem>>, vector<16x96xf32>
    %cst_68 = arith.constant dense<0.000000e+00> : vector<10x96xf32>
    %273 = tpu.matmul %271, %272, %cst_68 {dimension_numbers = #tpu.dot_dimension_numbers<[1], [0], [0], [1], [0, 0, 1, 1], [], []>} : vector<10x16xf32>, vector<16x96xf32>, vector<10x96xf32> -> vector<10x96xf32>
    %c0_69 = arith.constant 0 : index
    %c0_70 = arith.constant 0 : index
    %274 = vector.load %arg17[%c0_69, %c0_70] : memref<1x96xf32, #tpu.memory_space<vmem>>, vector<1x96xf32>
    %275 = vector.broadcast %274 : vector<1x96xf32> to vector<10x96xf32>
    %276 = arith.addf %273, %275 : vector<10x96xf32>
    %c0_71 = arith.constant 0 : index
    %c0_72 = arith.constant 0 : index
    %277 = vector.load %arg1[%c0_71, %c0_72] : memref<10x16xf32, #tpu.memory_space<vmem>>, vector<10x16xf32>
    %c0_73 = arith.constant 0 : index
    %c0_74 = arith.constant 0 : index
    %278 = vector.load %arg21[%c0_73, %c0_74] : memref<16x32xf32, #tpu.memory_space<vmem>>, vector<16x32xf32>
    %cst_75 = arith.constant dense<0.000000e+00> : vector<10x32xf32>
    %279 = tpu.matmul %277, %278, %cst_75 {dimension_numbers = #tpu.dot_dimension_numbers<[1], [0], [0], [1], [0, 0, 1, 1], [], []>} : vector<10x16xf32>, vector<16x32xf32>, vector<10x32xf32> -> vector<10x32xf32>
    %c0_76 = arith.constant 0 : index
    %c0_77 = arith.constant 0 : index
    %280 = vector.load %arg22[%c0_76, %c0_77] : memref<1x32xf32, #tpu.memory_space<vmem>>, vector<1x32xf32>
    %281 = vector.broadcast %280 : vector<1x32xf32> to vector<10x32xf32>
    %282 = arith.addf %279, %281 : vector<10x32xf32>
    %c0_78 = arith.constant 0 : index
    %c0_79 = arith.constant 0 : index
    %283 = vector.load %arg13[%c0_78, %c0_79] : memref<32x1xf32, #tpu.memory_space<vmem>>, vector<32x1xf32>
    %284 = math.absf %283 : vector<32x1xf32>
    %cst_80 = arith.constant dense<0.000000e+00> : vector<1xf32>
    %285 = vector.multi_reduction <add>, %284, %cst_80 [0] : vector<32x1xf32> to vector<1xf32>
    %286 = vector.shape_cast %285 : vector<1xf32> to vector<1x1xf32>
    %c0_81 = arith.constant 0 : index
    %c0_82 = arith.constant 0 : index
    %287 = vector.load %arg2[%c0_81, %c0_82] : memref<16x2xf32, #tpu.memory_space<vmem>>, vector<16x2xf32>
    %c0_83 = arith.constant 0 : index
    %c0_84 = arith.constant 0 : index
    %288 = vector.load %arg3[%c0_83, %c0_84] : memref<2x16xf32, #tpu.memory_space<vmem>>, vector<2x16xf32>
    %c0_85 = arith.constant 0 : index
    %c0_86 = arith.constant 0 : index
    %289 = vector.load %arg10[%c0_85, %c0_86] : memref<32x32xf32, #tpu.memory_space<vmem>>, vector<32x32xf32>
    %cst_87 = arith.constant dense<0.000000e+00> : vector<2x32xf32>
    %290 = tpu.matmul %263, %289, %cst_87 {dimension_numbers = #tpu.dot_dimension_numbers<[1], [0], [0], [1], [0, 0, 1, 1], [], []>} : vector<2x32xf32>, vector<32x32xf32>, vector<2x32xf32> -> vector<2x32xf32>
    %cst_88 = arith.constant dense<0.000000e+00> : vector<16x32xf32>
    %291 = tpu.matmul %287, %290, %cst_88 {dimension_numbers = #tpu.dot_dimension_numbers<[1], [0], [0], [1], [0, 0, 1, 1], [], []>} : vector<16x2xf32>, vector<2x32xf32>, vector<16x32xf32> -> vector<16x32xf32>
    %292 = arith.addf %268, %291 : vector<16x32xf32>
    %293 = math.tanh %292 : vector<16x32xf32>
    %cst_89 = arith.constant dense<0.000000e+00> : vector<16x1xf32>
    %294 = tpu.matmul %293, %283, %cst_89 {dimension_numbers = #tpu.dot_dimension_numbers<[1], [0], [0], [1], [0, 0, 1, 1], [], []>} : vector<16x32xf32>, vector<32x1xf32>, vector<16x1xf32> -> vector<16x1xf32>
    %295 = vector.broadcast %286 : vector<1x1xf32> to vector<16x1xf32>
    %296 = arith.subf %294, %295 : vector<16x1xf32>
    %297 = math.exp %296 : vector<16x1xf32>
    %298 = vector.broadcast %297 : vector<16x1xf32> to vector<16x33xf32>
    %299 = arith.mulf %298, %270 : vector<16x33xf32>
    %cst_90 = arith.constant dense<0.000000e+00> : vector<2x33xf32>
    %300 = tpu.matmul %288, %299, %cst_90 {dimension_numbers = #tpu.dot_dimension_numbers<[1], [0], [0], [1], [0, 0, 1, 1], [], []>} : vector<2x16xf32>, vector<16x33xf32>, vector<2x33xf32> -> vector<2x33xf32>
    %301 = vector.extract_strided_slice %300 {offsets = [0, 0], sizes = [2, 32], strides = [1, 1]} : vector<2x33xf32> to vector<2x32xf32>
    %302 = vector.extract_strided_slice %300 {offsets = [0, 32], sizes = [2, 1], strides = [1, 1]} : vector<2x33xf32> to vector<2x1xf32>
    %303 = tpu.reciprocal %302 {approx = true} : vector<2x1xf32> -> vector<2x1xf32>
    %304 = vector.broadcast %303 : vector<2x1xf32> to vector<2x32xf32>
    %305 = arith.mulf %301, %304 : vector<2x32xf32>
    %306 = vector.extract_strided_slice %276 {offsets = [0, 0], sizes = [2, 96], strides = [1, 1]} : vector<10x96xf32> to vector<2x96xf32>
    %c0_91 = arith.constant 0 : index
    %c0_92 = arith.constant 0 : index
    %307 = vector.load %arg15[%c0_91, %c0_92] : memref<32x96xf32, #tpu.memory_space<vmem>>, vector<32x96xf32>
    %cst_93 = arith.constant dense<0.000000e+00> : vector<2x96xf32>
    %308 = tpu.matmul %305, %307, %cst_93 {dimension_numbers = #tpu.dot_dimension_numbers<[1], [0], [0], [1], [0, 0, 1, 1], [], []>} : vector<2x32xf32>, vector<32x96xf32>, vector<2x96xf32> -> vector<2x96xf32>
    %309 = arith.addf %306, %308 : vector<2x96xf32>
    %c0_94 = arith.constant 0 : index
    %c0_95 = arith.constant 0 : index
    %310 = vector.load %arg16[%c0_94, %c0_95] : memref<32x96xf32, #tpu.memory_space<vmem>>, vector<32x96xf32>
    %cst_96 = arith.constant dense<0.000000e+00> : vector<2x96xf32>
    %311 = tpu.matmul %263, %310, %cst_96 {dimension_numbers = #tpu.dot_dimension_numbers<[1], [0], [0], [1], [0, 0, 1, 1], [], []>} : vector<2x32xf32>, vector<32x96xf32>, vector<2x96xf32> -> vector<2x96xf32>
    %c0_97 = arith.constant 0 : index
    %c0_98 = arith.constant 0 : index
    %312 = vector.load %arg18[%c0_97, %c0_98] : memref<1x96xf32, #tpu.memory_space<vmem>>, vector<1x96xf32>
    %313 = vector.broadcast %312 : vector<1x96xf32> to vector<2x96xf32>
    %314 = arith.addf %311, %313 : vector<2x96xf32>
    %315 = vector.extract_strided_slice %309 {offsets = [0, 0], sizes = [2, 32], strides = [1, 1]} : vector<2x96xf32> to vector<2x32xf32>
    %316 = vector.extract_strided_slice %314 {offsets = [0, 0], sizes = [2, 32], strides = [1, 1]} : vector<2x96xf32> to vector<2x32xf32>
    %317 = arith.addf %315, %316 : vector<2x32xf32>
    %318 = arith.negf %317 : vector<2x32xf32>
    %319 = math.exp %318 : vector<2x32xf32>
    %cst_99 = arith.constant 1.000000e+00 : f32
    %320 = vector.broadcast %cst_99 : f32 to vector<2x32xf32>
    %321 = arith.addf %320, %319 : vector<2x32xf32>
    %322 = arith.divf %320, %321 : vector<2x32xf32>
    %323 = vector.extract_strided_slice %309 {offsets = [0, 32], sizes = [2, 32], strides = [1, 1]} : vector<2x96xf32> to vector<2x32xf32>
    %324 = vector.extract_strided_slice %314 {offsets = [0, 32], sizes = [2, 32], strides = [1, 1]} : vector<2x96xf32> to vector<2x32xf32>
    %325 = arith.addf %323, %324 : vector<2x32xf32>
    %326 = arith.negf %325 : vector<2x32xf32>
    %327 = math.exp %326 : vector<2x32xf32>
    %cst_100 = arith.constant 1.000000e+00 : f32
    %328 = vector.broadcast %cst_100 : f32 to vector<2x32xf32>
    %329 = arith.addf %328, %327 : vector<2x32xf32>
    %330 = arith.divf %328, %329 : vector<2x32xf32>
    %331 = vector.extract_strided_slice %309 {offsets = [0, 64], sizes = [2, 32], strides = [1, 1]} : vector<2x96xf32> to vector<2x32xf32>
    %332 = vector.extract_strided_slice %314 {offsets = [0, 64], sizes = [2, 32], strides = [1, 1]} : vector<2x96xf32> to vector<2x32xf32>
    %333 = arith.mulf %322, %332 : vector<2x32xf32>
    %334 = arith.addf %331, %333 : vector<2x32xf32>
    %335 = math.tanh %334 : vector<2x32xf32>
    %cst_101 = arith.constant 1.000000e+00 : f32
    %336 = vector.broadcast %cst_101 : f32 to vector<2x32xf32>
    %337 = arith.subf %336, %330 : vector<2x32xf32>
    %338 = arith.mulf %337, %335 : vector<2x32xf32>
    %339 = arith.mulf %330, %263 : vector<2x32xf32>
    %340 = arith.addf %338, %339 : vector<2x32xf32>
    %c0_102 = arith.constant 0 : index
    %c0_103 = arith.constant 0 : index
    %341 = vector.load %arg25[%c0_102, %c0_103] : memref<10x32xf32, #tpu.memory_space<vmem>>, vector<2x32xf32>
    tpu.vector_store %arg25[%c0_102, %c0_103], %340 {strides = array<i32>} : memref<10x32xf32, #tpu.memory_space<vmem>>, vector<2x32xf32>,
    %c0_104 = arith.constant 0 : index
    %c0_105 = arith.constant 0 : index
    %342 = vector.load %arg26[%c0_104, %c0_105] : memref<10x32xf32, #tpu.memory_space<vmem>>, vector<2x32xf32>
    tpu.vector_store %arg26[%c0_104, %c0_105], %305 {strides = array<i32>} : memref<10x32xf32, #tpu.memory_space<vmem>>, vector<2x32xf32>,
    %c0_106 = arith.constant 0 : index
    %c0_107 = arith.constant 0 : index
    %343 = vector.load %arg10[%c0_106, %c0_107] : memref<32x32xf32, #tpu.memory_space<vmem>>, vector<32x32xf32>
    %cst_108 = arith.constant dense<0.000000e+00> : vector<2x32xf32>
    %344 = tpu.matmul %340, %343, %cst_108 {dimension_numbers = #tpu.dot_dimension_numbers<[1], [0], [0], [1], [0, 0, 1, 1], [], []>} : vector<2x32xf32>, vector<32x32xf32>, vector<2x32xf32> -> vector<2x32xf32>
    %cst_109 = arith.constant dense<0.000000e+00> : vector<16x32xf32>
    %345 = tpu.matmul %287, %344, %cst_109 {dimension_numbers = #tpu.dot_dimension_numbers<[1], [0], [0], [1], [0, 0, 1, 1], [], []>} : vector<16x2xf32>, vector<2x32xf32>, vector<16x32xf32> -> vector<16x32xf32>
    %346 = arith.addf %268, %345 : vector<16x32xf32>
    %347 = math.tanh %346 : vector<16x32xf32>
    %cst_110 = arith.constant dense<0.000000e+00> : vector<16x1xf32>
    %348 = tpu.matmul %347, %283, %cst_110 {dimension_numbers = #tpu.dot_dimension_numbers<[1], [0], [0], [1], [0, 0, 1, 1], [], []>} : vector<16x32xf32>, vector<32x1xf32>, vector<16x1xf32> -> vector<16x1xf32>
    %349 = vector.broadcast %286 : vector<1x1xf32> to vector<16x1xf32>
    %350 = arith.subf %348, %349 : vector<16x1xf32>
    %351 = math.exp %350 : vector<16x1xf32>
    %352 = vector.broadcast %351 : vector<16x1xf32> to vector<16x33xf32>
    %353 = arith.mulf %352, %270 : vector<16x33xf32>
    %cst_111 = arith.constant dense<0.000000e+00> : vector<2x33xf32>
    %354 = tpu.matmul %288, %353, %cst_111 {dimension_numbers = #tpu.dot_dimension_numbers<[1], [0], [0], [1], [0, 0, 1, 1], [], []>} : vector<2x16xf32>, vector<16x33xf32>, vector<2x33xf32> -> vector<2x33xf32>
    %355 = vector.extract_strided_slice %354 {offsets = [0, 0], sizes = [2, 32], strides = [1, 1]} : vector<2x33xf32> to vector<2x32xf32>
    %356 = vector.extract_strided_slice %354 {offsets = [0, 32], sizes = [2, 1], strides = [1, 1]} : vector<2x33xf32> to vector<2x1xf32>
    %357 = tpu.reciprocal %356 {approx = true} : vector<2x1xf32> -> vector<2x1xf32>
    %358 = vector.broadcast %357 : vector<2x1xf32> to vector<2x32xf32>
    %359 = arith.mulf %355, %358 : vector<2x32xf32>
    %360 = vector.extract_strided_slice %276 {offsets = [2, 0], sizes = [2, 96], strides = [1, 1]} : vector<10x96xf32> to vector<2x96xf32>
    %c0_112 = arith.constant 0 : index
    %c0_113 = arith.constant 0 : index
    %361 = vector.load %arg15[%c0_112, %c0_113] : memref<32x96xf32, #tpu.memory_space<vmem>>, vector<32x96xf32>
    %cst_114 = arith.constant dense<0.000000e+00> : vector<2x96xf32>
    %362 = tpu.matmul %359, %361, %cst_114 {dimension_numbers = #tpu.dot_dimension_numbers<[1], [0], [0], [1], [0, 0, 1, 1], [], []>} : vector<2x32xf32>, vector<32x96xf32>, vector<2x96xf32> -> vector<2x96xf32>
    %363 = arith.addf %360, %362 : vector<2x96xf32>
    %c0_115 = arith.constant 0 : index
    %c0_116 = arith.constant 0 : index
    %364 = vector.load %arg16[%c0_115, %c0_116] : memref<32x96xf32, #tpu.memory_space<vmem>>, vector<32x96xf32>
    %cst_117 = arith.constant dense<0.000000e+00> : vector<2x96xf32>
    %365 = tpu.matmul %340, %364, %cst_117 {dimension_numbers = #tpu.dot_dimension_numbers<[1], [0], [0], [1], [0, 0, 1, 1], [], []>} : vector<2x32xf32>, vector<32x96xf32>, vector<2x96xf32> -> vector<2x96xf32>
    %c0_118 = arith.constant 0 : index
    %c0_119 = arith.constant 0 : index
    %366 = vector.load %arg18[%c0_118, %c0_119] : memref<1x96xf32, #tpu.memory_space<vmem>>, vector<1x96xf32>
    %367 = vector.broadcast %366 : vector<1x96xf32> to vector<2x96xf32>
    %368 = arith.addf %365, %367 : vector<2x96xf32>
    %369 = vector.extract_strided_slice %363 {offsets = [0, 0], sizes = [2, 32], strides = [1, 1]} : vector<2x96xf32> to vector<2x32xf32>
    %370 = vector.extract_strided_slice %368 {offsets = [0, 0], sizes = [2, 32], strides = [1, 1]} : vector<2x96xf32> to vector<2x32xf32>
    %371 = arith.addf %369, %370 : vector<2x32xf32>
    %372 = arith.negf %371 : vector<2x32xf32>
    %373 = math.exp %372 : vector<2x32xf32>
    %cst_120 = arith.constant 1.000000e+00 : f32
    %374 = vector.broadcast %cst_120 : f32 to vector<2x32xf32>
    %375 = arith.addf %374, %373 : vector<2x32xf32>
    %376 = arith.divf %374, %375 : vector<2x32xf32>
    %377 = vector.extract_strided_slice %363 {offsets = [0, 32], sizes = [2, 32], strides = [1, 1]} : vector<2x96xf32> to vector<2x32xf32>
    %378 = vector.extract_strided_slice %368 {offsets = [0, 32], sizes = [2, 32], strides = [1, 1]} : vector<2x96xf32> to vector<2x32xf32>
    %379 = arith.addf %377, %378 : vector<2x32xf32>
    %380 = arith.negf %379 : vector<2x32xf32>
    %381 = math.exp %380 : vector<2x32xf32>
    %cst_121 = arith.constant 1.000000e+00 : f32
    %382 = vector.broadcast %cst_121 : f32 to vector<2x32xf32>
    %383 = arith.addf %382, %381 : vector<2x32xf32>
    %384 = arith.divf %382, %383 : vector<2x32xf32>
    %385 = vector.extract_strided_slice %363 {offsets = [0, 64], sizes = [2, 32], strides = [1, 1]} : vector<2x96xf32> to vector<2x32xf32>
    %386 = vector.extract_strided_slice %368 {offsets = [0, 64], sizes = [2, 32], strides = [1, 1]} : vector<2x96xf32> to vector<2x32xf32>
    %387 = arith.mulf %376, %386 : vector<2x32xf32>
    %388 = arith.addf %385, %387 : vector<2x32xf32>
    %389 = math.tanh %388 : vector<2x32xf32>
    %cst_122 = arith.constant 1.000000e+00 : f32
    %390 = vector.broadcast %cst_122 : f32 to vector<2x32xf32>
    %391 = arith.subf %390, %384 : vector<2x32xf32>
    %392 = arith.mulf %391, %389 : vector<2x32xf32>
    %393 = arith.mulf %384, %340 : vector<2x32xf32>
    %394 = arith.addf %392, %393 : vector<2x32xf32>
    %c2_123 = arith.constant 2 : index
    %c0_124 = arith.constant 0 : index
    %395 = vector.load %arg25[%c2_123, %c0_124] : memref<10x32xf32, #tpu.memory_space<vmem>>, vector<2x32xf32>
    tpu.vector_store %arg25[%c2_123, %c0_124], %394 {strides = array<i32>} : memref<10x32xf32, #tpu.memory_space<vmem>>, vector<2x32xf32>,
    %c2_125 = arith.constant 2 : index
    %c0_126 = arith.constant 0 : index
    %396 = vector.load %arg26[%c2_125, %c0_126] : memref<10x32xf32, #tpu.memory_space<vmem>>, vector<2x32xf32>
    tpu.vector_store %arg26[%c2_125, %c0_126], %359 {strides = array<i32>} : memref<10x32xf32, #tpu.memory_space<vmem>>, vector<2x32xf32>,
    %c0_127 = arith.constant 0 : index
    %c0_128 = arith.constant 0 : index
    %397 = vector.load %arg10[%c0_127, %c0_128] : memref<32x32xf32, #tpu.memory_space<vmem>>, vector<32x32xf32>
    %cst_129 = arith.constant dense<0.000000e+00> : vector<2x32xf32>
    %398 = tpu.matmul %394, %397, %cst_129 {dimension_numbers = #tpu.dot_dimension_numbers<[1], [0], [0], [1], [0, 0, 1, 1], [], []>} : vector<2x32xf32>, vector<32x32xf32>, vector<2x32xf32> -> vector<2x32xf32>
    %cst_130 = arith.constant dense<0.000000e+00> : vector<16x32xf32>
    %399 = tpu.matmul %287, %398, %cst_130 {dimension_numbers = #tpu.dot_dimension_numbers<[1], [0], [0], [1], [0, 0, 1, 1], [], []>} : vector<16x2xf32>, vector<2x32xf32>, vector<16x32xf32> -> vector<16x32xf32>
    %400 = arith.addf %268, %399 : vector<16x32xf32>
    %401 = math.tanh %400 : vector<16x32xf32>
    %cst_131 = arith.constant dense<0.000000e+00> : vector<16x1xf32>
    %402 = tpu.matmul %401, %283, %cst_131 {dimension_numbers = #tpu.dot_dimension_numbers<[1], [0], [0], [1], [0, 0, 1, 1], [], []>} : vector<16x32xf32>, vector<32x1xf32>, vector<16x1xf32> -> vector<16x1xf32>
    %403 = vector.broadcast %286 : vector<1x1xf32> to vector<16x1xf32>
    %404 = arith.subf %402, %403 : vector<16x1xf32>
    %405 = math.exp %404 : vector<16x1xf32>
    %406 = vector.broadcast %405 : vector<16x1xf32> to vector<16x33xf32>
    %407 = arith.mulf %406, %270 : vector<16x33xf32>
    %cst_132 = arith.constant dense<0.000000e+00> : vector<2x33xf32>
    %408 = tpu.matmul %288, %407, %cst_132 {dimension_numbers = #tpu.dot_dimension_numbers<[1], [0], [0], [1], [0, 0, 1, 1], [], []>} : vector<2x16xf32>, vector<16x33xf32>, vector<2x33xf32> -> vector<2x33xf32>
    %409 = vector.extract_strided_slice %408 {offsets = [0, 0], sizes = [2, 32], strides = [1, 1]} : vector<2x33xf32> to vector<2x32xf32>
    %410 = vector.extract_strided_slice %408 {offsets = [0, 32], sizes = [2, 1], strides = [1, 1]} : vector<2x33xf32> to vector<2x1xf32>
    %411 = tpu.reciprocal %410 {approx = true} : vector<2x1xf32> -> vector<2x1xf32>
    %412 = vector.broadcast %411 : vector<2x1xf32> to vector<2x32xf32>
    %413 = arith.mulf %409, %412 : vector<2x32xf32>
    %414 = vector.extract_strided_slice %276 {offsets = [4, 0], sizes = [2, 96], strides = [1, 1]} : vector<10x96xf32> to vector<2x96xf32>
    %c0_133 = arith.constant 0 : index
    %c0_134 = arith.constant 0 : index
    %415 = vector.load %arg15[%c0_133, %c0_134] : memref<32x96xf32, #tpu.memory_space<vmem>>, vector<32x96xf32>
    %cst_135 = arith.constant dense<0.000000e+00> : vector<2x96xf32>
    %416 = tpu.matmul %413, %415, %cst_135 {dimension_numbers = #tpu.dot_dimension_numbers<[1], [0], [0], [1], [0, 0, 1, 1], [], []>} : vector<2x32xf32>, vector<32x96xf32>, vector<2x96xf32> -> vector<2x96xf32>
    %417 = arith.addf %414, %416 : vector<2x96xf32>
    %c0_136 = arith.constant 0 : index
    %c0_137 = arith.constant 0 : index
    %418 = vector.load %arg16[%c0_136, %c0_137] : memref<32x96xf32, #tpu.memory_space<vmem>>, vector<32x96xf32>
    %cst_138 = arith.constant dense<0.000000e+00> : vector<2x96xf32>
    %419 = tpu.matmul %394, %418, %cst_138 {dimension_numbers = #tpu.dot_dimension_numbers<[1], [0], [0], [1], [0, 0, 1, 1], [], []>} : vector<2x32xf32>, vector<32x96xf32>, vector<2x96xf32> -> vector<2x96xf32>
    %c0_139 = arith.constant 0 : index
    %c0_140 = arith.constant 0 : index
    %420 = vector.load %arg18[%c0_139, %c0_140] : memref<1x96xf32, #tpu.memory_space<vmem>>, vector<1x96xf32>
    %421 = vector.broadcast %420 : vector<1x96xf32> to vector<2x96xf32>
    %422 = arith.addf %419, %421 : vector<2x96xf32>
    %423 = vector.extract_strided_slice %417 {offsets = [0, 0], sizes = [2, 32], strides = [1, 1]} : vector<2x96xf32> to vector<2x32xf32>
    %424 = vector.extract_strided_slice %422 {offsets = [0, 0], sizes = [2, 32], strides = [1, 1]} : vector<2x96xf32> to vector<2x32xf32>
    %425 = arith.addf %423, %424 : vector<2x32xf32>
    %426 = arith.negf %425 : vector<2x32xf32>
    %427 = math.exp %426 : vector<2x32xf32>
    %cst_141 = arith.constant 1.000000e+00 : f32
    %428 = vector.broadcast %cst_141 : f32 to vector<2x32xf32>
    %429 = arith.addf %428, %427 : vector<2x32xf32>
    %430 = arith.divf %428, %429 : vector<2x32xf32>
    %431 = vector.extract_strided_slice %417 {offsets = [0, 32], sizes = [2, 32], strides = [1, 1]} : vector<2x96xf32> to vector<2x32xf32>
    %432 = vector.extract_strided_slice %422 {offsets = [0, 32], sizes = [2, 32], strides = [1, 1]} : vector<2x96xf32> to vector<2x32xf32>
    %433 = arith.addf %431, %432 : vector<2x32xf32>
    %434 = arith.negf %433 : vector<2x32xf32>
    %435 = math.exp %434 : vector<2x32xf32>
    %cst_142 = arith.constant 1.000000e+00 : f32
    %436 = vector.broadcast %cst_142 : f32 to vector<2x32xf32>
    %437 = arith.addf %436, %435 : vector<2x32xf32>
    %438 = arith.divf %436, %437 : vector<2x32xf32>
    %439 = vector.extract_strided_slice %417 {offsets = [0, 64], sizes = [2, 32], strides = [1, 1]} : vector<2x96xf32> to vector<2x32xf32>
    %440 = vector.extract_strided_slice %422 {offsets = [0, 64], sizes = [2, 32], strides = [1, 1]} : vector<2x96xf32> to vector<2x32xf32>
    %441 = arith.mulf %430, %440 : vector<2x32xf32>
    %442 = arith.addf %439, %441 : vector<2x32xf32>
    %443 = math.tanh %442 : vector<2x32xf32>
    %cst_143 = arith.constant 1.000000e+00 : f32
    %444 = vector.broadcast %cst_143 : f32 to vector<2x32xf32>
    %445 = arith.subf %444, %438 : vector<2x32xf32>
    %446 = arith.mulf %445, %443 : vector<2x32xf32>
    %447 = arith.mulf %438, %394 : vector<2x32xf32>
    %448 = arith.addf %446, %447 : vector<2x32xf32>
    %c4_144 = arith.constant 4 : index
    %c0_145 = arith.constant 0 : index
    %449 = vector.load %arg25[%c4_144, %c0_145] : memref<10x32xf32, #tpu.memory_space<vmem>>, vector<2x32xf32>
    tpu.vector_store %arg25[%c4_144, %c0_145], %448 {strides = array<i32>} : memref<10x32xf32, #tpu.memory_space<vmem>>, vector<2x32xf32>,
    %c4_146 = arith.constant 4 : index
    %c0_147 = arith.constant 0 : index
    %450 = vector.load %arg26[%c4_146, %c0_147] : memref<10x32xf32, #tpu.memory_space<vmem>>, vector<2x32xf32>
    tpu.vector_store %arg26[%c4_146, %c0_147], %413 {strides = array<i32>} : memref<10x32xf32, #tpu.memory_space<vmem>>, vector<2x32xf32>,
    %c0_148 = arith.constant 0 : index
    %c0_149 = arith.constant 0 : index
    %451 = vector.load %arg10[%c0_148, %c0_149] : memref<32x32xf32, #tpu.memory_space<vmem>>, vector<32x32xf32>
    %cst_150 = arith.constant dense<0.000000e+00> : vector<2x32xf32>
    %452 = tpu.matmul %448, %451, %cst_150 {dimension_numbers = #tpu.dot_dimension_numbers<[1], [0], [0], [1], [0, 0, 1, 1], [], []>} : vector<2x32xf32>, vector<32x32xf32>, vector<2x32xf32> -> vector<2x32xf32>
    %cst_151 = arith.constant dense<0.000000e+00> : vector<16x32xf32>
    %453 = tpu.matmul %287, %452, %cst_151 {dimension_numbers = #tpu.dot_dimension_numbers<[1], [0], [0], [1], [0, 0, 1, 1], [], []>} : vector<16x2xf32>, vector<2x32xf32>, vector<16x32xf32> -> vector<16x32xf32>
    %454 = arith.addf %268, %453 : vector<16x32xf32>
    %455 = math.tanh %454 : vector<16x32xf32>
    %cst_152 = arith.constant dense<0.000000e+00> : vector<16x1xf32>
    %456 = tpu.matmul %455, %283, %cst_152 {dimension_numbers = #tpu.dot_dimension_numbers<[1], [0], [0], [1], [0, 0, 1, 1], [], []>} : vector<16x32xf32>, vector<32x1xf32>, vector<16x1xf32> -> vector<16x1xf32>
    %457 = vector.broadcast %286 : vector<1x1xf32> to vector<16x1xf32>
    %458 = arith.subf %456, %457 : vector<16x1xf32>
    %459 = math.exp %458 : vector<16x1xf32>
    %460 = vector.broadcast %459 : vector<16x1xf32> to vector<16x33xf32>
    %461 = arith.mulf %460, %270 : vector<16x33xf32>
    %cst_153 = arith.constant dense<0.000000e+00> : vector<2x33xf32>
    %462 = tpu.matmul %288, %461, %cst_153 {dimension_numbers = #tpu.dot_dimension_numbers<[1], [0], [0], [1], [0, 0, 1, 1], [], []>} : vector<2x16xf32>, vector<16x33xf32>, vector<2x33xf32> -> vector<2x33xf32>
    %463 = vector.extract_strided_slice %462 {offsets = [0, 0], sizes = [2, 32], strides = [1, 1]} : vector<2x33xf32> to vector<2x32xf32>
    %464 = vector.extract_strided_slice %462 {offsets = [0, 32], sizes = [2, 1], strides = [1, 1]} : vector<2x33xf32> to vector<2x1xf32>
    %465 = tpu.reciprocal %464 {approx = true} : vector<2x1xf32> -> vector<2x1xf32>
    %466 = vector.broadcast %465 : vector<2x1xf32> to vector<2x32xf32>
    %467 = arith.mulf %463, %466 : vector<2x32xf32>
    %468 = vector.extract_strided_slice %276 {offsets = [6, 0], sizes = [2, 96], strides = [1, 1]} : vector<10x96xf32> to vector<2x96xf32>
    %c0_154 = arith.constant 0 : index
    %c0_155 = arith.constant 0 : index
    %469 = vector.load %arg15[%c0_154, %c0_155] : memref<32x96xf32, #tpu.memory_space<vmem>>, vector<32x96xf32>
    %cst_156 = arith.constant dense<0.000000e+00> : vector<2x96xf32>
    %470 = tpu.matmul %467, %469, %cst_156 {dimension_numbers = #tpu.dot_dimension_numbers<[1], [0], [0], [1], [0, 0, 1, 1], [], []>} : vector<2x32xf32>, vector<32x96xf32>, vector<2x96xf32> -> vector<2x96xf32>
    %471 = arith.addf %468, %470 : vector<2x96xf32>
    %c0_157 = arith.constant 0 : index
    %c0_158 = arith.constant 0 : index
    %472 = vector.load %arg16[%c0_157, %c0_158] : memref<32x96xf32, #tpu.memory_space<vmem>>, vector<32x96xf32>
    %cst_159 = arith.constant dense<0.000000e+00> : vector<2x96xf32>
    %473 = tpu.matmul %448, %472, %cst_159 {dimension_numbers = #tpu.dot_dimension_numbers<[1], [0], [0], [1], [0, 0, 1, 1], [], []>} : vector<2x32xf32>, vector<32x96xf32>, vector<2x96xf32> -> vector<2x96xf32>
    %c0_160 = arith.constant 0 : index
    %c0_161 = arith.constant 0 : index
    %474 = vector.load %arg18[%c0_160, %c0_161] : memref<1x96xf32, #tpu.memory_space<vmem>>, vector<1x96xf32>
    %475 = vector.broadcast %474 : vector<1x96xf32> to vector<2x96xf32>
    %476 = arith.addf %473, %475 : vector<2x96xf32>
    %477 = vector.extract_strided_slice %471 {offsets = [0, 0], sizes = [2, 32], strides = [1, 1]} : vector<2x96xf32> to vector<2x32xf32>
    %478 = vector.extract_strided_slice %476 {offsets = [0, 0], sizes = [2, 32], strides = [1, 1]} : vector<2x96xf32> to vector<2x32xf32>
    %479 = arith.addf %477, %478 : vector<2x32xf32>
    %480 = arith.negf %479 : vector<2x32xf32>
    %481 = math.exp %480 : vector<2x32xf32>
    %cst_162 = arith.constant 1.000000e+00 : f32
    %482 = vector.broadcast %cst_162 : f32 to vector<2x32xf32>
    %483 = arith.addf %482, %481 : vector<2x32xf32>
    %484 = arith.divf %482, %483 : vector<2x32xf32>
    %485 = vector.extract_strided_slice %471 {offsets = [0, 32], sizes = [2, 32], strides = [1, 1]} : vector<2x96xf32> to vector<2x32xf32>
    %486 = vector.extract_strided_slice %476 {offsets = [0, 32], sizes = [2, 32], strides = [1, 1]} : vector<2x96xf32> to vector<2x32xf32>
    %487 = arith.addf %485, %486 : vector<2x32xf32>
    %488 = arith.negf %487 : vector<2x32xf32>
    %489 = math.exp %488 : vector<2x32xf32>
    %cst_163 = arith.constant 1.000000e+00 : f32
    %490 = vector.broadcast %cst_163 : f32 to vector<2x32xf32>
    %491 = arith.addf %490, %489 : vector<2x32xf32>
    %492 = arith.divf %490, %491 : vector<2x32xf32>
    %493 = vector.extract_strided_slice %471 {offsets = [0, 64], sizes = [2, 32], strides = [1, 1]} : vector<2x96xf32> to vector<2x32xf32>
    %494 = vector.extract_strided_slice %476 {offsets = [0, 64], sizes = [2, 32], strides = [1, 1]} : vector<2x96xf32> to vector<2x32xf32>
    %495 = arith.mulf %484, %494 : vector<2x32xf32>
    %496 = arith.addf %493, %495 : vector<2x32xf32>
    %497 = math.tanh %496 : vector<2x32xf32>
    %cst_164 = arith.constant 1.000000e+00 : f32
    %498 = vector.broadcast %cst_164 : f32 to vector<2x32xf32>
    %499 = arith.subf %498, %492 : vector<2x32xf32>
    %500 = arith.mulf %499, %497 : vector<2x32xf32>
    %501 = arith.mulf %492, %448 : vector<2x32xf32>
    %502 = arith.addf %500, %501 : vector<2x32xf32>
    %c6_165 = arith.constant 6 : index
    %c0_166 = arith.constant 0 : index
    %503 = vector.load %arg25[%c6_165, %c0_166] : memref<10x32xf32, #tpu.memory_space<vmem>>, vector<2x32xf32>
    tpu.vector_store %arg25[%c6_165, %c0_166], %502 {strides = array<i32>} : memref<10x32xf32, #tpu.memory_space<vmem>>, vector<2x32xf32>,
    %c6_167 = arith.constant 6 : index
    %c0_168 = arith.constant 0 : index
    %504 = vector.load %arg26[%c6_167, %c0_168] : memref<10x32xf32, #tpu.memory_space<vmem>>, vector<2x32xf32>
    tpu.vector_store %arg26[%c6_167, %c0_168], %467 {strides = array<i32>} : memref<10x32xf32, #tpu.memory_space<vmem>>, vector<2x32xf32>,
    %c0_169 = arith.constant 0 : index
    %c0_170 = arith.constant 0 : index
    %505 = vector.load %arg10[%c0_169, %c0_170] : memref<32x32xf32, #tpu.memory_space<vmem>>, vector<32x32xf32>
    %cst_171 = arith.constant dense<0.000000e+00> : vector<2x32xf32>
    %506 = tpu.matmul %502, %505, %cst_171 {dimension_numbers = #tpu.dot_dimension_numbers<[1], [0], [0], [1], [0, 0, 1, 1], [], []>} : vector<2x32xf32>, vector<32x32xf32>, vector<2x32xf32> -> vector<2x32xf32>
    %cst_172 = arith.constant dense<0.000000e+00> : vector<16x32xf32>
    %507 = tpu.matmul %287, %506, %cst_172 {dimension_numbers = #tpu.dot_dimension_numbers<[1], [0], [0], [1], [0, 0, 1, 1], [], []>} : vector<16x2xf32>, vector<2x32xf32>, vector<16x32xf32> -> vector<16x32xf32>
    %508 = arith.addf %268, %507 : vector<16x32xf32>
    %509 = math.tanh %508 : vector<16x32xf32>
    %cst_173 = arith.constant dense<0.000000e+00> : vector<16x1xf32>
    %510 = tpu.matmul %509, %283, %cst_173 {dimension_numbers = #tpu.dot_dimension_numbers<[1], [0], [0], [1], [0, 0, 1, 1], [], []>} : vector<16x32xf32>, vector<32x1xf32>, vector<16x1xf32> -> vector<16x1xf32>
    %511 = vector.broadcast %286 : vector<1x1xf32> to vector<16x1xf32>
    %512 = arith.subf %510, %511 : vector<16x1xf32>
    %513 = math.exp %512 : vector<16x1xf32>
    %514 = vector.broadcast %513 : vector<16x1xf32> to vector<16x33xf32>
    %515 = arith.mulf %514, %270 : vector<16x33xf32>
    %cst_174 = arith.constant dense<0.000000e+00> : vector<2x33xf32>
    %516 = tpu.matmul %288, %515, %cst_174 {dimension_numbers = #tpu.dot_dimension_numbers<[1], [0], [0], [1], [0, 0, 1, 1], [], []>} : vector<2x16xf32>, vector<16x33xf32>, vector<2x33xf32> -> vector<2x33xf32>
    %517 = vector.extract_strided_slice %516 {offsets = [0, 0], sizes = [2, 32], strides = [1, 1]} : vector<2x33xf32> to vector<2x32xf32>
    %518 = vector.extract_strided_slice %516 {offsets = [0, 32], sizes = [2, 1], strides = [1, 1]} : vector<2x33xf32> to vector<2x1xf32>
    %519 = tpu.reciprocal %518 {approx = true} : vector<2x1xf32> -> vector<2x1xf32>
    %520 = vector.broadcast %519 : vector<2x1xf32> to vector<2x32xf32>
    %521 = arith.mulf %517, %520 : vector<2x32xf32>
    %522 = vector.extract_strided_slice %276 {offsets = [8, 0], sizes = [2, 96], strides = [1, 1]} : vector<10x96xf32> to vector<2x96xf32>
    %c0_175 = arith.constant 0 : index
    %c0_176 = arith.constant 0 : index
    %523 = vector.load %arg15[%c0_175, %c0_176] : memref<32x96xf32, #tpu.memory_space<vmem>>, vector<32x96xf32>
    %cst_177 = arith.constant dense<0.000000e+00> : vector<2x96xf32>
    %524 = tpu.matmul %521, %523, %cst_177 {dimension_numbers = #tpu.dot_dimension_numbers<[1], [0], [0], [1], [0, 0, 1, 1], [], []>} : vector<2x32xf32>, vector<32x96xf32>, vector<2x96xf32> -> vector<2x96xf32>
    %525 = arith.addf %522, %524 : vector<2x96xf32>
    %c0_178 = arith.constant 0 : index
    %c0_179 = arith.constant 0 : index
    %526 = vector.load %arg16[%c0_178, %c0_179] : memref<32x96xf32, #tpu.memory_space<vmem>>, vector<32x96xf32>
    %cst_180 = arith.constant dense<0.000000e+00> : vector<2x96xf32>
    %527 = tpu.matmul %502, %526, %cst_180 {dimension_numbers = #tpu.dot_dimension_numbers<[1], [0], [0], [1], [0, 0, 1, 1], [], []>} : vector<2x32xf32>, vector<32x96xf32>, vector<2x96xf32> -> vector<2x96xf32>
    %c0_181 = arith.constant 0 : index
    %c0_182 = arith.constant 0 : index
    %528 = vector.load %arg18[%c0_181, %c0_182] : memref<1x96xf32, #tpu.memory_space<vmem>>, vector<1x96xf32>
    %529 = vector.broadcast %528 : vector<1x96xf32> to vector<2x96xf32>
    %530 = arith.addf %527, %529 : vector<2x96xf32>
    %531 = vector.extract_strided_slice %525 {offsets = [0, 0], sizes = [2, 32], strides = [1, 1]} : vector<2x96xf32> to vector<2x32xf32>
    %532 = vector.extract_strided_slice %530 {offsets = [0, 0], sizes = [2, 32], strides = [1, 1]} : vector<2x96xf32> to vector<2x32xf32>
    %533 = arith.addf %531, %532 : vector<2x32xf32>
    %534 = arith.negf %533 : vector<2x32xf32>
    %535 = math.exp %534 : vector<2x32xf32>
    %cst_183 = arith.constant 1.000000e+00 : f32
    %536 = vector.broadcast %cst_183 : f32 to vector<2x32xf32>
    %537 = arith.addf %536, %535 : vector<2x32xf32>
    %538 = arith.divf %536, %537 : vector<2x32xf32>
    %539 = vector.extract_strided_slice %525 {offsets = [0, 32], sizes = [2, 32], strides = [1, 1]} : vector<2x96xf32> to vector<2x32xf32>
    %540 = vector.extract_strided_slice %530 {offsets = [0, 32], sizes = [2, 32], strides = [1, 1]} : vector<2x96xf32> to vector<2x32xf32>
    %541 = arith.addf %539, %540 : vector<2x32xf32>
    %542 = arith.negf %541 : vector<2x32xf32>
    %543 = math.exp %542 : vector<2x32xf32>
    %cst_184 = arith.constant 1.000000e+00 : f32
    %544 = vector.broadcast %cst_184 : f32 to vector<2x32xf32>
    %545 = arith.addf %544, %543 : vector<2x32xf32>
    %546 = arith.divf %544, %545 : vector<2x32xf32>
    %547 = vector.extract_strided_slice %525 {offsets = [0, 64], sizes = [2, 32], strides = [1, 1]} : vector<2x96xf32> to vector<2x32xf32>
    %548 = vector.extract_strided_slice %530 {offsets = [0, 64], sizes = [2, 32], strides = [1, 1]} : vector<2x96xf32> to vector<2x32xf32>
    %549 = arith.mulf %538, %548 : vector<2x32xf32>
    %550 = arith.addf %547, %549 : vector<2x32xf32>
    %551 = math.tanh %550 : vector<2x32xf32>
    %cst_185 = arith.constant 1.000000e+00 : f32
    %552 = vector.broadcast %cst_185 : f32 to vector<2x32xf32>
    %553 = arith.subf %552, %546 : vector<2x32xf32>
    %554 = arith.mulf %553, %551 : vector<2x32xf32>
    %555 = arith.mulf %546, %502 : vector<2x32xf32>
    %556 = arith.addf %554, %555 : vector<2x32xf32>
    %c8_186 = arith.constant 8 : index
    %c0_187 = arith.constant 0 : index
    %557 = vector.load %arg25[%c8_186, %c0_187] : memref<10x32xf32, #tpu.memory_space<vmem>>, vector<2x32xf32>
    tpu.vector_store %arg25[%c8_186, %c0_187], %556 {strides = array<i32>} : memref<10x32xf32, #tpu.memory_space<vmem>>, vector<2x32xf32>,
    %c8_188 = arith.constant 8 : index
    %c0_189 = arith.constant 0 : index
    %558 = vector.load %arg26[%c8_188, %c0_189] : memref<10x32xf32, #tpu.memory_space<vmem>>, vector<2x32xf32>
    tpu.vector_store %arg26[%c8_188, %c0_189], %521 {strides = array<i32>} : memref<10x32xf32, #tpu.memory_space<vmem>>, vector<2x32xf32>,
    %c0_190 = arith.constant 0 : index
    %c0_191 = arith.constant 0 : index
    %559 = vector.load %arg25[%c0_190, %c0_191] : memref<10x32xf32, #tpu.memory_space<vmem>>, vector<10x32xf32>
    %c0_192 = arith.constant 0 : index
    %c0_193 = arith.constant 0 : index
    %560 = vector.load %arg19[%c0_192, %c0_193] : memref<32x32xf32, #tpu.memory_space<vmem>>, vector<32x32xf32>
    %cst_194 = arith.constant dense<0.000000e+00> : vector<10x32xf32>
    %561 = tpu.matmul %559, %560, %cst_194 {dimension_numbers = #tpu.dot_dimension_numbers<[1], [0], [0], [1], [0, 0, 1, 1], [], []>} : vector<10x32xf32>, vector<32x32xf32>, vector<10x32xf32> -> vector<10x32xf32>
    %c0_195 = arith.constant 0 : index
    %c0_196 = arith.constant 0 : index
    %562 = vector.load %arg26[%c0_195, %c0_196] : memref<10x32xf32, #tpu.memory_space<vmem>>, vector<10x32xf32>
    %c0_197 = arith.constant 0 : index
    %c0_198 = arith.constant 0 : index
    %563 = vector.load %arg20[%c0_197, %c0_198] : memref<32x32xf32, #tpu.memory_space<vmem>>, vector<32x32xf32>
    %cst_199 = arith.constant dense<0.000000e+00> : vector<10x32xf32>
    %564 = tpu.matmul %562, %563, %cst_199 {dimension_numbers = #tpu.dot_dimension_numbers<[1], [0], [0], [1], [0, 0, 1, 1], [], []>} : vector<10x32xf32>, vector<32x32xf32>, vector<10x32xf32> -> vector<10x32xf32>
    %565 = arith.addf %561, %564 : vector<10x32xf32>
    %566 = arith.addf %565, %282 : vector<10x32xf32>
    %cst_200 = arith.constant 0.000000e+00 : f32
    %567 = vector.broadcast %cst_200 : f32 to vector<2x32xf32>
    %c0_201 = arith.constant 0 : index
    %c0_202 = arith.constant 0 : index
    %568 = vector.load %arg23[%c0_201, %c0_202] : memref<12x32xf32, #tpu.memory_space<vmem>>, vector<2x32xf32>
    tpu.vector_store %arg23[%c0_201, %c0_202], %567 {strides = array<i32>} : memref<12x32xf32, #tpu.memory_space<vmem>>, vector<2x32xf32>,
    %c2_203 = arith.constant 2 : index
    %c0_204 = arith.constant 0 : index
    %569 = vector.load %arg23[%c2_203, %c0_204] : memref<12x32xf32, #tpu.memory_space<vmem>>, vector<10x32xf32>
    tpu.vector_store %arg23[%c2_203, %c0_204], %566 {strides = array<i32>} : memref<12x32xf32, #tpu.memory_space<vmem>>, vector<10x32xf32>,
    return
  }
}

</mosaic_0001>

<llo_original>
// kernel: tile.9
$region0: #{tile.9}
  %s0 = inlined_call_operand.vmem [shape: f32[8,2,2], index: 0, kind: input, shape index: {}]
  %s1 = inlined_call_operand.vmem [shape: f32[16,2], index: 1, kind: output, shape index: {}]
  $region1: #{tile.9} parent=0
    #allocation0 [shape = 'u8[4096]{0}', space=vmem, size = 0x1000, scoped, tag = 'scoped mem for output reshape']
    %s2 = smov 3
    %v3 = vld [vmem:[%s0] ss:$8 sm:%s2]
    %vm4 = vcmask 15360
    %5 = vst.msk [vmem:[#allocation0] sm:$0x3] %vm4, %v3
    %s6 = scalar_lea.vmem %s0, 7
    %s7 = smov 3
    %v8 = vld [vmem:[%s6] ss:$8 sm:%s7]
    %9 = vrot.lane.b32.xlu0 %v8, 14
    %v10 = vpop.permute.xlu0 %9
    %vm11 = vcmask 130160
    %12 = vst.msk [vmem:[#allocation0] sm:$0x3] %vm11, %v10
    %s13 = scalar_lea.vmem %s0, 6
    %s14 = smov 3
    %v15 = vld [vmem:[%s13] ss:$8 sm:%s14]
    %16 = vrot.lane.b32.xlu0 %v15, 12
    %v17 = vpop.permute.xlu0 %16
    %vm18 = vcmask 113760
    %19 = vst.msk [vmem:[#allocation0] sm:$0x3] %vm18, %v17
    %s20 = scalar_lea.vmem %s0, 5
    %s21 = smov 3
    %v22 = vld [vmem:[%s20] ss:$8 sm:%s21]
    %23 = vrot.lane.b32.xlu0 %v22, 10
    %v24 = vpop.permute.xlu0 %23
    %vm25 = vcmask 97360
    %26 = vst.msk [vmem:[#allocation0] sm:$0x3] %vm25, %v24
    %s27 = scalar_lea.vmem %s0, 4
    %s28 = smov 3
    %v29 = vld [vmem:[%s27] ss:$8 sm:%s28]
    %30 = vrot.lane.b32.xlu0 %v29, 8
    %v31 = vpop.permute.xlu0 %30
    %vm32 = vcmask 80960
    %33 = vst.msk [vmem:[#allocation0] sm:$0x3] %vm32, %v31
    %s34 = scalar_lea.vmem %s0, 3
    %s35 = smov 3
    %v36 = vld [vmem:[%s34] ss:$8 sm:%s35]
    %37 = vrot.lane.b32.xlu0 %v36, 6
    %v38 = vpop.permute.xlu0 %37
    %vm39 = vcmask 64560
    %40 = vst.msk [vmem:[#allocation0] sm:$0x3] %vm39, %v38
    %s41 = scalar_lea.vmem %s0, 2
    %s42 = smov 3
    %v43 = vld [vmem:[%s41] ss:$8 sm:%s42]
    %44 = vrot.lane.b32.xlu0 %v43, 4
    %v45 = vpop.permute.xlu0 %44
    %vm46 = vcmask 48160
    %47 = vst.msk [vmem:[#allocation0] sm:$0x3] %vm46, %v45
    %s48 = scalar_lea.vmem %s0, 1
    %s49 = smov 3
    %v50 = vld [vmem:[%s48] ss:$8 sm:%s49]
    %51 = vrot.lane.b32.xlu0 %v50, 2
    %v52 = vpop.permute.xlu0 %51
    %vm53 = vcmask 31760
    %54 = vst.msk [vmem:[#allocation0] sm:$0x3] %vm53, %v52
    %s56 = ssub.s32 4, 1
    %v57 = vld [vmem:[#allocation0] sm:%s56]
    %s59 = ssub.s32 4, 1
    %60 = vst [vmem:[%s1] sm:%s59] %v57

// kernel: seq2seq_forward.1
$region0: #{seq2seq_forward.1}
  #allocation0 [shape = 'u32[]', space=smem, size = 0x4, offset = 0x4, fixed_abs, tag = 'smem constant byte address 0x4 - core index']
  #allocation1 [shape = 'u32[72,128]{1,0:T(1,128)}', space=vmem, size = 0x9000, scoped, tag = 'internal scratch']
  #allocation2 [shape = 'f32[16,32]{1,0:T(8,128)}', space=vmem, size = 0x2000, scoped, tag = 'scratch operand']
  #allocation3 [shape = 'f32[10,32]{1,0:T(8,128)}', space=vmem, size = 0x2000, scoped, tag = 'scratch operand']
  #allocation4 [shape = 'f32[10,32]{1,0:T(8,128)}', space=vmem, size = 0x2000, scoped, tag = 'scratch operand']
  %s0 = inlined_call_operand.vmem [shape: f32[16,16], index: 0, kind: input, shape index: {}]
  %s1 = inlined_call_operand.vmem [shape: f32[10,16], index: 1, kind: input, shape index: {}]
  %s2 = inlined_call_operand.vmem [shape: f32[16,2], index: 2, kind: input, shape index: {}]
  %s3 = inlined_call_operand.vmem [shape: f32[2,16], index: 3, kind: input, shape index: {}]
  %s4 = inlined_call_operand.vmem [shape: f32[16,96], index: 4, kind: input, shape index: {}]
  %s5 = inlined_call_operand.vmem [shape: f32[32,96], index: 5, kind: input, shape index: {}]
  %s6 = inlined_call_operand.vmem [shape: f32[1,96], index: 6, kind: input, shape index: {}]
  %s7 = inlined_call_operand.vmem [shape: f32[1,96], index: 7, kind: input, shape index: {}]
  %s8 = inlined_call_operand.vmem [shape: f32[32,32], index: 8, kind: input, shape index: {}]
  %s9 = inlined_call_operand.vmem [shape: f32[1,32], index: 9, kind: input, shape index: {}]
  %s10 = inlined_call_operand.vmem [shape: f32[32,32], index: 10, kind: input, shape index: {}]
  %s11 = inlined_call_operand.vmem [shape: f32[32,32], index: 11, kind: input, shape index: {}]
  %s12 = inlined_call_operand.vmem [shape: f32[1,32], index: 12, kind: input, shape index: {}]
  %s13 = inlined_call_operand.vmem [shape: f32[32,1], index: 13, kind: input, shape index: {}]
  %s14 = inlined_call_operand.vmem [shape: f32[16,96], index: 14, kind: input, shape index: {}]
  %s15 = inlined_call_operand.vmem [shape: f32[32,96], index: 15, kind: input, shape index: {}]
  %s16 = inlined_call_operand.vmem [shape: f32[32,96], index: 16, kind: input, shape index: {}]
  %s17 = inlined_call_operand.vmem [shape: f32[1,96], index: 17, kind: input, shape index: {}]
  %s18 = inlined_call_operand.vmem [shape: f32[1,96], index: 18, kind: input, shape index: {}]
  %s19 = inlined_call_operand.vmem [shape: f32[32,32], index: 19, kind: input, shape index: {}]
  %s20 = inlined_call_operand.vmem [shape: f32[32,32], index: 20, kind: input, shape index: {}]
  %s21 = inlined_call_operand.vmem [shape: f32[16,32], index: 21, kind: input, shape index: {}]
  %s22 = inlined_call_operand.vmem [shape: f32[1,32], index: 22, kind: input, shape index: {}]
  %s23 = inlined_call_operand.vmem [shape: f32[12,32], index: 23, kind: output, shape index: {}]
  %s24 = sld [smem:[#allocation0]]
  $region102: #{seq2seq_forward.1} parent=0
    _
  %s26 = ssub.s32 1, %s24
  %s27 = scalar_select 0, %s26, %s24
  // Predicated region
  $region2: #{seq2seq_forward.1} parent=0 // pred_check
    _
  $region3: #{seq2seq_forward.1} parent=0 // pred_check_branch
    %29 = sbr.rel (0) target = $region5
  $region4: #{seq2seq_forward.1} parent=0 // pred_region
    _
  $region5: #{seq2seq_forward.1} parent=0 // pred_fallthru
    _
  // Predicated region
  $region6: #{seq2seq_forward.1} parent=0 // pred_check
    _
  $region7: #{seq2seq_forward.1} parent=0 // pred_check_branch
    %31 = sbr.rel (0) target = $region9
  $region8: #{seq2seq_forward.1} parent=0 // pred_region
    _
  $region9: #{seq2seq_forward.1} parent=0 // pred_fallthru
    _
  // Predicated region
  $region10: #{seq2seq_forward.1} parent=0 // pred_check
    _
  $region11: #{seq2seq_forward.1} parent=0 // pred_check_branch
    %33 = sbr.rel (0) target = $region13
  $region12: #{seq2seq_forward.1} parent=0 // pred_region
    _
  $region13: #{seq2seq_forward.1} parent=0 // pred_fallthru
    _
  // Predicated region
  $region14: #{seq2seq_forward.1} parent=0 // pred_check
    _
  $region15: #{seq2seq_forward.1} parent=0 // pred_check_branch
    %35 = sbr.rel (0) target = $region17
  $region16: #{seq2seq_forward.1} parent=0 // pred_region
    _
  $region17: #{seq2seq_forward.1} parent=0 // pred_fallthru
    _
  // Predicated region
  $region18: #{seq2seq_forward.1} parent=0 // pred_check
    _
  $region19: #{seq2seq_forward.1} parent=0 // pred_check_branch
    %37 = sbr.rel (0) target = $region21
  $region20: #{seq2seq_forward.1} parent=0 // pred_region
    _
  $region21: #{seq2seq_forward.1} parent=0 // pred_fallthru
    _
  // Predicated region
  $region22: #{seq2seq_forward.1} parent=0 // pred_check
    _
  $region23: #{seq2seq_forward.1} parent=0 // pred_check_branch
    %39 = sbr.rel (0) target = $region25
  $region24: #{seq2seq_forward.1} parent=0 // pred_region
    _
  $region25: #{seq2seq_forward.1} parent=0 // pred_fallthru
    _
  // Predicated region
  $region26: #{seq2seq_forward.1} parent=0 // pred_check
    _
  $region27: #{seq2seq_forward.1} parent=0 // pred_check_branch
    %41 = sbr.rel (0) target = $region29
  $region28: #{seq2seq_forward.1} parent=0 // pred_region
    _
  $region29: #{seq2seq_forward.1} parent=0 // pred_fallthru
    _
  // Predicated region
  $region30: #{seq2seq_forward.1} parent=0 // pred_check
    _
  $region31: #{seq2seq_forward.1} parent=0 // pred_check_branch
    %43 = sbr.rel (0) target = $region33
  $region32: #{seq2seq_forward.1} parent=0 // pred_region
    _
  $region33: #{seq2seq_forward.1} parent=0 // pred_fallthru
    _
  // Predicated region
  $region34: #{seq2seq_forward.1} parent=0 // pred_check
    _
  $region35: #{seq2seq_forward.1} parent=0 // pred_check_branch
    %45 = sbr.rel (0) target = $region37
  $region36: #{seq2seq_forward.1} parent=0 // pred_region
    _
  $region37: #{seq2seq_forward.1} parent=0 // pred_fallthru
    _
  // Predicated region
  $region38: #{seq2seq_forward.1} parent=0 // pred_check
    _
  $region39: #{seq2seq_forward.1} parent=0 // pred_check_branch
    %47 = sbr.rel (0) target = $region41
  $region40: #{seq2seq_forward.1} parent=0 // pred_region
    _
  $region41: #{seq2seq_forward.1} parent=0 // pred_fallthru
    _
  // Predicated region
  $region42: #{seq2seq_forward.1} parent=0 // pred_check
    _
  $region43: #{seq2seq_forward.1} parent=0 // pred_check_branch
    %49 = sbr.rel (0) target = $region45
  $region44: #{seq2seq_forward.1} parent=0 // pred_region
    _
  $region45: #{seq2seq_forward.1} parent=0 // pred_fallthru
    _
  // Predicated region
  $region46: #{seq2seq_forward.1} parent=0 // pred_check
    _
  $region47: #{seq2seq_forward.1} parent=0 // pred_check_branch
    %51 = sbr.rel (0) target = $region49
  $region48: #{seq2seq_forward.1} parent=0 // pred_region
    _
  $region49: #{seq2seq_forward.1} parent=0 // pred_fallthru
    _
  // Predicated region
  $region50: #{seq2seq_forward.1} parent=0 // pred_check
    _
  $region51: #{seq2seq_forward.1} parent=0 // pred_check_branch
    %53 = sbr.rel (0) target = $region53
  $region52: #{seq2seq_forward.1} parent=0 // pred_region
    _
  $region53: #{seq2seq_forward.1} parent=0 // pred_fallthru
    _
  // Predicated region
  $region54: #{seq2seq_forward.1} parent=0 // pred_check
    _
  $region55: #{seq2seq_forward.1} parent=0 // pred_check_branch
    %55 = sbr.rel (0) target = $region57
  $region56: #{seq2seq_forward.1} parent=0 // pred_region
    _
  $region57: #{seq2seq_forward.1} parent=0 // pred_fallthru
    _
  // Predicated region
  $region58: #{seq2seq_forward.1} parent=0 // pred_check
    _
  $region59: #{seq2seq_forward.1} parent=0 // pred_check_branch
    %57 = sbr.rel (0) target = $region61
  $region60: #{seq2seq_forward.1} parent=0 // pred_region
    _
  $region61: #{seq2seq_forward.1} parent=0 // pred_fallthru
    _
  // Predicated region
  $region62: #{seq2seq_forward.1} parent=0 // pred_check
    _
  $region63: #{seq2seq_forward.1} parent=0 // pred_check_branch
    %59 = sbr.rel (0) target = $region65
  $region64: #{seq2seq_forward.1} parent=0 // pred_region
    _
  $region65: #{seq2seq_forward.1} parent=0 // pred_fallthru
    _
  // Predicated region
  $region66: #{seq2seq_forward.1} parent=0 // pred_check
    _
  $region67: #{seq2seq_forward.1} parent=0 // pred_check_branch
    %61 = sbr.rel (0) target = $region69
  $region68: #{seq2seq_forward.1} parent=0 // pred_region
    _
  $region69: #{seq2seq_forward.1} parent=0 // pred_fallthru
    _
  // Predicated region
  $region70: #{seq2seq_forward.1} parent=0 // pred_check
    _
  $region71: #{seq2seq_forward.1} parent=0 // pred_check_branch
    %63 = sbr.rel (0) target = $region73
  $region72: #{seq2seq_forward.1} parent=0 // pred_region
    _
  $region73: #{seq2seq_forward.1} parent=0 // pred_fallthru
    _
  // Predicated region
  $region74: #{seq2seq_forward.1} parent=0 // pred_check
    _
  $region75: #{seq2seq_forward.1} parent=0 // pred_check_branch
    %65 = sbr.rel (0) target = $region77
  $region76: #{seq2seq_forward.1} parent=0 // pred_region
    _
  $region77: #{seq2seq_forward.1} parent=0 // pred_fallthru
    _
  // Predicated region
  $region78: #{seq2seq_forward.1} parent=0 // pred_check
    _
  $region79: #{seq2seq_forward.1} parent=0 // pred_check_branch
    %67 = sbr.rel (0) target = $region81
  $region80: #{seq2seq_forward.1} parent=0 // pred_region
    _
  $region81: #{seq2seq_forward.1} parent=0 // pred_fallthru
    _
  // Predicated region
  $region82: #{seq2seq_forward.1} parent=0 // pred_check
    _
  $region83: #{seq2seq_forward.1} parent=0 // pred_check_branch
    %69 = sbr.rel (0) target = $region85
  $region84: #{seq2seq_forward.1} parent=0 // pred_region
    _
  $region85: #{seq2seq_forward.1} parent=0 // pred_fallthru
    _
  // Predicated region
  $region86: #{seq2seq_forward.1} parent=0 // pred_check
    _
  $region87: #{seq2seq_forward.1} parent=0 // pred_check_branch
    %71 = sbr.rel (0) target = $region89
  $region88: #{seq2seq_forward.1} parent=0 // pred_region
    _
  $region89: #{seq2seq_forward.1} parent=0 // pred_fallthru
    _
  // Predicated region
  $region90: #{seq2seq_forward.1} parent=0 // pred_check
    _
  $region91: #{seq2seq_forward.1} parent=0 // pred_check_branch
    %73 = sbr.rel (0) target = $region93
  $region92: #{seq2seq_forward.1} parent=0 // pred_region
    _
  $region93: #{seq2seq_forward.1} parent=0 // pred_fallthru
    _
  %v74 = vld [vmem:[%s0] sm:$0xff]
  %v75 = vld [vmem:[%s0 + $0x8] sm:$0xff]
  %v76 = vld [vmem:[%s4] sm:$0xff]
  %v77 = vld [vmem:[%s4 + $0x8] sm:$0xff]
  %v78 = vld [vmem:[%s6] sm:$0x1]
  %v80 = vperm.slane %v78, 0
  %vm82 = vcmask 130048
  %v84 = vsel %vm82, %v74, 0
  %v87 = vsel %vm82, %v75, 0
  %89 = vmatpush.msra.mxu0 0.0
  %90 = vmatpush.msra.mxu0 0.0
  %91 = vmatpush.msra.mxu0 0.0
  %92 = vmatpush.msra.mxu0 0.0
  %93 = vmatpush.msra.mxu0 0.0
  %94 = vmatpush.msra.mxu0 0.0
  %95 = vmatpush.msra.mxu0 0.0
  %96 = vmatpush.msra.mxu0 0.0
  %97 = vmatpush.msra.mxu0 0.0
  %98 = vmatpush.msra.mxu0 0.0
  %99 = vmatpush.msra.mxu0 0.0
  %100 = vmatpush.msra.mxu0 0.0
  %101 = vmatpush.msra.mxu0 0.0
  %102 = vmatpush.msra.mxu0 0.0
  %103 = vmatpush.msra.mxu0 %v77
  %104 = vmatpush.msra.mxu0 %v76
  %105 = vmatmul.f32.gmra.mxu0 %v84
  %v106 = vpop.f32.mrf.mxu0
  %v107 = vadd.f32 %v80, %v106
  %108 = vmatmul.f32.gmra.mxu0 %v87
  %v109 = vpop.f32.mrf.mxu0
  %v110 = vadd.f32 %v80, %v109
  %111 = vdwg.mxu0
  %v112 = vld [vmem:[%s5] sm:$0xff]
  %v113 = vld [vmem:[%s5 + $0x8] sm:$0xff]
  %v114 = vld [vmem:[%s5 + $0x10] sm:$0xff]
  %v115 = vld [vmem:[%s5 + $0x18] sm:$0xff]
  %v116 = vld [vmem:[%s7] sm:$0x1]
  %v118 = vperm.slane %v116, 0
  %vm120 = vcmask 261120
  %v122 = vsel %vm120, 0.0, 0
  %124 = vmatpush.msra.mxu0 0.0
  %125 = vmatpush.msra.mxu0 0.0
  %126 = vmatpush.msra.mxu0 0.0
  %127 = vmatpush.msra.mxu0 0.0
  %128 = vmatpush.msra.mxu0 0.0
  %129 = vmatpush.msra.mxu0 0.0
  %130 = vmatpush.msra.mxu0 0.0
  %131 = vmatpush.msra.mxu0 0.0
  %132 = vmatpush.msra.mxu0 0.0
  %133 = vmatpush.msra.mxu0 0.0
  %134 = vmatpush.msra.mxu0 0.0
  %135 = vmatpush.msra.mxu0 0.0
  %136 = vmatpush.msra.mxu0 %v115
  %137 = vmatpush.msra.mxu0 %v114
  %138 = vmatpush.msra.mxu0 %v113
  %139 = vmatpush.msra.mxu0 %v112
  %140 = vmatmul.f32.gmra.mxu0 %v122
  %v141 = vpop.f32.mrf.mxu0
  %v142 = vadd.f32 %v118, %v141
  %143 = vdwg.mxu0
  %v144 = vadd.f32 %v107, %v142
  %v145 = vxor.u32 %v144, 2147483648
  %v146 = vmul.f32 %v145, 1.442695
  %v147 = vpow.pop %v146
  %v148 = vadd.f32 %v147, 1.0
  %v149 = vrcp.pop %v148
  %v150 = vmul.f32 %v148, %v149
  %v151 = vsub.f32 1.0, %v150
  %v152 = vmul.f32 %v149, %v151
  %v153 = vadd.f32 %v149, %v152
  %vm154 = vweird.f32 %v148
  %vm155 = vweird.f32 %v149
  %vm156 = vmor %vm154, %vm155
  %v157 = vsel %vm156, %v149, %v153
  %v158 = vand.u32 2147483647, %v148
  %vm159 = vcmp.eq.f32.partialorder %v158, 8.507059e+37
  %v160 = vand.u32 %v148, 2147483648
  %v161 = vor.u32 1.1754944e-38, %v160
  %v162 = vsel %vm159, %v161, %v157
  %v163 = vmul.f32 1.0, %v162
  %165 = vrot.lane.b32.xlu0 %v142, 64
  %v166 = vpop.permute.xlu0 %165
  %v168 = vmul.f32 %v163, %v166
  %170 = vrot.lane.b32.xlu0 %v168, 64
  %v171 = vpop.permute.xlu0 %170
  %v173 = vadd.f32 %v107, %v171
  %v174 = vtanh.pop %v173
  %v175 = vsub.f32 1.0, %v163
  %177 = vrot.lane.b32.xlu0 %v174, 96
  %v178 = vpop.permute.xlu0 %177
  %v180 = vmul.f32 %v175, %v178
  %v181 = vmul.f32 %v163, 0.0
  %v182 = vadd.f32 %v180, %v181
  %184 = vrot.lane.b32.xlu0 %v182, 96
  %v185 = vpop.permute.xlu0 %184
  %vm187 = vcmask 254976
  %188 = vst.msk [vmem:[#allocation2] sm:$0x3] %vm187, %v185
  %v189 = vsel %vm120, %v185, 0
  %191 = vmatpush.msra.mxu0 0.0
  %192 = vmatpush.msra.mxu0 0.0
  %193 = vmatpush.msra.mxu0 0.0
  %194 = vmatpush.msra.mxu0 0.0
  %195 = vmatpush.msra.mxu0 0.0
  %196 = vmatpush.msra.mxu0 0.0
  %197 = vmatpush.msra.mxu0 0.0
  %198 = vmatpush.msra.mxu0 0.0
  %199 = vmatpush.msra.mxu0 0.0
  %200 = vmatpush.msra.mxu0 0.0
  %201 = vmatpush.msra.mxu0 0.0
  %202 = vmatpush.msra.mxu0 0.0
  %203 = vmatpush.msra.mxu0 %v115
  %204 = vmatpush.msra.mxu0 %v114
  %205 = vmatpush.msra.mxu0 %v113
  %206 = vmatpush.msra.mxu0 %v112
  %207 = vmatmul.f32.gmra.mxu0 %v189
  %v208 = vpop.f32.mrf.mxu0
  %v209 = vadd.f32 %v118, %v208
  %210 = vdwg.mxu0
  %v212 = vrot.slane %v209, 6
  %v214 = vadd.f32 %v107, %v212
  %v215 = vxor.u32 %v214, 2147483648
  %v216 = vmul.f32 %v215, 1.442695
  %v217 = vpow.pop %v216
  %v218 = vadd.f32 %v217, 1.0
  %v219 = vrcp.pop %v218
  %v220 = vmul.f32 %v218, %v219
  %v221 = vsub.f32 1.0, %v220
  %v222 = vmul.f32 %v219, %v221
  %v223 = vadd.f32 %v219, %v222
  %vm224 = vweird.f32 %v218
  %vm225 = vweird.f32 %v219
  %vm226 = vmor %vm224, %vm225
  %v227 = vsel %vm226, %v219, %v223
  %v228 = vand.u32 2147483647, %v218
  %vm229 = vcmp.eq.f32.partialorder %v228, 8.507059e+37
  %v230 = vand.u32 %v218, 2147483648
  %v231 = vor.u32 1.1754944e-38, %v230
  %v232 = vsel %vm229, %v231, %v227
  %v233 = vmul.f32 1.0, %v232
  %234 = vrot.lane.b32.xlu0 %v212, 64
  %v235 = vpop.permute.xlu0 %234
  %v237 = vmul.f32 %v233, %v235
  %239 = vrot.lane.b32.xlu0 %v237, 64
  %v240 = vpop.permute.xlu0 %239
  %v242 = vadd.f32 %v107, %v240
  %v243 = vtanh.pop %v242
  %v244 = vsub.f32 1.0, %v233
  %246 = vrot.lane.b32.xlu0 %v243, 96
  %v247 = vpop.permute.xlu0 %246
  %v249 = vmul.f32 %v244, %v247
  %v250 = vrot.slane %v182, 6
  %v252 = vmul.f32 %v233, %v250
  %v253 = vadd.f32 %v249, %v252
  %255 = vrot.lane.b32.xlu0 %v253, 96
  %v256 = vpop.permute.xlu0 %255
  %vm258 = vcmask 257026
  %259 = vst.msk [vmem:[#allocation2] sm:$0xc] %vm258, %v256
  %v260 = vrot.slane %v253, 2
  %261 = vrot.lane.b32.xlu0 %v260, 96
  %v262 = vpop.permute.xlu0 %261
  %v263 = vsel %vm120, %v262, 0
  %265 = vmatpush.msra.mxu0 0.0
  %266 = vmatpush.msra.mxu0 0.0
  %267 = vmatpush.msra.mxu0 0.0
  %268 = vmatpush.msra.mxu0 0.0
  %269 = vmatpush.msra.mxu0 0.0
  %270 = vmatpush.msra.mxu0 0.0
  %271 = vmatpush.msra.mxu0 0.0
  %272 = vmatpush.msra.mxu0 0.0
  %273 = vmatpush.msra.mxu0 0.0
  %274 = vmatpush.msra.mxu0 0.0
  %275 = vmatpush.msra.mxu0 0.0
  %276 = vmatpush.msra.mxu0 0.0
  %277 = vmatpush.msra.mxu0 %v115
  %278 = vmatpush.msra.mxu0 %v114
  %279 = vmatpush.msra.mxu0 %v113
  %280 = vmatpush.msra.mxu0 %v112
  %281 = vmatmul.f32.gmra.mxu0 %v263
  %v282 = vpop.f32.mrf.mxu0
  %v283 = vadd.f32 %v118, %v282
  %284 = vdwg.mxu0
  %v286 = vrot.slane %v283, 4
  %v288 = vadd.f32 %v107, %v286
  %v289 = vxor.u32 %v288, 2147483648
  %v290 = vmul.f32 %v289, 1.442695
  %v291 = vpow.pop %v290
  %v292 = vadd.f32 %v291, 1.0
  %v293 = vrcp.pop %v292
  %v294 = vmul.f32 %v292, %v293
  %v295 = vsub.f32 1.0, %v294
  %v296 = vmul.f32 %v293, %v295
  %v297 = vadd.f32 %v293, %v296
  %vm298 = vweird.f32 %v292
  %vm299 = vweird.f32 %v293
  %vm300 = vmor %vm298, %vm299
  %v301 = vsel %vm300, %v293, %v297
  %v302 = vand.u32 2147483647, %v292
  %vm303 = vcmp.eq.f32.partialorder %v302, 8.507059e+37
  %v304 = vand.u32 %v292, 2147483648
  %v305 = vor.u32 1.1754944e-38, %v304
  %v306 = vsel %vm303, %v305, %v301
  %v307 = vmul.f32 1.0, %v306
  %308 = vrot.lane.b32.xlu0 %v286, 64
  %v309 = vpop.permute.xlu0 %308
  %v311 = vmul.f32 %v307, %v309
  %313 = vrot.lane.b32.xlu0 %v311, 64
  %v314 = vpop.permute.xlu0 %313
  %v316 = vadd.f32 %v107, %v314
  %v317 = vtanh.pop %v316
  %v318 = vsub.f32 1.0, %v307
  %320 = vrot.lane.b32.xlu0 %v317, 96
  %v321 = vpop.permute.xlu0 %320
  %v323 = vmul.f32 %v318, %v321
  %v324 = vrot.slane %v253, 6
  %v326 = vmul.f32 %v307, %v324
  %v327 = vadd.f32 %v323, %v326
  %329 = vrot.lane.b32.xlu0 %v327, 96
  %v330 = vpop.permute.xlu0 %329
  %vm332 = vcmask 259076
  %333 = vst.msk [vmem:[#allocation2] sm:$0x30] %vm332, %v330
  %v334 = vrot.slane %v327, 4
  %335 = vrot.lane.b32.xlu0 %v334, 96
  %v336 = vpop.permute.xlu0 %335
  %v337 = vsel %vm120, %v336, 0
  %339 = vmatpush.msra.mxu0 0.0
  %340 = vmatpush.msra.mxu0 0.0
  %341 = vmatpush.msra.mxu0 0.0
  %342 = vmatpush.msra.mxu0 0.0
  %343 = vmatpush.msra.mxu0 0.0
  %344 = vmatpush.msra.mxu0 0.0
  %345 = vmatpush.msra.mxu0 0.0
  %346 = vmatpush.msra.mxu0 0.0
  %347 = vmatpush.msra.mxu0 0.0
  %348 = vmatpush.msra.mxu0 0.0
  %349 = vmatpush.msra.mxu0 0.0
  %350 = vmatpush.msra.mxu0 0.0
  %351 = vmatpush.msra.mxu0 %v115
  %352 = vmatpush.msra.mxu0 %v114
  %353 = vmatpush.msra.mxu0 %v113
  %354 = vmatpush.msra.mxu0 %v112
  %355 = vmatmul.f32.gmra.mxu0 %v337
  %v356 = vpop.f32.mrf.mxu0
  %v357 = vadd.f32 %v118, %v356
  %358 = vdwg.mxu0
  %v360 = vrot.slane %v357, 2
  %v362 = vadd.f32 %v107, %v360
  %v363 = vxor.u32 %v362, 2147483648
  %v364 = vmul.f32 %v363, 1.442695
  %v365 = vpow.pop %v364
  %v366 = vadd.f32 %v365, 1.0
  %v367 = vrcp.pop %v366
  %v368 = vmul.f32 %v366, %v367
  %v369 = vsub.f32 1.0, %v368
  %v370 = vmul.f32 %v367, %v369
  %v371 = vadd.f32 %v367, %v370
  %vm372 = vweird.f32 %v366
  %vm373 = vweird.f32 %v367
  %vm374 = vmor %vm372, %vm373
  %v375 = vsel %vm374, %v367, %v371
  %v376 = vand.u32 2147483647, %v366
  %vm377 = vcmp.eq.f32.partialorder %v376, 8.507059e+37
  %v378 = vand.u32 %v366, 2147483648
  %v379 = vor.u32 1.1754944e-38, %v378
  %v380 = vsel %vm377, %v379, %v375
  %v381 = vmul.f32 1.0, %v380
  %382 = vrot.lane.b32.xlu0 %v360, 64
  %v383 = vpop.permute.xlu0 %382
  %v385 = vmul.f32 %v381, %v383
  %387 = vrot.lane.b32.xlu0 %v385, 64
  %v388 = vpop.permute.xlu0 %387
  %v390 = vadd.f32 %v107, %v388
  %v391 = vtanh.pop %v390
  %v392 = vsub.f32 1.0, %v381
  %394 = vrot.lane.b32.xlu0 %v391, 96
  %v395 = vpop.permute.xlu0 %394
  %v397 = vmul.f32 %v392, %v395
  %v398 = vrot.slane %v327, 6
  %v400 = vmul.f32 %v381, %v398
  %v401 = vadd.f32 %v397, %v400
  %403 = vrot.lane.b32.xlu0 %v401, 96
  %v404 = vpop.permute.xlu0 %403
  %vm406 = vcmask 261126
  %407 = vst.msk [vmem:[#allocation2] sm:$0xc0] %vm406, %v404
  %v408 = vrot.slane %v401, 6
  %409 = vrot.lane.b32.xlu0 %v408, 96
  %v410 = vpop.permute.xlu0 %409
  %v411 = vsel %vm120, %v410, 0
  %413 = vmatpush.msra.mxu0 0.0
  %414 = vmatpush.msra.mxu0 0.0
  %415 = vmatpush.msra.mxu0 0.0
  %416 = vmatpush.msra.mxu0 0.0
  %417 = vmatpush.msra.mxu0 0.0
  %418 = vmatpush.msra.mxu0 0.0
  %419 = vmatpush.msra.mxu0 0.0
  %420 = vmatpush.msra.mxu0 0.0
  %421 = vmatpush.msra.mxu0 0.0
  %422 = vmatpush.msra.mxu0 0.0
  %423 = vmatpush.msra.mxu0 0.0
  %424 = vmatpush.msra.mxu0 0.0
  %425 = vmatpush.msra.mxu0 %v115
  %426 = vmatpush.msra.mxu0 %v114
  %427 = vmatpush.msra.mxu0 %v113
  %428 = vmatpush.msra.mxu0 %v112
  %429 = vmatmul.f32.gmra.mxu0 %v411
  %v430 = vpop.f32.mrf.mxu0
  %v431 = vadd.f32 %v118, %v430
  %432 = vdwg.mxu0
  %v433 = vadd.f32 %v110, %v431
  %v434 = vxor.u32 %v433, 2147483648
  %v435 = vmul.f32 %v434, 1.442695
  %v436 = vpow.pop %v435
  %v437 = vadd.f32 %v436, 1.0
  %v438 = vrcp.pop %v437
  %v439 = vmul.f32 %v437, %v438
  %v440 = vsub.f32 1.0, %v439
  %v441 = vmul.f32 %v438, %v440
  %v442 = vadd.f32 %v438, %v441
  %vm443 = vweird.f32 %v437
  %vm444 = vweird.f32 %v438
  %vm445 = vmor %vm443, %vm444
  %v446 = vsel %vm445, %v438, %v442
  %v447 = vand.u32 2147483647, %v437
  %vm448 = vcmp.eq.f32.partialorder %v447, 8.507059e+37
  %v449 = vand.u32 %v437, 2147483648
  %v450 = vor.u32 1.1754944e-38, %v449
  %v451 = vsel %vm448, %v450, %v446
  %v452 = vmul.f32 1.0, %v451
  %454 = vrot.lane.b32.xlu0 %v431, 64
  %v455 = vpop.permute.xlu0 %454
  %v457 = vmul.f32 %v452, %v455
  %459 = vrot.lane.b32.xlu0 %v457, 64
  %v460 = vpop.permute.xlu0 %459
  %v462 = vadd.f32 %v110, %v460
  %v463 = vtanh.pop %v462
  %v464 = vsub.f32 1.0, %v452
  %466 = vrot.lane.b32.xlu0 %v463, 96
  %v467 = vpop.permute.xlu0 %466
  %v469 = vmul.f32 %v464, %v467
  %v471 = vmul.f32 %v452, %v408
  %v472 = vadd.f32 %v469, %v471
  %474 = vrot.lane.b32.xlu0 %v472, 96
  %v475 = vpop.permute.xlu0 %474
  %477 = vst.msk [vmem:[#allocation2 + $0x8] sm:$0x3] %vm187, %v475
  %v478 = vsel %vm120, %v475, 0
  %480 = vmatpush.msra.mxu0 0.0
  %481 = vmatpush.msra.mxu0 0.0
  %482 = vmatpush.msra.mxu0 0.0
  %483 = vmatpush.msra.mxu0 0.0
  %484 = vmatpush.msra.mxu0 0.0
  %485 = vmatpush.msra.mxu0 0.0
  %486 = vmatpush.msra.mxu0 0.0
  %487 = vmatpush.msra.mxu0 0.0
  %488 = vmatpush.msra.mxu0 0.0
  %489 = vmatpush.msra.mxu0 0.0
  %490 = vmatpush.msra.mxu0 0.0
  %491 = vmatpush.msra.mxu0 0.0
  %492 = vmatpush.msra.mxu0 %v115
  %493 = vmatpush.msra.mxu0 %v114
  %494 = vmatpush.msra.mxu0 %v113
  %495 = vmatpush.msra.mxu0 %v112
  %496 = vmatmul.f32.gmra.mxu0 %v478
  %v497 = vpop.f32.mrf.mxu0
  %v498 = vadd.f32 %v118, %v497
  %499 = vdwg.mxu0
  %v501 = vrot.slane %v498, 6
  %v503 = vadd.f32 %v110, %v501
  %v504 = vxor.u32 %v503, 2147483648
  %v505 = vmul.f32 %v504, 1.442695
  %v506 = vpow.pop %v505
  %v507 = vadd.f32 %v506, 1.0
  %v508 = vrcp.pop %v507
  %v509 = vmul.f32 %v507, %v508
  %v510 = vsub.f32 1.0, %v509
  %v511 = vmul.f32 %v508, %v510
  %v512 = vadd.f32 %v508, %v511
  %vm513 = vweird.f32 %v507
  %vm514 = vweird.f32 %v508
  %vm515 = vmor %vm513, %vm514
  %v516 = vsel %vm515, %v508, %v512
  %v517 = vand.u32 2147483647, %v507
  %vm518 = vcmp.eq.f32.partialorder %v517, 8.507059e+37
  %v519 = vand.u32 %v507, 2147483648
  %v520 = vor.u32 1.1754944e-38, %v519
  %v521 = vsel %vm518, %v520, %v516
  %v522 = vmul.f32 1.0, %v521
  %523 = vrot.lane.b32.xlu0 %v501, 64
  %v524 = vpop.permute.xlu0 %523
  %v526 = vmul.f32 %v522, %v524
  %528 = vrot.lane.b32.xlu0 %v526, 64
  %v529 = vpop.permute.xlu0 %528
  %v531 = vadd.f32 %v110, %v529
  %v532 = vtanh.pop %v531
  %v533 = vsub.f32 1.0, %v522
  %535 = vrot.lane.b32.xlu0 %v532, 96
  %v536 = vpop.permute.xlu0 %535
  %v538 = vmul.f32 %v533, %v536
  %v539 = vrot.slane %v472, 6
  %v541 = vmul.f32 %v522, %v539
  %v542 = vadd.f32 %v538, %v541
  %544 = vrot.lane.b32.xlu0 %v542, 96
  %v545 = vpop.permute.xlu0 %544
  %547 = vst.msk [vmem:[#allocation2 + $0x8] sm:$0xc] %vm258, %v545
  %v548 = vrot.slane %v542, 2
  %549 = vrot.lane.b32.xlu0 %v548, 96
  %v550 = vpop.permute.xlu0 %549
  %v551 = vsel %vm120, %v550, 0
  %553 = vmatpush.msra.mxu0 0.0
  %554 = vmatpush.msra.mxu0 0.0
  %555 = vmatpush.msra.mxu0 0.0
  %556 = vmatpush.msra.mxu0 0.0
  %557 = vmatpush.msra.mxu0 0.0
  %558 = vmatpush.msra.mxu0 0.0
  %559 = vmatpush.msra.mxu0 0.0
  %560 = vmatpush.msra.mxu0 0.0
  %561 = vmatpush.msra.mxu0 0.0
  %562 = vmatpush.msra.mxu0 0.0
  %563 = vmatpush.msra.mxu0 0.0
  %564 = vmatpush.msra.mxu0 0.0
  %565 = vmatpush.msra.mxu0 %v115
  %566 = vmatpush.msra.mxu0 %v114
  %567 = vmatpush.msra.mxu0 %v113
  %568 = vmatpush.msra.mxu0 %v112
  %569 = vmatmul.f32.gmra.mxu0 %v551
  %v570 = vpop.f32.mrf.mxu0
  %v571 = vadd.f32 %v118, %v570
  %572 = vdwg.mxu0
  %v574 = vrot.slane %v571, 4
  %v576 = vadd.f32 %v110, %v574
  %v577 = vxor.u32 %v576, 2147483648
  %v578 = vmul.f32 %v577, 1.442695
  %v579 = vpow.pop %v578
  %v580 = vadd.f32 %v579, 1.0
  %v581 = vrcp.pop %v580
  %v582 = vmul.f32 %v580, %v581
  %v583 = vsub.f32 1.0, %v582
  %v584 = vmul.f32 %v581, %v583
  %v585 = vadd.f32 %v581, %v584
  %vm586 = vweird.f32 %v580
  %vm587 = vweird.f32 %v581
  %vm588 = vmor %vm586, %vm587
  %v589 = vsel %vm588, %v581, %v585
  %v590 = vand.u32 2147483647, %v580
  %vm591 = vcmp.eq.f32.partialorder %v590, 8.507059e+37
  %v592 = vand.u32 %v580, 2147483648
  %v593 = vor.u32 1.1754944e-38, %v592
  %v594 = vsel %vm591, %v593, %v589
  %v595 = vmul.f32 1.0, %v594
  %596 = vrot.lane.b32.xlu0 %v574, 64
  %v597 = vpop.permute.xlu0 %596
  %v599 = vmul.f32 %v595, %v597
  %601 = vrot.lane.b32.xlu0 %v599, 64
  %v602 = vpop.permute.xlu0 %601
  %v604 = vadd.f32 %v110, %v602
  %v605 = vtanh.pop %v604
  %v606 = vsub.f32 1.0, %v595
  %608 = vrot.lane.b32.xlu0 %v605, 96
  %v609 = vpop.permute.xlu0 %608
  %v611 = vmul.f32 %v606, %v609
  %v612 = vrot.slane %v542, 6
  %v614 = vmul.f32 %v595, %v612
  %v615 = vadd.f32 %v611, %v614
  %617 = vrot.lane.b32.xlu0 %v615, 96
  %v618 = vpop.permute.xlu0 %617
  %620 = vst.msk [vmem:[#allocation2 + $0x8] sm:$0x30] %vm332, %v618
  %v621 = vrot.slane %v615, 4
  %622 = vrot.lane.b32.xlu0 %v621, 96
  %v623 = vpop.permute.xlu0 %622
  %v624 = vsel %vm120, %v623, 0
  %626 = vmatpush.msra.mxu0 0.0
  %627 = vmatpush.msra.mxu0 0.0
  %628 = vmatpush.msra.mxu0 0.0
  %629 = vmatpush.msra.mxu0 0.0
  %630 = vmatpush.msra.mxu0 0.0
  %631 = vmatpush.msra.mxu0 0.0
  %632 = vmatpush.msra.mxu0 0.0
  %633 = vmatpush.msra.mxu0 0.0
  %634 = vmatpush.msra.mxu0 0.0
  %635 = vmatpush.msra.mxu0 0.0
  %636 = vmatpush.msra.mxu0 0.0
  %637 = vmatpush.msra.mxu0 0.0
  %638 = vmatpush.msra.mxu0 %v115
  %639 = vmatpush.msra.mxu0 %v114
  %640 = vmatpush.msra.mxu0 %v113
  %641 = vmatpush.msra.mxu0 %v112
  %642 = vmatmul.f32.gmra.mxu0 %v624
  %v643 = vpop.f32.mrf.mxu0
  %v644 = vadd.f32 %v118, %v643
  %645 = vdwg.mxu0
  %v647 = vrot.slane %v644, 2
  %v649 = vadd.f32 %v110, %v647
  %v650 = vxor.u32 %v649, 2147483648
  %v651 = vmul.f32 %v650, 1.442695
  %v652 = vpow.pop %v651
  %v653 = vadd.f32 %v652, 1.0
  %v654 = vrcp.pop %v653
  %v655 = vmul.f32 %v653, %v654
  %v656 = vsub.f32 1.0, %v655
  %v657 = vmul.f32 %v654, %v656
  %v658 = vadd.f32 %v654, %v657
  %vm659 = vweird.f32 %v653
  %vm660 = vweird.f32 %v654
  %vm661 = vmor %vm659, %vm660
  %v662 = vsel %vm661, %v654, %v658
  %v663 = vand.u32 2147483647, %v653
  %vm664 = vcmp.eq.f32.partialorder %v663, 8.507059e+37
  %v665 = vand.u32 %v653, 2147483648
  %v666 = vor.u32 1.1754944e-38, %v665
  %v667 = vsel %vm664, %v666, %v662
  %v668 = vmul.f32 1.0, %v667
  %669 = vrot.lane.b32.xlu0 %v647, 64
  %v670 = vpop.permute.xlu0 %669
  %v672 = vmul.f32 %v668, %v670
  %674 = vrot.lane.b32.xlu0 %v672, 64
  %v675 = vpop.permute.xlu0 %674
  %v677 = vadd.f32 %v110, %v675
  %v678 = vtanh.pop %v677
  %v679 = vsub.f32 1.0, %v668
  %681 = vrot.lane.b32.xlu0 %v678, 96
  %v682 = vpop.permute.xlu0 %681
  %v684 = vmul.f32 %v679, %v682
  %v685 = vrot.slane %v615, 6
  %v687 = vmul.f32 %v668, %v685
  %v688 = vadd.f32 %v684, %v687
  %690 = vrot.lane.b32.xlu0 %v688, 96
  %v691 = vpop.permute.xlu0 %690
  %693 = vst.msk [vmem:[#allocation2 + $0x8] sm:$0xc0] %vm406, %v691
  %v694 = vld [vmem:[#allocation2] sm:$0xff]
  %v695 = vld [vmem:[#allocation2 + $0x8] sm:$0xff]
  %v696 = vld [vmem:[%s8] sm:$0xff]
  %v697 = vld [vmem:[%s8 + $0x8] sm:$0xff]
  %v698 = vld [vmem:[%s8 + $0x10] sm:$0xff]
  %v699 = vld [vmem:[%s8 + $0x18] sm:$0xff]
  %v700 = vld [vmem:[%s9] sm:$0x1]
  %v702 = vperm.slane %v700, 0
  %v704 = vrot.slane %v688, 6
  %705 = vrot.lane.b32.xlu0 %v704, 96
  %v706 = vpop.permute.xlu0 %705
  %v707 = vsel %vm120, %v706, 0
  %709 = vmatpush.msra.mxu0 0.0
  %710 = vmatpush.msra.mxu0 0.0
  %711 = vmatpush.msra.mxu0 0.0
  %712 = vmatpush.msra.mxu0 0.0
  %713 = vmatpush.msra.mxu0 0.0
  %714 = vmatpush.msra.mxu0 0.0
  %715 = vmatpush.msra.mxu0 0.0
  %716 = vmatpush.msra.mxu0 0.0
  %717 = vmatpush.msra.mxu0 0.0
  %718 = vmatpush.msra.mxu0 0.0
  %719 = vmatpush.msra.mxu0 0.0
  %720 = vmatpush.msra.mxu0 0.0
  %721 = vmatpush.msra.mxu0 %v699
  %722 = vmatpush.msra.mxu0 %v698
  %723 = vmatpush.msra.mxu0 %v697
  %724 = vmatpush.msra.mxu0 %v696
  %725 = vmatmul.f32.gmra.mxu0 %v707
  %v726 = vpop.f32.mrf.mxu0
  %v727 = vadd.f32 %v702, %v726
  %728 = vdwg.mxu0
  %v729 = vtanh.pop %v727
  %v730 = vld [vmem:[%s11] sm:$0xff]
  %v731 = vld [vmem:[%s11 + $0x8] sm:$0xff]
  %v732 = vld [vmem:[%s11 + $0x10] sm:$0xff]
  %v733 = vld [vmem:[%s11 + $0x18] sm:$0xff]
  %v734 = vld [vmem:[%s12] sm:$0x1]
  %v736 = vperm.slane %v734, 0
  %v739 = vsel %vm120, %v694, 0
  %v742 = vsel %vm120, %v695, 0
  %744 = vmatpush.msra.mxu0 0.0
  %745 = vmatpush.msra.mxu0 0.0
  %746 = vmatpush.msra.mxu0 0.0
  %747 = vmatpush.msra.mxu0 0.0
  %748 = vmatpush.msra.mxu0 0.0
  %749 = vmatpush.msra.mxu0 0.0
  %750 = vmatpush.msra.mxu0 0.0
  %751 = vmatpush.msra.mxu0 0.0
  %752 = vmatpush.msra.mxu0 0.0
  %753 = vmatpush.msra.mxu0 0.0
  %754 = vmatpush.msra.mxu0 0.0
  %755 = vmatpush.msra.mxu0 0.0
  %756 = vmatpush.msra.mxu0 %v733
  %757 = vmatpush.msra.mxu0 %v732
  %758 = vmatpush.msra.mxu0 %v731
  %759 = vmatpush.msra.mxu0 %v730
  %760 = vmatmul.f32.gmra.mxu0 %v739
  %v761 = vpop.f32.mrf.mxu0
  %v762 = vadd.f32 %v736, %v761
  %763 = vmatmul.f32.gmra.mxu0 %v742
  %v764 = vpop.f32.mrf.mxu0
  %v765 = vadd.f32 %v736, %v764
  %766 = vdwg.mxu0
  %v767 = vsel %vm120, %v694, 1.0
  %v768 = vsel %vm120, %v695, 1.0
  %v769 = vld [vmem:[%s1] sm:$0xff]
  %v770 = vld [vmem:[%s1 + $0x8] sm:$0x3]
  %v771 = vld [vmem:[%s14] sm:$0xff]
  %v772 = vld [vmem:[%s14 + $0x8] sm:$0xff]
  %v773 = vld [vmem:[%s17] sm:$0x1]
  %v775 = vperm.slane %v773, 0
  %v778 = vsel %vm82, %v769, 0
  %v781 = vsel %vm82, %v770, 0
  %783 = vmatpush.msra.mxu0 0.0
  %784 = vmatpush.msra.mxu0 0.0
  %785 = vmatpush.msra.mxu0 0.0
  %786 = vmatpush.msra.mxu0 0.0
  %787 = vmatpush.msra.mxu0 0.0
  %788 = vmatpush.msra.mxu0 0.0
  %789 = vmatpush.msra.mxu0 0.0
  %790 = vmatpush.msra.mxu0 0.0
  %791 = vmatpush.msra.mxu0 0.0
  %792 = vmatpush.msra.mxu0 0.0
  %793 = vmatpush.msra.mxu0 0.0
  %794 = vmatpush.msra.mxu0 0.0
  %795 = vmatpush.msra.mxu0 0.0
  %796 = vmatpush.msra.mxu0 0.0
  %797 = vmatpush.msra.mxu0 %v772
  %798 = vmatpush.msra.mxu0 %v771
  %799 = vmatmul.f32.gmra.mxu0 %v778
  %v800 = vpop.f32.mrf.mxu0
  %v801 = vadd.f32 %v775, %v800
  %802 = vmatmul.f32.gmra.mxu0 %v781
  %v803 = vpop.f32.mrf.mxu0
  %v804 = vadd.f32 %v775, %v803
  %805 = vdwg.mxu0
  %v806 = vld [vmem:[%s21] sm:$0xff]
  %v807 = vld [vmem:[%s21 + $0x8] sm:$0xff]
  %v808 = vld [vmem:[%s22] sm:$0x1]
  %v810 = vperm.slane %v808, 0
  %812 = vmatpush.msra.mxu0 0.0
  %813 = vmatpush.msra.mxu0 0.0
  %814 = vmatpush.msra.mxu0 0.0
  %815 = vmatpush.msra.mxu0 0.0
  %816 = vmatpush.msra.mxu0 0.0
  %817 = vmatpush.msra.mxu0 0.0
  %818 = vmatpush.msra.mxu0 0.0
  %819 = vmatpush.msra.mxu0 0.0
  %820 = vmatpush.msra.mxu0 0.0
  %821 = vmatpush.msra.mxu0 0.0
  %822 = vmatpush.msra.mxu0 0.0
  %823 = vmatpush.msra.mxu0 0.0
  %824 = vmatpush.msra.mxu0 0.0
  %825 = vmatpush.msra.mxu0 0.0
  %826 = vmatpush.msra.mxu0 %v807
  %827 = vmatpush.msra.mxu0 %v806
  %828 = vmatmul.f32.gmra.mxu0 %v778
  %v829 = vpop.f32.mrf.mxu0
  %v830 = vadd.f32 %v810, %v829
  %831 = vmatmul.f32.gmra.mxu0 %v781
  %v832 = vpop.f32.mrf.mxu0
  %v833 = vadd.f32 %v810, %v832
  %834 = vdwg.mxu0
  %v835 = vld [vmem:[%s13] sm:$0xff]
  %v836 = vld [vmem:[%s13 + $0x8] sm:$0xff]
  %v837 = vld [vmem:[%s13 + $0x10] sm:$0xff]
  %v838 = vld [vmem:[%s13 + $0x18] sm:$0xff]
  %v839 = vand.u32 2147483647, %v835
  %v840 = vand.u32 2147483647, %v836
  %v841 = vand.u32 2147483647, %v837
  %v842 = vand.u32 2147483647, %v838
  %vm843 = vcmask 7168
  %v844 = vsel %vm843, %v839, 0.0
  %v845 = vsel %vm843, %v840, 0.0
  %v846 = vadd.f32 %v844, %v845
  %v847 = vsel %vm843, %v841, 0.0
  %v848 = vadd.f32 %v846, %v847
  %v849 = vsel %vm843, %v842, 0.0
  %v850 = vadd.f32 %v848, %v849
  %v851 = vrot.slane %v850, 4
  %v852 = vadd.f32 %v850, %v851
  %v853 = vrot.slane %v852, 2
  %v854 = vadd.f32 %v852, %v853
  %v855 = vrot.slane %v854, 1
  %v856 = vadd.f32 %v854, %v855
  %v857 = vld [vmem:[%s2] sm:$0xff]
  %v858 = vld [vmem:[%s2 + $0x8] sm:$0xff]
  %v859 = vld [vmem:[%s3] sm:$0x3]
  %v860 = vld [vmem:[%s10] sm:$0xff]
  %v861 = vld [vmem:[%s10 + $0x8] sm:$0xff]
  %v862 = vld [vmem:[%s10 + $0x10] sm:$0xff]
  %v863 = vld [vmem:[%s10 + $0x18] sm:$0xff]
  %v865 = vsel %vm120, %v729, 0
  %867 = vmatpush.msra.mxu0 0.0
  %868 = vmatpush.msra.mxu0 0.0
  %869 = vmatpush.msra.mxu0 0.0
  %870 = vmatpush.msra.mxu0 0.0
  %871 = vmatpush.msra.mxu0 0.0
  %872 = vmatpush.msra.mxu0 0.0
  %873 = vmatpush.msra.mxu0 0.0
  %874 = vmatpush.msra.mxu0 0.0
  %875 = vmatpush.msra.mxu0 0.0
  %876 = vmatpush.msra.mxu0 0.0
  %877 = vmatpush.msra.mxu0 0.0
  %878 = vmatpush.msra.mxu0 0.0
  %879 = vmatpush.msra.mxu0 %v863
  %880 = vmatpush.msra.mxu0 %v862
  %881 = vmatpush.msra.mxu0 %v861
  %882 = vmatpush.msra.mxu0 %v860
  %883 = vmatmul.f32.gmra.mxu0 %v865
  %v884 = vpop.f32.mrf.mxu0
  %v885 = vadd.f32 0.0, %v884
  %886 = vdwg.mxu0
  %vm887 = vcmask 15360
  %v889 = vsel %vm887, %v857, 0
  %v892 = vsel %vm887, %v858, 0
  %vm894 = vcmask 1041408
  %v896 = vsel %vm894, %v885, 0
  %898 = vmatpush.msra.mxu0 0.0
  %899 = vmatpush.msra.mxu0 0.0
  %900 = vmatpush.msra.mxu0 0.0
  %901 = vmatpush.msra.mxu0 0.0
  %902 = vmatpush.msra.mxu0 0.0
  %903 = vmatpush.msra.mxu0 0.0
  %904 = vmatpush.msra.mxu0 0.0
  %905 = vmatpush.msra.mxu0 0.0
  %906 = vmatpush.msra.mxu0 0.0
  %907 = vmatpush.msra.mxu0 0.0
  %908 = vmatpush.msra.mxu0 0.0
  %909 = vmatpush.msra.mxu0 0.0
  %910 = vmatpush.msra.mxu0 0.0
  %911 = vmatpush.msra.mxu0 0.0
  %912 = vmatpush.msra.mxu0 0.0
  %913 = vmatpush.msra.mxu0 %v896
  %914 = vmatmul.f32.gmra.mxu0 %v889
  %v915 = vpop.f32.mrf.mxu0
  %v916 = vadd.f32 0.0, %v915
  %917 = vmatmul.f32.gmra.mxu0 %v892
  %v918 = vpop.f32.mrf.mxu0
  %v919 = vadd.f32 0.0, %v918
  %920 = vdwg.mxu0
  %v921 = vadd.f32 %v762, %v916
  %v922 = vadd.f32 %v765, %v919
  %v923 = vtanh.pop %v921
  %v924 = vtanh.pop %v922
  %v926 = vsel %vm120, %v923, 0
  %v929 = vsel %vm120, %v924, 0
  %931 = vmatpush.msra.mxu0 0.0
  %932 = vmatpush.msra.mxu0 0.0
  %933 = vmatpush.msra.mxu0 0.0
  %934 = vmatpush.msra.mxu0 0.0
  %935 = vmatpush.msra.mxu0 0.0
  %936 = vmatpush.msra.mxu0 0.0
  %937 = vmatpush.msra.mxu0 0.0
  %938 = vmatpush.msra.mxu0 0.0
  %939 = vmatpush.msra.mxu0 0.0
  %940 = vmatpush.msra.mxu0 0.0
  %941 = vmatpush.msra.mxu0 0.0
  %942 = vmatpush.msra.mxu0 0.0
  %943 = vmatpush.msra.mxu0 %v838
  %944 = vmatpush.msra.mxu0 %v837
  %945 = vmatpush.msra.mxu0 %v836
  %946 = vmatpush.msra.mxu0 %v835
  %947 = vmatmul.f32.gmra.mxu0 %v926
  %v948 = vpop.f32.mrf.mxu0
  %v949 = vadd.f32 0.0, %v948
  %950 = vmatmul.f32.gmra.mxu0 %v929
  %v951 = vpop.f32.mrf.mxu0
  %v952 = vadd.f32 0.0, %v951
  %953 = vdwg.mxu0
  %v954 = vsub.f32 %v949, %v856
  %v955 = vsub.f32 %v952, %v856
  %v956 = vmul.f32 %v954, 1.442695
  %v957 = vpow.pop %v956
  %v958 = vmul.f32 %v955, 1.442695
  %v959 = vpow.pop %v958
  %961 = vset.pattern.permute.xlu0 0
  %962 = vperm.xlu0 %961, %v957
  %v963 = vpop.permute.xlu0 %962
  %966 = vset.pattern.permute.xlu0 0
  %967 = vperm.xlu0 %966, %v959
  %v968 = vpop.permute.xlu0 %967
  %v970 = vmul.f32 %v963, %v767
  %v971 = vmul.f32 %v968, %v768
  %v973 = vsel %vm82, %v859, 0
  %975 = vmatpush.msra.mxu0 0.0
  %976 = vmatpush.msra.mxu0 0.0
  %977 = vmatpush.msra.mxu0 0.0
  %978 = vmatpush.msra.mxu0 0.0
  %979 = vmatpush.msra.mxu0 0.0
  %980 = vmatpush.msra.mxu0 0.0
  %981 = vmatpush.msra.mxu0 0.0
  %982 = vmatpush.msra.mxu0 0.0
  %983 = vmatpush.msra.mxu0 0.0
  %984 = vmatpush.msra.mxu0 0.0
  %985 = vmatpush.msra.mxu0 0.0
  %986 = vmatpush.msra.mxu0 0.0
  %987 = vmatpush.msra.mxu0 0.0
  %988 = vmatpush.msra.mxu0 0.0
  %989 = vmatpush.msra.mxu0 %v971
  %990 = vmatpush.msra.mxu0 %v970
  %991 = vmatmul.f32.gmra.mxu0 %v973
  %v992 = vpop.f32.mrf.mxu0
  %v993 = vadd.f32 0.0, %v992
  %994 = vdwg.mxu0
  %v995 = vrcp.pop %v993
  %997 = vset.pattern.permute.xlu0 32
  %998 = vperm.xlu0 %997, %v995
  %v999 = vpop.permute.xlu0 %998
  %v1001 = vmul.f32 %v993, %v999
  %v1002 = vld [vmem:[%s15] sm:$0xff]
  %v1003 = vld [vmem:[%s15 + $0x8] sm:$0xff]
  %v1004 = vld [vmem:[%s15 + $0x10] sm:$0xff]
  %v1005 = vld [vmem:[%s15 + $0x18] sm:$0xff]
  %v1007 = vsel %vm120, %v1001, 0
  %1009 = vmatpush.msra.mxu0 0.0
  %1010 = vmatpush.msra.mxu0 0.0
  %1011 = vmatpush.msra.mxu0 0.0
  %1012 = vmatpush.msra.mxu0 0.0
  %1013 = vmatpush.msra.mxu0 0.0
  %1014 = vmatpush.msra.mxu0 0.0
  %1015 = vmatpush.msra.mxu0 0.0
  %1016 = vmatpush.msra.mxu0 0.0
  %1017 = vmatpush.msra.mxu0 0.0
  %1018 = vmatpush.msra.mxu0 0.0
  %1019 = vmatpush.msra.mxu0 0.0
  %1020 = vmatpush.msra.mxu0 0.0
  %1021 = vmatpush.msra.mxu0 %v1005
  %1022 = vmatpush.msra.mxu0 %v1004
  %1023 = vmatpush.msra.mxu0 %v1003
  %1024 = vmatpush.msra.mxu0 %v1002
  %1025 = vmatmul.f32.gmra.mxu0 %v1007
  %v1026 = vpop.f32.mrf.mxu0
  %v1027 = vadd.f32 0.0, %v1026
  %1028 = vdwg.mxu0
  %v1029 = vadd.f32 %v801, %v1027
  %v1030 = vld [vmem:[%s16] sm:$0xff]
  %v1031 = vld [vmem:[%s16 + $0x8] sm:$0xff]
  %v1032 = vld [vmem:[%s16 + $0x10] sm:$0xff]
  %v1033 = vld [vmem:[%s16 + $0x18] sm:$0xff]
  %v1034 = vld [vmem:[%s18] sm:$0x1]
  %v1036 = vperm.slane %v1034, 0
  %1038 = vmatpush.msra.mxu0 0.0
  %1039 = vmatpush.msra.mxu0 0.0
  %1040 = vmatpush.msra.mxu0 0.0
  %1041 = vmatpush.msra.mxu0 0.0
  %1042 = vmatpush.msra.mxu0 0.0
  %1043 = vmatpush.msra.mxu0 0.0
  %1044 = vmatpush.msra.mxu0 0.0
  %1045 = vmatpush.msra.mxu0 0.0
  %1046 = vmatpush.msra.mxu0 0.0
  %1047 = vmatpush.msra.mxu0 0.0
  %1048 = vmatpush.msra.mxu0 0.0
  %1049 = vmatpush.msra.mxu0 0.0
  %1050 = vmatpush.msra.mxu0 %v1033
  %1051 = vmatpush.msra.mxu0 %v1032
  %1052 = vmatpush.msra.mxu0 %v1031
  %1053 = vmatpush.msra.mxu0 %v1030
  %1054 = vmatmul.f32.gmra.mxu0 %v865
  %v1055 = vpop.f32.mrf.mxu0
  %v1056 = vadd.f32 %v1036, %v1055
  %1057 = vdwg.mxu0
  %v1058 = vadd.f32 %v1029, %v1056
  %v1059 = vxor.u32 %v1058, 2147483648
  %v1060 = vmul.f32 %v1059, 1.442695
  %v1061 = vpow.pop %v1060
  %v1062 = vadd.f32 %v1061, 1.0
  %v1063 = vrcp.pop %v1062
  %v1064 = vmul.f32 %v1062, %v1063
  %v1065 = vsub.f32 1.0, %v1064
  %v1066 = vmul.f32 %v1063, %v1065
  %v1067 = vadd.f32 %v1063, %v1066
  %vm1068 = vweird.f32 %v1062
  %vm1069 = vweird.f32 %v1063
  %vm1070 = vmor %vm1068, %vm1069
  %v1071 = vsel %vm1070, %v1063, %v1067
  %v1072 = vand.u32 2147483647, %v1062
  %vm1073 = vcmp.eq.f32.partialorder %v1072, 8.507059e+37
  %v1074 = vand.u32 %v1062, 2147483648
  %v1075 = vor.u32 1.1754944e-38, %v1074
  %v1076 = vsel %vm1073, %v1075, %v1071
  %v1077 = vmul.f32 1.0, %v1076
  %1079 = vrot.lane.b32.xlu0 %v1056, 64
  %v1080 = vpop.permute.xlu0 %1079
  %v1082 = vmul.f32 %v1077, %v1080
  %1084 = vrot.lane.b32.xlu0 %v1082, 64
  %v1085 = vpop.permute.xlu0 %1084
  %v1087 = vadd.f32 %v1029, %v1085
  %v1088 = vtanh.pop %v1087
  %v1089 = vsub.f32 1.0, %v1077
  %1091 = vrot.lane.b32.xlu0 %v1088, 96
  %v1092 = vpop.permute.xlu0 %1091
  %v1094 = vmul.f32 %v1089, %v1092
  %1095 = vrot.lane.b32.xlu0 %v729, 32
  %v1096 = vpop.permute.xlu0 %1095
  %v1098 = vmul.f32 %v1077, %v1096
  %v1099 = vadd.f32 %v1094, %v1098
  %1101 = vrot.lane.b32.xlu0 %v1099, 96
  %v1102 = vpop.permute.xlu0 %1101
  %1104 = vst.msk [vmem:[#allocation3] sm:$0x3] %vm187, %v1102
  %1105 = vst.msk [vmem:[#allocation4] sm:$0x3] %vm187, %v1001
  %v1106 = vld [vmem:[%s10] sm:$0xff]
  %v1107 = vld [vmem:[%s10 + $0x8] sm:$0xff]
  %v1108 = vld [vmem:[%s10 + $0x10] sm:$0xff]
  %v1109 = vld [vmem:[%s10 + $0x18] sm:$0xff]
  %v1110 = vsel %vm120, %v1102, 0
  %1112 = vmatpush.msra.mxu0 0.0
  %1113 = vmatpush.msra.mxu0 0.0
  %1114 = vmatpush.msra.mxu0 0.0
  %1115 = vmatpush.msra.mxu0 0.0
  %1116 = vmatpush.msra.mxu0 0.0
  %1117 = vmatpush.msra.mxu0 0.0
  %1118 = vmatpush.msra.mxu0 0.0
  %1119 = vmatpush.msra.mxu0 0.0
  %1120 = vmatpush.msra.mxu0 0.0
  %1121 = vmatpush.msra.mxu0 0.0
  %1122 = vmatpush.msra.mxu0 0.0
  %1123 = vmatpush.msra.mxu0 0.0
  %1124 = vmatpush.msra.mxu0 %v1109
  %1125 = vmatpush.msra.mxu0 %v1108
  %1126 = vmatpush.msra.mxu0 %v1107
  %1127 = vmatpush.msra.mxu0 %v1106
  %1128 = vmatmul.f32.gmra.mxu0 %v1110
  %v1129 = vpop.f32.mrf.mxu0
  %v1130 = vadd.f32 0.0, %v1129
  %1131 = vdwg.mxu0
  %v1133 = vsel %vm894, %v1130, 0
  %1135 = vmatpush.msra.mxu0 0.0
  %1136 = vmatpush.msra.mxu0 0.0
  %1137 = vmatpush.msra.mxu0 0.0
  %1138 = vmatpush.msra.mxu0 0.0
  %1139 = vmatpush.msra.mxu0 0.0
  %1140 = vmatpush.msra.mxu0 0.0
  %1141 = vmatpush.msra.mxu0 0.0
  %1142 = vmatpush.msra.mxu0 0.0
  %1143 = vmatpush.msra.mxu0 0.0
  %1144 = vmatpush.msra.mxu0 0.0
  %1145 = vmatpush.msra.mxu0 0.0
  %1146 = vmatpush.msra.mxu0 0.0
  %1147 = vmatpush.msra.mxu0 0.0
  %1148 = vmatpush.msra.mxu0 0.0
  %1149 = vmatpush.msra.mxu0 0.0
  %1150 = vmatpush.msra.mxu0 %v1133
  %1151 = vmatmul.f32.gmra.mxu0 %v889
  %v1152 = vpop.f32.mrf.mxu0
  %v1153 = vadd.f32 0.0, %v1152
  %1154 = vmatmul.f32.gmra.mxu0 %v892
  %v1155 = vpop.f32.mrf.mxu0
  %v1156 = vadd.f32 0.0, %v1155
  %1157 = vdwg.mxu0
  %v1158 = vadd.f32 %v762, %v1153
  %v1159 = vadd.f32 %v765, %v1156
  %v1160 = vtanh.pop %v1158
  %v1161 = vtanh.pop %v1159
  %v1163 = vsel %vm120, %v1160, 0
  %v1166 = vsel %vm120, %v1161, 0
  %1168 = vmatpush.msra.mxu0 0.0
  %1169 = vmatpush.msra.mxu0 0.0
  %1170 = vmatpush.msra.mxu0 0.0
  %1171 = vmatpush.msra.mxu0 0.0
  %1172 = vmatpush.msra.mxu0 0.0
  %1173 = vmatpush.msra.mxu0 0.0
  %1174 = vmatpush.msra.mxu0 0.0
  %1175 = vmatpush.msra.mxu0 0.0
  %1176 = vmatpush.msra.mxu0 0.0
  %1177 = vmatpush.msra.mxu0 0.0
  %1178 = vmatpush.msra.mxu0 0.0
  %1179 = vmatpush.msra.mxu0 0.0
  %1180 = vmatpush.msra.mxu0 %v838
  %1181 = vmatpush.msra.mxu0 %v837
  %1182 = vmatpush.msra.mxu0 %v836
  %1183 = vmatpush.msra.mxu0 %v835
  %1184 = vmatmul.f32.gmra.mxu0 %v1163
  %v1185 = vpop.f32.mrf.mxu0
  %v1186 = vadd.f32 0.0, %v1185
  %1187 = vmatmul.f32.gmra.mxu0 %v1166
  %v1188 = vpop.f32.mrf.mxu0
  %v1189 = vadd.f32 0.0, %v1188
  %1190 = vdwg.mxu0
  %v1191 = vsub.f32 %v1186, %v856
  %v1192 = vsub.f32 %v1189, %v856
  %v1193 = vmul.f32 %v1191, 1.442695
  %v1194 = vpow.pop %v1193
  %v1195 = vmul.f32 %v1192, 1.442695
  %v1196 = vpow.pop %v1195
  %1198 = vset.pattern.permute.xlu0 0
  %1199 = vperm.xlu0 %1198, %v1194
  %v1200 = vpop.permute.xlu0 %1199
  %1203 = vset.pattern.permute.xlu0 0
  %1204 = vperm.xlu0 %1203, %v1196
  %v1205 = vpop.permute.xlu0 %1204
  %v1207 = vmul.f32 %v1200, %v767
  %v1208 = vmul.f32 %v1205, %v768
  %1209 = vmatpush.msra.mxu0 0.0
  %1210 = vmatpush.msra.mxu0 0.0
  %1211 = vmatpush.msra.mxu0 0.0
  %1212 = vmatpush.msra.mxu0 0.0
  %1213 = vmatpush.msra.mxu0 0.0
  %1214 = vmatpush.msra.mxu0 0.0
  %1215 = vmatpush.msra.mxu0 0.0
  %1216 = vmatpush.msra.mxu0 0.0
  %1217 = vmatpush.msra.mxu0 0.0
  %1218 = vmatpush.msra.mxu0 0.0
  %1219 = vmatpush.msra.mxu0 0.0
  %1220 = vmatpush.msra.mxu0 0.0
  %1221 = vmatpush.msra.mxu0 0.0
  %1222 = vmatpush.msra.mxu0 0.0
  %1223 = vmatpush.msra.mxu0 %v1208
  %1224 = vmatpush.msra.mxu0 %v1207
  %1225 = vmatmul.f32.gmra.mxu0 %v973
  %v1226 = vpop.f32.mrf.mxu0
  %v1227 = vadd.f32 0.0, %v1226
  %1228 = vdwg.mxu0
  %v1229 = vrcp.pop %v1227
  %1231 = vset.pattern.permute.xlu0 32
  %1232 = vperm.xlu0 %1231, %v1229
  %v1233 = vpop.permute.xlu0 %1232
  %v1235 = vmul.f32 %v1227, %v1233
  %v1236 = vld [vmem:[%s15] sm:$0xff]
  %v1237 = vld [vmem:[%s15 + $0x8] sm:$0xff]
  %v1238 = vld [vmem:[%s15 + $0x10] sm:$0xff]
  %v1239 = vld [vmem:[%s15 + $0x18] sm:$0xff]
  %v1241 = vsel %vm120, %v1235, 0
  %1243 = vmatpush.msra.mxu0 0.0
  %1244 = vmatpush.msra.mxu0 0.0
  %1245 = vmatpush.msra.mxu0 0.0
  %1246 = vmatpush.msra.mxu0 0.0
  %1247 = vmatpush.msra.mxu0 0.0
  %1248 = vmatpush.msra.mxu0 0.0
  %1249 = vmatpush.msra.mxu0 0.0
  %1250 = vmatpush.msra.mxu0 0.0
  %1251 = vmatpush.msra.mxu0 0.0
  %1252 = vmatpush.msra.mxu0 0.0
  %1253 = vmatpush.msra.mxu0 0.0
  %1254 = vmatpush.msra.mxu0 0.0
  %1255 = vmatpush.msra.mxu0 %v1239
  %1256 = vmatpush.msra.mxu0 %v1238
  %1257 = vmatpush.msra.mxu0 %v1237
  %1258 = vmatpush.msra.mxu0 %v1236
  %1259 = vmatmul.f32.gmra.mxu0 %v1241
  %v1260 = vpop.f32.mrf.mxu0
  %v1261 = vadd.f32 0.0, %v1260
  %1262 = vdwg.mxu0
  %v1264 = vrot.slane %v1261, 6
  %v1266 = vadd.f32 %v801, %v1264
  %v1267 = vld [vmem:[%s16] sm:$0xff]
  %v1268 = vld [vmem:[%s16 + $0x8] sm:$0xff]
  %v1269 = vld [vmem:[%s16 + $0x10] sm:$0xff]
  %v1270 = vld [vmem:[%s16 + $0x18] sm:$0xff]
  %v1271 = vld [vmem:[%s18] sm:$0x1]
  %v1273 = vperm.slane %v1271, 0
  %1275 = vmatpush.msra.mxu0 0.0
  %1276 = vmatpush.msra.mxu0 0.0
  %1277 = vmatpush.msra.mxu0 0.0
  %1278 = vmatpush.msra.mxu0 0.0
  %1279 = vmatpush.msra.mxu0 0.0
  %1280 = vmatpush.msra.mxu0 0.0
  %1281 = vmatpush.msra.mxu0 0.0
  %1282 = vmatpush.msra.mxu0 0.0
  %1283 = vmatpush.msra.mxu0 0.0
  %1284 = vmatpush.msra.mxu0 0.0
  %1285 = vmatpush.msra.mxu0 0.0
  %1286 = vmatpush.msra.mxu0 0.0
  %1287 = vmatpush.msra.mxu0 %v1270
  %1288 = vmatpush.msra.mxu0 %v1269
  %1289 = vmatpush.msra.mxu0 %v1268
  %1290 = vmatpush.msra.mxu0 %v1267
  %1291 = vmatmul.f32.gmra.mxu0 %v1110
  %v1292 = vpop.f32.mrf.mxu0
  %v1293 = vadd.f32 %v1273, %v1292
  %1294 = vdwg.mxu0
  %v1296 = vrot.slane %v1293, 6
  %v1298 = vadd.f32 %v1266, %v1296
  %v1299 = vxor.u32 %v1298, 2147483648
  %v1300 = vmul.f32 %v1299, 1.442695
  %v1301 = vpow.pop %v1300
  %v1302 = vadd.f32 %v1301, 1.0
  %v1303 = vrcp.pop %v1302
  %v1304 = vmul.f32 %v1302, %v1303
  %v1305 = vsub.f32 1.0, %v1304
  %v1306 = vmul.f32 %v1303, %v1305
  %v1307 = vadd.f32 %v1303, %v1306
  %vm1308 = vweird.f32 %v1302
  %vm1309 = vweird.f32 %v1303
  %vm1310 = vmor %vm1308, %vm1309
  %v1311 = vsel %vm1310, %v1303, %v1307
  %v1312 = vand.u32 2147483647, %v1302
  %vm1313 = vcmp.eq.f32.partialorder %v1312, 8.507059e+37
  %v1314 = vand.u32 %v1302, 2147483648
  %v1315 = vor.u32 1.1754944e-38, %v1314
  %v1316 = vsel %vm1313, %v1315, %v1311
  %v1317 = vmul.f32 1.0, %v1316
  %1318 = vrot.lane.b32.xlu0 %v1296, 64
  %v1319 = vpop.permute.xlu0 %1318
  %v1321 = vmul.f32 %v1317, %v1319
  %1323 = vrot.lane.b32.xlu0 %v1321, 64
  %v1324 = vpop.permute.xlu0 %1323
  %v1326 = vadd.f32 %v1266, %v1324
  %v1327 = vtanh.pop %v1326
  %v1328 = vsub.f32 1.0, %v1317
  %1330 = vrot.lane.b32.xlu0 %v1327, 96
  %v1331 = vpop.permute.xlu0 %1330
  %v1333 = vmul.f32 %v1328, %v1331
  %v1334 = vrot.slane %v1099, 6
  %v1336 = vmul.f32 %v1317, %v1334
  %v1337 = vadd.f32 %v1333, %v1336
  %1339 = vrot.lane.b32.xlu0 %v1337, 96
  %v1340 = vpop.permute.xlu0 %1339
  %1342 = vst.msk [vmem:[#allocation3] sm:$0xc] %vm258, %v1340
  %1343 = vst.msk [vmem:[#allocation4 + $0x2] sm:$0x3] %vm187, %v1235
  %v1344 = vld [vmem:[%s10] sm:$0xff]
  %v1345 = vld [vmem:[%s10 + $0x8] sm:$0xff]
  %v1346 = vld [vmem:[%s10 + $0x10] sm:$0xff]
  %v1347 = vld [vmem:[%s10 + $0x18] sm:$0xff]
  %v1348 = vrot.slane %v1337, 2
  %1349 = vrot.lane.b32.xlu0 %v1348, 96
  %v1350 = vpop.permute.xlu0 %1349
  %v1351 = vsel %vm120, %v1350, 0
  %1353 = vmatpush.msra.mxu0 0.0
  %1354 = vmatpush.msra.mxu0 0.0
  %1355 = vmatpush.msra.mxu0 0.0
  %1356 = vmatpush.msra.mxu0 0.0
  %1357 = vmatpush.msra.mxu0 0.0
  %1358 = vmatpush.msra.mxu0 0.0
  %1359 = vmatpush.msra.mxu0 0.0
  %1360 = vmatpush.msra.mxu0 0.0
  %1361 = vmatpush.msra.mxu0 0.0
  %1362 = vmatpush.msra.mxu0 0.0
  %1363 = vmatpush.msra.mxu0 0.0
  %1364 = vmatpush.msra.mxu0 0.0
  %1365 = vmatpush.msra.mxu0 %v1347
  %1366 = vmatpush.msra.mxu0 %v1346
  %1367 = vmatpush.msra.mxu0 %v1345
  %1368 = vmatpush.msra.mxu0 %v1344
  %1369 = vmatmul.f32.gmra.mxu0 %v1351
  %v1370 = vpop.f32.mrf.mxu0
  %v1371 = vadd.f32 0.0, %v1370
  %1372 = vdwg.mxu0
  %v1374 = vsel %vm894, %v1371, 0
  %1376 = vmatpush.msra.mxu0 0.0
  %1377 = vmatpush.msra.mxu0 0.0
  %1378 = vmatpush.msra.mxu0 0.0
  %1379 = vmatpush.msra.mxu0 0.0
  %1380 = vmatpush.msra.mxu0 0.0
  %1381 = vmatpush.msra.mxu0 0.0
  %1382 = vmatpush.msra.mxu0 0.0
  %1383 = vmatpush.msra.mxu0 0.0
  %1384 = vmatpush.msra.mxu0 0.0
  %1385 = vmatpush.msra.mxu0 0.0
  %1386 = vmatpush.msra.mxu0 0.0
  %1387 = vmatpush.msra.mxu0 0.0
  %1388 = vmatpush.msra.mxu0 0.0
  %1389 = vmatpush.msra.mxu0 0.0
  %1390 = vmatpush.msra.mxu0 0.0
  %1391 = vmatpush.msra.mxu0 %v1374
  %1392 = vmatmul.f32.gmra.mxu0 %v889
  %v1393 = vpop.f32.mrf.mxu0
  %v1394 = vadd.f32 0.0, %v1393
  %1395 = vmatmul.f32.gmra.mxu0 %v892
  %v1396 = vpop.f32.mrf.mxu0
  %v1397 = vadd.f32 0.0, %v1396
  %1398 = vdwg.mxu0
  %v1399 = vadd.f32 %v762, %v1394
  %v1400 = vadd.f32 %v765, %v1397
  %v1401 = vtanh.pop %v1399
  %v1402 = vtanh.pop %v1400
  %v1404 = vsel %vm120, %v1401, 0
  %v1407 = vsel %vm120, %v1402, 0
  %1409 = vmatpush.msra.mxu0 0.0
  %1410 = vmatpush.msra.mxu0 0.0
  %1411 = vmatpush.msra.mxu0 0.0
  %1412 = vmatpush.msra.mxu0 0.0
  %1413 = vmatpush.msra.mxu0 0.0
  %1414 = vmatpush.msra.mxu0 0.0
  %1415 = vmatpush.msra.mxu0 0.0
  %1416 = vmatpush.msra.mxu0 0.0
  %1417 = vmatpush.msra.mxu0 0.0
  %1418 = vmatpush.msra.mxu0 0.0
  %1419 = vmatpush.msra.mxu0 0.0
  %1420 = vmatpush.msra.mxu0 0.0
  %1421 = vmatpush.msra.mxu0 %v838
  %1422 = vmatpush.msra.mxu0 %v837
  %1423 = vmatpush.msra.mxu0 %v836
  %1424 = vmatpush.msra.mxu0 %v835
  %1425 = vmatmul.f32.gmra.mxu0 %v1404
  %v1426 = vpop.f32.mrf.mxu0
  %v1427 = vadd.f32 0.0, %v1426
  %1428 = vmatmul.f32.gmra.mxu0 %v1407
  %v1429 = vpop.f32.mrf.mxu0
  %v1430 = vadd.f32 0.0, %v1429
  %1431 = vdwg.mxu0
  %v1432 = vsub.f32 %v1427, %v856
  %v1433 = vsub.f32 %v1430, %v856
  %v1434 = vmul.f32 %v1432, 1.442695
  %v1435 = vpow.pop %v1434
  %v1436 = vmul.f32 %v1433, 1.442695
  %v1437 = vpow.pop %v1436
  %1439 = vset.pattern.permute.xlu0 0
  %1440 = vperm.xlu0 %1439, %v1435
  %v1441 = vpop.permute.xlu0 %1440
  %1444 = vset.pattern.permute.xlu0 0
  %1445 = vperm.xlu0 %1444, %v1437
  %v1446 = vpop.permute.xlu0 %1445
  %v1448 = vmul.f32 %v1441, %v767
  %v1449 = vmul.f32 %v1446, %v768
  %1450 = vmatpush.msra.mxu0 0.0
  %1451 = vmatpush.msra.mxu0 0.0
  %1452 = vmatpush.msra.mxu0 0.0
  %1453 = vmatpush.msra.mxu0 0.0
  %1454 = vmatpush.msra.mxu0 0.0
  %1455 = vmatpush.msra.mxu0 0.0
  %1456 = vmatpush.msra.mxu0 0.0
  %1457 = vmatpush.msra.mxu0 0.0
  %1458 = vmatpush.msra.mxu0 0.0
  %1459 = vmatpush.msra.mxu0 0.0
  %1460 = vmatpush.msra.mxu0 0.0
  %1461 = vmatpush.msra.mxu0 0.0
  %1462 = vmatpush.msra.mxu0 0.0
  %1463 = vmatpush.msra.mxu0 0.0
  %1464 = vmatpush.msra.mxu0 %v1449
  %1465 = vmatpush.msra.mxu0 %v1448
  %1466 = vmatmul.f32.gmra.mxu0 %v973
  %v1467 = vpop.f32.mrf.mxu0
  %v1468 = vadd.f32 0.0, %v1467
  %1469 = vdwg.mxu0
  %v1470 = vrcp.pop %v1468
  %1472 = vset.pattern.permute.xlu0 32
  %1473 = vperm.xlu0 %1472, %v1470
  %v1474 = vpop.permute.xlu0 %1473
  %v1476 = vmul.f32 %v1468, %v1474
  %v1477 = vld [vmem:[%s15] sm:$0xff]
  %v1478 = vld [vmem:[%s15 + $0x8] sm:$0xff]
  %v1479 = vld [vmem:[%s15 + $0x10] sm:$0xff]
  %v1480 = vld [vmem:[%s15 + $0x18] sm:$0xff]
  %v1482 = vsel %vm120, %v1476, 0
  %1484 = vmatpush.msra.mxu0 0.0
  %1485 = vmatpush.msra.mxu0 0.0
  %1486 = vmatpush.msra.mxu0 0.0
  %1487 = vmatpush.msra.mxu0 0.0
  %1488 = vmatpush.msra.mxu0 0.0
  %1489 = vmatpush.msra.mxu0 0.0
  %1490 = vmatpush.msra.mxu0 0.0
  %1491 = vmatpush.msra.mxu0 0.0
  %1492 = vmatpush.msra.mxu0 0.0
  %1493 = vmatpush.msra.mxu0 0.0
  %1494 = vmatpush.msra.mxu0 0.0
  %1495 = vmatpush.msra.mxu0 0.0
  %1496 = vmatpush.msra.mxu0 %v1480
  %1497 = vmatpush.msra.mxu0 %v1479
  %1498 = vmatpush.msra.mxu0 %v1478
  %1499 = vmatpush.msra.mxu0 %v1477
  %1500 = vmatmul.f32.gmra.mxu0 %v1482
  %v1501 = vpop.f32.mrf.mxu0
  %v1502 = vadd.f32 0.0, %v1501
  %1503 = vdwg.mxu0
  %v1505 = vrot.slane %v1502, 4
  %v1507 = vadd.f32 %v801, %v1505
  %v1508 = vld [vmem:[%s16] sm:$0xff]
  %v1509 = vld [vmem:[%s16 + $0x8] sm:$0xff]
  %v1510 = vld [vmem:[%s16 + $0x10] sm:$0xff]
  %v1511 = vld [vmem:[%s16 + $0x18] sm:$0xff]
  %v1512 = vld [vmem:[%s18] sm:$0x1]
  %v1514 = vperm.slane %v1512, 0
  %1516 = vmatpush.msra.mxu0 0.0
  %1517 = vmatpush.msra.mxu0 0.0
  %1518 = vmatpush.msra.mxu0 0.0
  %1519 = vmatpush.msra.mxu0 0.0
  %1520 = vmatpush.msra.mxu0 0.0
  %1521 = vmatpush.msra.mxu0 0.0
  %1522 = vmatpush.msra.mxu0 0.0
  %1523 = vmatpush.msra.mxu0 0.0
  %1524 = vmatpush.msra.mxu0 0.0
  %1525 = vmatpush.msra.mxu0 0.0
  %1526 = vmatpush.msra.mxu0 0.0
  %1527 = vmatpush.msra.mxu0 0.0
  %1528 = vmatpush.msra.mxu0 %v1511
  %1529 = vmatpush.msra.mxu0 %v1510
  %1530 = vmatpush.msra.mxu0 %v1509
  %1531 = vmatpush.msra.mxu0 %v1508
  %1532 = vmatmul.f32.gmra.mxu0 %v1351
  %v1533 = vpop.f32.mrf.mxu0
  %v1534 = vadd.f32 %v1514, %v1533
  %1535 = vdwg.mxu0
  %v1537 = vrot.slane %v1534, 4
  %v1539 = vadd.f32 %v1507, %v1537
  %v1540 = vxor.u32 %v1539, 2147483648
  %v1541 = vmul.f32 %v1540, 1.442695
  %v1542 = vpow.pop %v1541
  %v1543 = vadd.f32 %v1542, 1.0
  %v1544 = vrcp.pop %v1543
  %v1545 = vmul.f32 %v1543, %v1544
  %v1546 = vsub.f32 1.0, %v1545
  %v1547 = vmul.f32 %v1544, %v1546
  %v1548 = vadd.f32 %v1544, %v1547
  %vm1549 = vweird.f32 %v1543
  %vm1550 = vweird.f32 %v1544
  %vm1551 = vmor %vm1549, %vm1550
  %v1552 = vsel %vm1551, %v1544, %v1548
  %v1553 = vand.u32 2147483647, %v1543
  %vm1554 = vcmp.eq.f32.partialorder %v1553, 8.507059e+37
  %v1555 = vand.u32 %v1543, 2147483648
  %v1556 = vor.u32 1.1754944e-38, %v1555
  %v1557 = vsel %vm1554, %v1556, %v1552
  %v1558 = vmul.f32 1.0, %v1557
  %1559 = vrot.lane.b32.xlu0 %v1537, 64
  %v1560 = vpop.permute.xlu0 %1559
  %v1562 = vmul.f32 %v1558, %v1560
  %1564 = vrot.lane.b32.xlu0 %v1562, 64
  %v1565 = vpop.permute.xlu0 %1564
  %v1567 = vadd.f32 %v1507, %v1565
  %v1568 = vtanh.pop %v1567
  %v1569 = vsub.f32 1.0, %v1558
  %1571 = vrot.lane.b32.xlu0 %v1568, 96
  %v1572 = vpop.permute.xlu0 %1571
  %v1574 = vmul.f32 %v1569, %v1572
  %v1575 = vrot.slane %v1337, 6
  %v1577 = vmul.f32 %v1558, %v1575
  %v1578 = vadd.f32 %v1574, %v1577
  %1580 = vrot.lane.b32.xlu0 %v1578, 96
  %v1581 = vpop.permute.xlu0 %1580
  %1583 = vst.msk [vmem:[#allocation3] sm:$0x30] %vm332, %v1581
  %1584 = vst.msk [vmem:[#allocation4 + $0x4] sm:$0x3] %vm187, %v1476
  %v1585 = vld [vmem:[%s10] sm:$0xff]
  %v1586 = vld [vmem:[%s10 + $0x8] sm:$0xff]
  %v1587 = vld [vmem:[%s10 + $0x10] sm:$0xff]
  %v1588 = vld [vmem:[%s10 + $0x18] sm:$0xff]
  %v1589 = vrot.slane %v1578, 4
  %1590 = vrot.lane.b32.xlu0 %v1589, 96
  %v1591 = vpop.permute.xlu0 %1590
  %v1592 = vsel %vm120, %v1591, 0
  %1594 = vmatpush.msra.mxu0 0.0
  %1595 = vmatpush.msra.mxu0 0.0
  %1596 = vmatpush.msra.mxu0 0.0
  %1597 = vmatpush.msra.mxu0 0.0
  %1598 = vmatpush.msra.mxu0 0.0
  %1599 = vmatpush.msra.mxu0 0.0
  %1600 = vmatpush.msra.mxu0 0.0
  %1601 = vmatpush.msra.mxu0 0.0
  %1602 = vmatpush.msra.mxu0 0.0
  %1603 = vmatpush.msra.mxu0 0.0
  %1604 = vmatpush.msra.mxu0 0.0
  %1605 = vmatpush.msra.mxu0 0.0
  %1606 = vmatpush.msra.mxu0 %v1588
  %1607 = vmatpush.msra.mxu0 %v1587
  %1608 = vmatpush.msra.mxu0 %v1586
  %1609 = vmatpush.msra.mxu0 %v1585
  %1610 = vmatmul.f32.gmra.mxu0 %v1592
  %v1611 = vpop.f32.mrf.mxu0
  %v1612 = vadd.f32 0.0, %v1611
  %1613 = vdwg.mxu0
  %v1615 = vsel %vm894, %v1612, 0
  %1617 = vmatpush.msra.mxu0 0.0
  %1618 = vmatpush.msra.mxu0 0.0
  %1619 = vmatpush.msra.mxu0 0.0
  %1620 = vmatpush.msra.mxu0 0.0
  %1621 = vmatpush.msra.mxu0 0.0
  %1622 = vmatpush.msra.mxu0 0.0
  %1623 = vmatpush.msra.mxu0 0.0
  %1624 = vmatpush.msra.mxu0 0.0
  %1625 = vmatpush.msra.mxu0 0.0
  %1626 = vmatpush.msra.mxu0 0.0
  %1627 = vmatpush.msra.mxu0 0.0
  %1628 = vmatpush.msra.mxu0 0.0
  %1629 = vmatpush.msra.mxu0 0.0
  %1630 = vmatpush.msra.mxu0 0.0
  %1631 = vmatpush.msra.mxu0 0.0
  %1632 = vmatpush.msra.mxu0 %v1615
  %1633 = vmatmul.f32.gmra.mxu0 %v889
  %v1634 = vpop.f32.mrf.mxu0
  %v1635 = vadd.f32 0.0, %v1634
  %1636 = vmatmul.f32.gmra.mxu0 %v892
  %v1637 = vpop.f32.mrf.mxu0
  %v1638 = vadd.f32 0.0, %v1637
  %1639 = vdwg.mxu0
  %v1640 = vadd.f32 %v762, %v1635
  %v1641 = vadd.f32 %v765, %v1638
  %v1642 = vtanh.pop %v1640
  %v1643 = vtanh.pop %v1641
  %v1645 = vsel %vm120, %v1642, 0
  %v1648 = vsel %vm120, %v1643, 0
  %1650 = vmatpush.msra.mxu0 0.0
  %1651 = vmatpush.msra.mxu0 0.0
  %1652 = vmatpush.msra.mxu0 0.0
  %1653 = vmatpush.msra.mxu0 0.0
  %1654 = vmatpush.msra.mxu0 0.0
  %1655 = vmatpush.msra.mxu0 0.0
  %1656 = vmatpush.msra.mxu0 0.0
  %1657 = vmatpush.msra.mxu0 0.0
  %1658 = vmatpush.msra.mxu0 0.0
  %1659 = vmatpush.msra.mxu0 0.0
  %1660 = vmatpush.msra.mxu0 0.0
  %1661 = vmatpush.msra.mxu0 0.0
  %1662 = vmatpush.msra.mxu0 %v838
  %1663 = vmatpush.msra.mxu0 %v837
  %1664 = vmatpush.msra.mxu0 %v836
  %1665 = vmatpush.msra.mxu0 %v835
  %1666 = vmatmul.f32.gmra.mxu0 %v1645
  %v1667 = vpop.f32.mrf.mxu0
  %v1668 = vadd.f32 0.0, %v1667
  %1669 = vmatmul.f32.gmra.mxu0 %v1648
  %v1670 = vpop.f32.mrf.mxu0
  %v1671 = vadd.f32 0.0, %v1670
  %1672 = vdwg.mxu0
  %v1673 = vsub.f32 %v1668, %v856
  %v1674 = vsub.f32 %v1671, %v856
  %v1675 = vmul.f32 %v1673, 1.442695
  %v1676 = vpow.pop %v1675
  %v1677 = vmul.f32 %v1674, 1.442695
  %v1678 = vpow.pop %v1677
  %1680 = vset.pattern.permute.xlu0 0
  %1681 = vperm.xlu0 %1680, %v1676
  %v1682 = vpop.permute.xlu0 %1681
  %1685 = vset.pattern.permute.xlu0 0
  %1686 = vperm.xlu0 %1685, %v1678
  %v1687 = vpop.permute.xlu0 %1686
  %v1689 = vmul.f32 %v1682, %v767
  %v1690 = vmul.f32 %v1687, %v768
  %1691 = vmatpush.msra.mxu0 0.0
  %1692 = vmatpush.msra.mxu0 0.0
  %1693 = vmatpush.msra.mxu0 0.0
  %1694 = vmatpush.msra.mxu0 0.0
  %1695 = vmatpush.msra.mxu0 0.0
  %1696 = vmatpush.msra.mxu0 0.0
  %1697 = vmatpush.msra.mxu0 0.0
  %1698 = vmatpush.msra.mxu0 0.0
  %1699 = vmatpush.msra.mxu0 0.0
  %1700 = vmatpush.msra.mxu0 0.0
  %1701 = vmatpush.msra.mxu0 0.0
  %1702 = vmatpush.msra.mxu0 0.0
  %1703 = vmatpush.msra.mxu0 0.0
  %1704 = vmatpush.msra.mxu0 0.0
  %1705 = vmatpush.msra.mxu0 %v1690
  %1706 = vmatpush.msra.mxu0 %v1689
  %1707 = vmatmul.f32.gmra.mxu0 %v973
  %v1708 = vpop.f32.mrf.mxu0
  %v1709 = vadd.f32 0.0, %v1708
  %1710 = vdwg.mxu0
  %v1711 = vrcp.pop %v1709
  %1713 = vset.pattern.permute.xlu0 32
  %1714 = vperm.xlu0 %1713, %v1711
  %v1715 = vpop.permute.xlu0 %1714
  %v1717 = vmul.f32 %v1709, %v1715
  %v1718 = vld [vmem:[%s15] sm:$0xff]
  %v1719 = vld [vmem:[%s15 + $0x8] sm:$0xff]
  %v1720 = vld [vmem:[%s15 + $0x10] sm:$0xff]
  %v1721 = vld [vmem:[%s15 + $0x18] sm:$0xff]
  %v1723 = vsel %vm120, %v1717, 0
  %1725 = vmatpush.msra.mxu0 0.0
  %1726 = vmatpush.msra.mxu0 0.0
  %1727 = vmatpush.msra.mxu0 0.0
  %1728 = vmatpush.msra.mxu0 0.0
  %1729 = vmatpush.msra.mxu0 0.0
  %1730 = vmatpush.msra.mxu0 0.0
  %1731 = vmatpush.msra.mxu0 0.0
  %1732 = vmatpush.msra.mxu0 0.0
  %1733 = vmatpush.msra.mxu0 0.0
  %1734 = vmatpush.msra.mxu0 0.0
  %1735 = vmatpush.msra.mxu0 0.0
  %1736 = vmatpush.msra.mxu0 0.0
  %1737 = vmatpush.msra.mxu0 %v1721
  %1738 = vmatpush.msra.mxu0 %v1720
  %1739 = vmatpush.msra.mxu0 %v1719
  %1740 = vmatpush.msra.mxu0 %v1718
  %1741 = vmatmul.f32.gmra.mxu0 %v1723
  %v1742 = vpop.f32.mrf.mxu0
  %v1743 = vadd.f32 0.0, %v1742
  %1744 = vdwg.mxu0
  %v1746 = vrot.slane %v1743, 2
  %v1748 = vadd.f32 %v801, %v1746
  %v1749 = vld [vmem:[%s16] sm:$0xff]
  %v1750 = vld [vmem:[%s16 + $0x8] sm:$0xff]
  %v1751 = vld [vmem:[%s16 + $0x10] sm:$0xff]
  %v1752 = vld [vmem:[%s16 + $0x18] sm:$0xff]
  %v1753 = vld [vmem:[%s18] sm:$0x1]
  %v1755 = vperm.slane %v1753, 0
  %1757 = vmatpush.msra.mxu0 0.0
  %1758 = vmatpush.msra.mxu0 0.0
  %1759 = vmatpush.msra.mxu0 0.0
  %1760 = vmatpush.msra.mxu0 0.0
  %1761 = vmatpush.msra.mxu0 0.0
  %1762 = vmatpush.msra.mxu0 0.0
  %1763 = vmatpush.msra.mxu0 0.0
  %1764 = vmatpush.msra.mxu0 0.0
  %1765 = vmatpush.msra.mxu0 0.0
  %1766 = vmatpush.msra.mxu0 0.0
  %1767 = vmatpush.msra.mxu0 0.0
  %1768 = vmatpush.msra.mxu0 0.0
  %1769 = vmatpush.msra.mxu0 %v1752
  %1770 = vmatpush.msra.mxu0 %v1751
  %1771 = vmatpush.msra.mxu0 %v1750
  %1772 = vmatpush.msra.mxu0 %v1749
  %1773 = vmatmul.f32.gmra.mxu0 %v1592
  %v1774 = vpop.f32.mrf.mxu0
  %v1775 = vadd.f32 %v1755, %v1774
  %1776 = vdwg.mxu0
  %v1778 = vrot.slane %v1775, 2
  %v1780 = vadd.f32 %v1748, %v1778
  %v1781 = vxor.u32 %v1780, 2147483648
  %v1782 = vmul.f32 %v1781, 1.442695
  %v1783 = vpow.pop %v1782
  %v1784 = vadd.f32 %v1783, 1.0
  %v1785 = vrcp.pop %v1784
  %v1786 = vmul.f32 %v1784, %v1785
  %v1787 = vsub.f32 1.0, %v1786
  %v1788 = vmul.f32 %v1785, %v1787
  %v1789 = vadd.f32 %v1785, %v1788
  %vm1790 = vweird.f32 %v1784
  %vm1791 = vweird.f32 %v1785
  %vm1792 = vmor %vm1790, %vm1791
  %v1793 = vsel %vm1792, %v1785, %v1789
  %v1794 = vand.u32 2147483647, %v1784
  %vm1795 = vcmp.eq.f32.partialorder %v1794, 8.507059e+37
  %v1796 = vand.u32 %v1784, 2147483648
  %v1797 = vor.u32 1.1754944e-38, %v1796
  %v1798 = vsel %vm1795, %v1797, %v1793
  %v1799 = vmul.f32 1.0, %v1798
  %1800 = vrot.lane.b32.xlu0 %v1778, 64
  %v1801 = vpop.permute.xlu0 %1800
  %v1803 = vmul.f32 %v1799, %v1801
  %1805 = vrot.lane.b32.xlu0 %v1803, 64
  %v1806 = vpop.permute.xlu0 %1805
  %v1808 = vadd.f32 %v1748, %v1806
  %v1809 = vtanh.pop %v1808
  %v1810 = vsub.f32 1.0, %v1799
  %1812 = vrot.lane.b32.xlu0 %v1809, 96
  %v1813 = vpop.permute.xlu0 %1812
  %v1815 = vmul.f32 %v1810, %v1813
  %v1816 = vrot.slane %v1578, 6
  %v1818 = vmul.f32 %v1799, %v1816
  %v1819 = vadd.f32 %v1815, %v1818
  %1821 = vrot.lane.b32.xlu0 %v1819, 96
  %v1822 = vpop.permute.xlu0 %1821
  %1824 = vst.msk [vmem:[#allocation3] sm:$0xc0] %vm406, %v1822
  %1825 = vst.msk [vmem:[#allocation4 + $0x6] sm:$0x3] %vm187, %v1717
  %v1826 = vld [vmem:[%s10] sm:$0xff]
  %v1827 = vld [vmem:[%s10 + $0x8] sm:$0xff]
  %v1828 = vld [vmem:[%s10 + $0x10] sm:$0xff]
  %v1829 = vld [vmem:[%s10 + $0x18] sm:$0xff]
  %v1830 = vrot.slane %v1819, 6
  %1831 = vrot.lane.b32.xlu0 %v1830, 96
  %v1832 = vpop.permute.xlu0 %1831
  %v1833 = vsel %vm120, %v1832, 0
  %1835 = vmatpush.msra.mxu0 0.0
  %1836 = vmatpush.msra.mxu0 0.0
  %1837 = vmatpush.msra.mxu0 0.0
  %1838 = vmatpush.msra.mxu0 0.0
  %1839 = vmatpush.msra.mxu0 0.0
  %1840 = vmatpush.msra.mxu0 0.0
  %1841 = vmatpush.msra.mxu0 0.0
  %1842 = vmatpush.msra.mxu0 0.0
  %1843 = vmatpush.msra.mxu0 0.0
  %1844 = vmatpush.msra.mxu0 0.0
  %1845 = vmatpush.msra.mxu0 0.0
  %1846 = vmatpush.msra.mxu0 0.0
  %1847 = vmatpush.msra.mxu0 %v1829
  %1848 = vmatpush.msra.mxu0 %v1828
  %1849 = vmatpush.msra.mxu0 %v1827
  %1850 = vmatpush.msra.mxu0 %v1826
  %1851 = vmatmul.f32.gmra.mxu0 %v1833
  %v1852 = vpop.f32.mrf.mxu0
  %v1853 = vadd.f32 0.0, %v1852
  %1854 = vdwg.mxu0
  %v1856 = vsel %vm894, %v1853, 0
  %1858 = vmatpush.msra.mxu0 0.0
  %1859 = vmatpush.msra.mxu0 0.0
  %1860 = vmatpush.msra.mxu0 0.0
  %1861 = vmatpush.msra.mxu0 0.0
  %1862 = vmatpush.msra.mxu0 0.0
  %1863 = vmatpush.msra.mxu0 0.0
  %1864 = vmatpush.msra.mxu0 0.0
  %1865 = vmatpush.msra.mxu0 0.0
  %1866 = vmatpush.msra.mxu0 0.0
  %1867 = vmatpush.msra.mxu0 0.0
  %1868 = vmatpush.msra.mxu0 0.0
  %1869 = vmatpush.msra.mxu0 0.0
  %1870 = vmatpush.msra.mxu0 0.0
  %1871 = vmatpush.msra.mxu0 0.0
  %1872 = vmatpush.msra.mxu0 0.0
  %1873 = vmatpush.msra.mxu0 %v1856
  %1874 = vmatmul.f32.gmra.mxu0 %v889
  %v1875 = vpop.f32.mrf.mxu0
  %v1876 = vadd.f32 0.0, %v1875
  %1877 = vmatmul.f32.gmra.mxu0 %v892
  %v1878 = vpop.f32.mrf.mxu0
  %v1879 = vadd.f32 0.0, %v1878
  %1880 = vdwg.mxu0
  %v1881 = vadd.f32 %v762, %v1876
  %v1882 = vadd.f32 %v765, %v1879
  %v1883 = vtanh.pop %v1881
  %v1884 = vtanh.pop %v1882
  %v1886 = vsel %vm120, %v1883, 0
  %v1889 = vsel %vm120, %v1884, 0
  %1891 = vmatpush.msra.mxu0 0.0
  %1892 = vmatpush.msra.mxu0 0.0
  %1893 = vmatpush.msra.mxu0 0.0
  %1894 = vmatpush.msra.mxu0 0.0
  %1895 = vmatpush.msra.mxu0 0.0
  %1896 = vmatpush.msra.mxu0 0.0
  %1897 = vmatpush.msra.mxu0 0.0
  %1898 = vmatpush.msra.mxu0 0.0
  %1899 = vmatpush.msra.mxu0 0.0
  %1900 = vmatpush.msra.mxu0 0.0
  %1901 = vmatpush.msra.mxu0 0.0
  %1902 = vmatpush.msra.mxu0 0.0
  %1903 = vmatpush.msra.mxu0 %v838
  %1904 = vmatpush.msra.mxu0 %v837
  %1905 = vmatpush.msra.mxu0 %v836
  %1906 = vmatpush.msra.mxu0 %v835
  %1907 = vmatmul.f32.gmra.mxu0 %v1886
  %v1908 = vpop.f32.mrf.mxu0
  %v1909 = vadd.f32 0.0, %v1908
  %1910 = vmatmul.f32.gmra.mxu0 %v1889
  %v1911 = vpop.f32.mrf.mxu0
  %v1912 = vadd.f32 0.0, %v1911
  %1913 = vdwg.mxu0
  %v1914 = vsub.f32 %v1909, %v856
  %v1915 = vsub.f32 %v1912, %v856
  %v1916 = vmul.f32 %v1914, 1.442695
  %v1917 = vpow.pop %v1916
  %v1918 = vmul.f32 %v1915, 1.442695
  %v1919 = vpow.pop %v1918
  %1921 = vset.pattern.permute.xlu0 0
  %1922 = vperm.xlu0 %1921, %v1917
  %v1923 = vpop.permute.xlu0 %1922
  %1926 = vset.pattern.permute.xlu0 0
  %1927 = vperm.xlu0 %1926, %v1919
  %v1928 = vpop.permute.xlu0 %1927
  %v1930 = vmul.f32 %v1923, %v767
  %v1931 = vmul.f32 %v1928, %v768
  %1932 = vmatpush.msra.mxu0 0.0
  %1933 = vmatpush.msra.mxu0 0.0
  %1934 = vmatpush.msra.mxu0 0.0
  %1935 = vmatpush.msra.mxu0 0.0
  %1936 = vmatpush.msra.mxu0 0.0
  %1937 = vmatpush.msra.mxu0 0.0
  %1938 = vmatpush.msra.mxu0 0.0
  %1939 = vmatpush.msra.mxu0 0.0
  %1940 = vmatpush.msra.mxu0 0.0
  %1941 = vmatpush.msra.mxu0 0.0
  %1942 = vmatpush.msra.mxu0 0.0
  %1943 = vmatpush.msra.mxu0 0.0
  %1944 = vmatpush.msra.mxu0 0.0
  %1945 = vmatpush.msra.mxu0 0.0
  %1946 = vmatpush.msra.mxu0 %v1931
  %1947 = vmatpush.msra.mxu0 %v1930
  %1948 = vmatmul.f32.gmra.mxu0 %v973
  %v1949 = vpop.f32.mrf.mxu0
  %v1950 = vadd.f32 0.0, %v1949
  %1951 = vdwg.mxu0
  %v1952 = vrcp.pop %v1950
  %1954 = vset.pattern.permute.xlu0 32
  %1955 = vperm.xlu0 %1954, %v1952
  %v1956 = vpop.permute.xlu0 %1955
  %v1958 = vmul.f32 %v1950, %v1956
  %v1959 = vld [vmem:[%s15] sm:$0xff]
  %v1960 = vld [vmem:[%s15 + $0x8] sm:$0xff]
  %v1961 = vld [vmem:[%s15 + $0x10] sm:$0xff]
  %v1962 = vld [vmem:[%s15 + $0x18] sm:$0xff]
  %v1964 = vsel %vm120, %v1958, 0
  %1966 = vmatpush.msra.mxu0 0.0
  %1967 = vmatpush.msra.mxu0 0.0
  %1968 = vmatpush.msra.mxu0 0.0
  %1969 = vmatpush.msra.mxu0 0.0
  %1970 = vmatpush.msra.mxu0 0.0
  %1971 = vmatpush.msra.mxu0 0.0
  %1972 = vmatpush.msra.mxu0 0.0
  %1973 = vmatpush.msra.mxu0 0.0
  %1974 = vmatpush.msra.mxu0 0.0
  %1975 = vmatpush.msra.mxu0 0.0
  %1976 = vmatpush.msra.mxu0 0.0
  %1977 = vmatpush.msra.mxu0 0.0
  %1978 = vmatpush.msra.mxu0 %v1962
  %1979 = vmatpush.msra.mxu0 %v1961
  %1980 = vmatpush.msra.mxu0 %v1960
  %1981 = vmatpush.msra.mxu0 %v1959
  %1982 = vmatmul.f32.gmra.mxu0 %v1964
  %v1983 = vpop.f32.mrf.mxu0
  %v1984 = vadd.f32 0.0, %v1983
  %1985 = vdwg.mxu0
  %v1986 = vadd.f32 %v804, %v1984
  %v1987 = vld [vmem:[%s16] sm:$0xff]
  %v1988 = vld [vmem:[%s16 + $0x8] sm:$0xff]
  %v1989 = vld [vmem:[%s16 + $0x10] sm:$0xff]
  %v1990 = vld [vmem:[%s16 + $0x18] sm:$0xff]
  %v1991 = vld [vmem:[%s18] sm:$0x1]
  %v1993 = vperm.slane %v1991, 0
  %1995 = vmatpush.msra.mxu0 0.0
  %1996 = vmatpush.msra.mxu0 0.0
  %1997 = vmatpush.msra.mxu0 0.0
  %1998 = vmatpush.msra.mxu0 0.0
  %1999 = vmatpush.msra.mxu0 0.0
  %2000 = vmatpush.msra.mxu0 0.0
  %2001 = vmatpush.msra.mxu0 0.0
  %2002 = vmatpush.msra.mxu0 0.0
  %2003 = vmatpush.msra.mxu0 0.0
  %2004 = vmatpush.msra.mxu0 0.0
  %2005 = vmatpush.msra.mxu0 0.0
  %2006 = vmatpush.msra.mxu0 0.0
  %2007 = vmatpush.msra.mxu0 %v1990
  %2008 = vmatpush.msra.mxu0 %v1989
  %2009 = vmatpush.msra.mxu0 %v1988
  %2010 = vmatpush.msra.mxu0 %v1987
  %2011 = vmatmul.f32.gmra.mxu0 %v1833
  %v2012 = vpop.f32.mrf.mxu0
  %v2013 = vadd.f32 %v1993, %v2012
  %2014 = vdwg.mxu0
  %v2015 = vadd.f32 %v1986, %v2013
  %v2016 = vxor.u32 %v2015, 2147483648
  %v2017 = vmul.f32 %v2016, 1.442695
  %v2018 = vpow.pop %v2017
  %v2019 = vadd.f32 %v2018, 1.0
  %v2020 = vrcp.pop %v2019
  %v2021 = vmul.f32 %v2019, %v2020
  %v2022 = vsub.f32 1.0, %v2021
  %v2023 = vmul.f32 %v2020, %v2022
  %v2024 = vadd.f32 %v2020, %v2023
  %vm2025 = vweird.f32 %v2019
  %vm2026 = vweird.f32 %v2020
  %vm2027 = vmor %vm2025, %vm2026
  %v2028 = vsel %vm2027, %v2020, %v2024
  %v2029 = vand.u32 2147483647, %v2019
  %vm2030 = vcmp.eq.f32.partialorder %v2029, 8.507059e+37
  %v2031 = vand.u32 %v2019, 2147483648
  %v2032 = vor.u32 1.1754944e-38, %v2031
  %v2033 = vsel %vm2030, %v2032, %v2028
  %v2034 = vmul.f32 1.0, %v2033
  %2036 = vrot.lane.b32.xlu0 %v2013, 64
  %v2037 = vpop.permute.xlu0 %2036
  %v2039 = vmul.f32 %v2034, %v2037
  %2041 = vrot.lane.b32.xlu0 %v2039, 64
  %v2042 = vpop.permute.xlu0 %2041
  %v2044 = vadd.f32 %v1986, %v2042
  %v2045 = vtanh.pop %v2044
  %v2046 = vsub.f32 1.0, %v2034
  %2048 = vrot.lane.b32.xlu0 %v2045, 96
  %v2049 = vpop.permute.xlu0 %2048
  %v2051 = vmul.f32 %v2046, %v2049
  %v2053 = vmul.f32 %v2034, %v1830
  %v2054 = vadd.f32 %v2051, %v2053
  %2056 = vrot.lane.b32.xlu0 %v2054, 96
  %v2057 = vpop.permute.xlu0 %2056
  %2059 = vst.msk [vmem:[#allocation3 + $0x8] sm:$0x3] %vm187, %v2057
  %2060 = vst.msk [vmem:[#allocation4 + $0x8] sm:$0x3] %vm187, %v1958
  %v2061 = vld [vmem:[#allocation3] sm:$0xff]
  %v2062 = vld [vmem:[#allocation3 + $0x8] sm:$0x3]
  %v2063 = vld [vmem:[%s19] sm:$0xff]
  %v2064 = vld [vmem:[%s19 + $0x8] sm:$0xff]
  %v2065 = vld [vmem:[%s19 + $0x10] sm:$0xff]
  %v2066 = vld [vmem:[%s19 + $0x18] sm:$0xff]
  %v2067 = vld [vmem:[#allocation4] sm:$0xff]
  %v2068 = vld [vmem:[#allocation4 + $0x8] sm:$0x3]
  %v2069 = vld [vmem:[%s20] sm:$0xff]
  %v2070 = vld [vmem:[%s20 + $0x8] sm:$0xff]
  %v2071 = vld [vmem:[%s20 + $0x10] sm:$0xff]
  %v2072 = vld [vmem:[%s20 + $0x18] sm:$0xff]
  %v2074 = vsel %vm120, %v2067, 0
  %v2077 = vsel %vm120, %v2068, 0
  %2079 = vmatpush.msra.mxu0 0.0
  %2080 = vmatpush.msra.mxu0 0.0
  %2081 = vmatpush.msra.mxu0 0.0
  %2082 = vmatpush.msra.mxu0 0.0
  %2083 = vmatpush.msra.mxu0 0.0
  %2084 = vmatpush.msra.mxu0 0.0
  %2085 = vmatpush.msra.mxu0 0.0
  %2086 = vmatpush.msra.mxu0 0.0
  %2087 = vmatpush.msra.mxu0 0.0
  %2088 = vmatpush.msra.mxu0 0.0
  %2089 = vmatpush.msra.mxu0 0.0
  %2090 = vmatpush.msra.mxu0 0.0
  %2091 = vmatpush.msra.mxu0 %v2072
  %2092 = vmatpush.msra.mxu0 %v2071
  %2093 = vmatpush.msra.mxu0 %v2070
  %2094 = vmatpush.msra.mxu0 %v2069
  %2095 = vmatmul.f32.gmra.mxu0 %v2074
  %v2096 = vpop.f32.mrf.mxu0
  %v2097 = vadd.f32 0.0, %v2096
  %2098 = vmatmul.f32.gmra.mxu0 %v2077
  %v2099 = vpop.f32.mrf.mxu0
  %v2100 = vadd.f32 0.0, %v2099
  %2101 = vdwg.mxu0
  %v2103 = vsel %vm120, %v2061, 0
  %v2106 = vsel %vm120, %v2062, 0
  %2108 = vmatpush.msra.mxu0 0.0
  %2109 = vmatpush.msra.mxu0 0.0
  %2110 = vmatpush.msra.mxu0 0.0
  %2111 = vmatpush.msra.mxu0 0.0
  %2112 = vmatpush.msra.mxu0 0.0
  %2113 = vmatpush.msra.mxu0 0.0
  %2114 = vmatpush.msra.mxu0 0.0
  %2115 = vmatpush.msra.mxu0 0.0
  %2116 = vmatpush.msra.mxu0 0.0
  %2117 = vmatpush.msra.mxu0 0.0
  %2118 = vmatpush.msra.mxu0 0.0
  %2119 = vmatpush.msra.mxu0 0.0
  %2120 = vmatpush.msra.mxu0 %v2066
  %2121 = vmatpush.msra.mxu0 %v2065
  %2122 = vmatpush.msra.mxu0 %v2064
  %2123 = vmatpush.msra.mxu0 %v2063
  %2124 = vmatmul.f32.gmra.mxu0 %v2103
  %v2125 = vpop.f32.mrf.mxu0
  %v2126 = vadd.f32 %v2097, %v2125
  %2127 = vmatmul.f32.gmra.mxu0 %v2106
  %v2128 = vpop.f32.mrf.mxu0
  %v2129 = vadd.f32 %v2100, %v2128
  %2130 = vdwg.mxu0
  %v2131 = vadd.f32 %v2126, %v830
  %v2132 = vadd.f32 %v2129, %v833
  %2133 = vst.msk [vmem:[%s23] sm:$0x3] %vm187, 0.0
  %2134 = vst.msk [vmem:[%s23 + $0x2] sm:$0xff] %vm120, %v2131
  %2135 = vst.msk [vmem:[%s23 + $0xa] sm:$0x3] %vm187, %v2132
  // Predicated region
  $region94: #{seq2seq_forward.1} parent=0 // pred_check
    _
  $region95: #{seq2seq_forward.1} parent=0 // pred_check_branch
    %2137 = sbr.rel (0) target = $region97
  $region96: #{seq2seq_forward.1} parent=0 // pred_region
    _
  $region97: #{seq2seq_forward.1} parent=0 // pred_fallthru
    _
  // Predicated region
  $region98: #{seq2seq_forward.1} parent=0 // pred_check
    _
  $region99: #{seq2seq_forward.1} parent=0 // pred_check_branch
    %2139 = sbr.rel (0) target = $region101
  $region100: #{seq2seq_forward.1} parent=0 // pred_region
    _
  $region101: #{seq2seq_forward.1} parent=0 // pred_fallthru
    _

</llo_original>
